<compile_context>
chip_gen: v7x
topology: tpu7x:2x2x1
jax: 0.10.0
libtpu: 0.0.40
codegen_flags: <defaults>
</compile_context>

<pallas_src>
import functools
import math

import jax
import jax.numpy as jnp
from jax.experimental import pallas as pl
from jax.experimental.pallas import tpu as pltpu


def _fused_convtrans_relu_bn_kernel(x_ref, w_ref, b_ref, g_ref, bt_ref,
                                    o_ref, acc_ref, *,
                                    N, Hin, Win, Cout, k, s, p, Hq, Wq, eps):
    """ConvTranspose2d + bias + ReLU + BatchNorm2d (batch stats), fully fused.

    x_ref  : (N*Hin*Win, Cin)      bf16   input, NHWC-flattened
    w_ref  : (Cin, k*k*Cout)       bf16   weight, columns ordered (rh, rw, co)
    b_ref  : (1, Cout)             f32    conv bias
    g_ref  : (1, Cout)             f32    BN gamma
    bt_ref : (1, Cout)             f32    BN beta
    o_ref  : (N*Hout*Wout, Cout)   f32    output, rows ordered (ph, pw, n, qh, qw)
    acc_ref: (s, s, N, Hq, Wq, Cout) f32  phase-major col2im accumulator (scratch)
    """
    kkC = k * k * Cout
    # Single MXU GEMM: every (input position, tap, out-channel) product, exactly once.
    full = jnp.dot(x_ref[...], w_ref[...], preferred_element_type=jnp.float32)
    full = full.reshape(N, Hin, Win, kkC)  # lane dim (kkC) unchanged -> cheap reshape

    # Phase-major col2im scatter-add (all indices/slices are static Python ints).
    acc_ref[...] = jnp.zeros_like(acc_ref)
    for rh in range(k):
        ph, dh = (rh - p) % s, (rh - p) // s          # output row phase / coarse shift
        ih_lo, ih_hi = max(0, -dh), min(Hin, Hq - dh)
        if ih_lo >= ih_hi:
            continue
        for rw in range(k):
            pw, dw = (rw - p) % s, (rw - p) // s
            iw_lo, iw_hi = max(0, -dw), min(Win, Wq - dw)
            if iw_lo >= iw_hi:
                continue
            t = rh * k + rw
            acc_ref[ph, pw, :, ih_lo + dh:ih_hi + dh, iw_lo + dw:iw_hi + dw, :] += (
                full[:, ih_lo:ih_hi, iw_lo:iw_hi, t * Cout:(t + 1) * Cout])

    # Epilogue in f32: bias -> ReLU -> BatchNorm2d with batch statistics.
    m_rows = s * s * N * Hq * Wq                       # == N*Hout*Wout
    y = acc_ref[...].reshape(m_rows, Cout)             # channels on the lane axis
    y = jnp.maximum(y + b_ref[...], 0.0)
    inv_m = 1.0 / float(m_rows)
    mean = jnp.sum(y, axis=0, keepdims=True) * inv_m
    ex2 = jnp.sum(y * y, axis=0, keepdims=True) * inv_m
    var = ex2 - mean * mean                            # biased var (PyTorch train norm)
    scale = jax.lax.rsqrt(var + eps) * g_ref[...]
    o_ref[...] = (y - mean) * scale + bt_ref[...]


def conv_trans_layer_forward(x, w, b, gamma, beta, *, stride, output_padding,
                             padding=1, eps=1e-5):
    """Forward of ConvTransLayer.  x: (N, Cin, H, W) NCHW; w: (Cin, Cout, k, k)."""
    N, Cin, Hin, Win = x.shape
    Cin_w, Cout, k, k2 = w.shape
    assert Cin_w == Cin and k == k2
    s, p, op = stride, padding, output_padding
    Hout = (Hin - 1) * s - 2 * p + k + op
    Wout = (Win - 1) * s - 2 * p + k + op
    # TODO(synk): support Hout/Wout not divisible by stride (unequal per-phase grids).
    assert Hout % s == 0 and Wout % s == 0
    Hq, Wq = Hout // s, Wout // s

    # Layout plumbing only (no padded HBM copies): NCHW -> (rows, Cin) with
    # channels on the lane axis; PyTorch ConvTranspose weight (Cin,Cout,k,k) ->
    # (Cin, k*k*Cout) with columns ordered (rh, rw, co).  bf16 feeds the MXU.
    x_mat = x.transpose(0, 2, 3, 1).reshape(N * Hin * Win, Cin).astype(jnp.bfloat16)
    w_mat = w.transpose(0, 2, 3, 1).reshape(Cin, k * k * Cout).astype(jnp.bfloat16)
    b2 = b.reshape(1, Cout).astype(jnp.float32)
    g2 = gamma.reshape(1, Cout).astype(jnp.float32)
    bt2 = beta.reshape(1, Cout).astype(jnp.float32)

    m_rows = N * Hout * Wout
    kern = functools.partial(
        _fused_convtrans_relu_bn_kernel,
        N=N, Hin=Hin, Win=Win, Cout=Cout, k=k, s=s, p=p, Hq=Hq, Wq=Wq, eps=eps)

    vmem = pltpu.MemorySpace.VMEM
    out2 = pl.pallas_call(
        kern,
        out_shape=jax.ShapeDtypeStruct((m_rows, Cout), jnp.float32),
        in_specs=[pl.BlockSpec(memory_space=vmem) for _ in range(5)],
        out_specs=pl.BlockSpec(memory_space=vmem),
        scratch_shapes=[pltpu.VMEM((s, s, N, Hq, Wq, Cout), jnp.float32)],
    )(x_mat, w_mat, b2, g2, bt2)

    # Pixel-shuffle the phase-major result back to NCHW (pure layout glue).
    out6 = out2.reshape(s, s, N, Hq, Wq, Cout)
    return out6.transpose(2, 5, 3, 0, 4, 1).reshape(N, Cout, Hout, Wout)


# -------------------- pure-JAX reference (for verification) --------------------

def _reference_forward(x, w, b, gamma, beta, *, stride, output_padding,
                       padding=1, eps=1e-5):
    k = w.shape[2]
    w_eq = jnp.flip(w, axis=(2, 3)).transpose(1, 0, 2, 3)        # (Cout, Cin, k, k)
    lo = k - 1 - padding
    hi = k - 1 - padding + output_padding
    y = jax.lax.conv_general_dilated(
        x, w_eq, window_strides=(1, 1), padding=((lo, hi), (lo, hi)),
        lhs_dilation=(stride, stride), rhs_dilation=(1, 1),
        dimension_numbers=("NCHW", "OIHW", "NCHW"),
        precision=jax.lax.Precision.HIGHEST)
    y = y + b.reshape(1, -1, 1, 1)
    y = jnp.maximum(y, 0.0)
    mean = y.mean(axis=(0, 2, 3), keepdims=True)
    var = ((y - mean) ** 2).mean(axis=(0, 2, 3), keepdims=True)  # biased (train mode)
    return (y - mean) * jax.lax.rsqrt(var + eps) * gamma.reshape(1, -1, 1, 1) \
        + beta.reshape(1, -1, 1, 1)


if __name__ == "__main__":
    # ConvTransLayer(input_channels=16, output_channels=16, kernel_size=3,
    #                stride=2, out_pad=1)  -- padding is (1,1) per the module.
    in_ch, out_ch, ksz, stride, out_pad = 16, 16, 3, 2, 1
    batch, Hin, Win = 2, 8, 16

    key = jax.random.PRNGKey(0)
    kx, kw, kb, kg, kbe = jax.random.split(key, 5)
    x = jax.random.normal(kx, (batch, in_ch, Hin, Win), jnp.float32)
    w = jax.random.normal(kw, (in_ch, out_ch, ksz, ksz), jnp.float32) / math.sqrt(in_ch * ksz * ksz)
    b = 0.1 * jax.random.normal(kb, (out_ch,), jnp.float32)
    gamma = 1.0 + 0.1 * jax.random.normal(kg, (out_ch,), jnp.float32)
    beta = 0.1 * jax.random.normal(kbe, (out_ch,), jnp.float32)

    fwd = jax.jit(functools.partial(conv_trans_layer_forward,
                                    stride=stride, output_padding=out_pad))
    y = fwd(x, w, b, gamma, beta)
    jax.block_until_ready(y)

    Hout = (Hin - 1) * stride - 2 + ksz + out_pad
    Wout = (Win - 1) * stride - 2 + ksz + out_pad
    assert y.shape == (batch, out_ch, Hout, Wout)
    assert bool(jnp.all(jnp.isfinite(y)))

    # Verify against a pure-JAX reference evaluated on the same bf16-rounded
    # GEMM inputs (so the only differences are f32 accumulation order).
    xq = x.astype(jnp.bfloat16).astype(jnp.float32)
    wq = w.astype(jnp.bfloat16).astype(jnp.float32)
    y_ref = _reference_forward(xq, wq, b, gamma, beta,
                               stride=stride, output_padding=out_pad)
    max_err = float(jnp.max(jnp.abs(y - y_ref)))
    assert max_err < 5e-3, f"mismatch vs reference: max abs err = {max_err}"

    # TODO(synk): BatchNorm2d running_mean/running_var momentum updates (training
    # side effects) are not modeled; only the forward normalization is computed.
    print("KERNEL_OK")
</pallas_src>

<mosaic_0001>
module attributes {stable_mosaic.version = 11 : i64} {
  func.func @_fused_convtrans_relu_bn_kernel(%arg0: memref<256x16xbf16, #tpu.memory_space<vmem>>, %arg1: memref<16x144xbf16, #tpu.memory_space<vmem>>, %arg2: memref<1x16xf32, #tpu.memory_space<vmem>>, %arg3: memref<1x16xf32, #tpu.memory_space<vmem>>, %arg4: memref<1x16xf32, #tpu.memory_space<vmem>>, %arg5: memref<1024x16xf32, #tpu.memory_space<vmem>>, %arg6: memref<2x2x2x8x16x16xf32, #tpu.memory_space<vmem>>) attributes {dimension_semantics = [], scalar_prefetch = 0 : i64, scratch_operands = 1 : i64, tpu.core_type = #tpu.core_type<tc>} {
    %c0 = arith.constant 0 : index
    %c0_0 = arith.constant 0 : index
    %0 = vector.load %arg0[%c0, %c0_0] : memref<256x16xbf16, #tpu.memory_space<vmem>>, vector<256x16xbf16>
    %c0_1 = arith.constant 0 : index
    %c0_2 = arith.constant 0 : index
    %1 = vector.load %arg1[%c0_1, %c0_2] : memref<16x144xbf16, #tpu.memory_space<vmem>>, vector<16x144xbf16>
    %cst = arith.constant dense<0.000000e+00> : vector<256x144xf32>
    %2 = tpu.matmul %0, %1, %cst {dimension_numbers = #tpu.dot_dimension_numbers<[1], [0], [0], [1], [0, 0, 1, 1], [], []>} : vector<256x16xbf16>, vector<16x144xbf16>, vector<256x144xf32> -> vector<256x144xf32>
    %3 = vector.shape_cast %2 : vector<256x144xf32> to vector<2x8x16x144xf32>
    %cst_3 = arith.constant 0.000000e+00 : f32
    %4 = vector.broadcast %cst_3 : f32 to vector<2x2x2x8x16x16xf32>
    %c0_4 = arith.constant 0 : index
    %c0_5 = arith.constant 0 : index
    %c0_6 = arith.constant 0 : index
    %c0_7 = arith.constant 0 : index
    %c0_8 = arith.constant 0 : index
    %c0_9 = arith.constant 0 : index
    %5 = vector.load %arg6[%c0_4, %c0_5, %c0_6, %c0_7, %c0_8, %c0_9] : memref<2x2x2x8x16x16xf32, #tpu.memory_space<vmem>>, vector<2x2x2x8x16x16xf32>
    tpu.vector_store %arg6[%c0_4, %c0_5, %c0_6, %c0_7, %c0_8, %c0_9], %4 {strides = array<i32>} : memref<2x2x2x8x16x16xf32, #tpu.memory_space<vmem>>, vector<2x2x2x8x16x16xf32>,
    %c1 = arith.constant 1 : index
    %c1_10 = arith.constant 1 : index
    %c0_11 = arith.constant 0 : index
    %c0_12 = arith.constant 0 : index
    %c0_13 = arith.constant 0 : index
    %c0_14 = arith.constant 0 : index
    %6 = vector.load %arg6[%c1, %c1_10, %c0_11, %c0_12, %c0_13, %c0_14] : memref<2x2x2x8x16x16xf32, #tpu.memory_space<vmem>>, vector<1x1x2x7x15x16xf32>
    %7 = vector.shape_cast %6 : vector<1x1x2x7x15x16xf32> to vector<2x7x15x16xf32>
    %8 = vector.extract_strided_slice %3 {offsets = [0, 1, 1, 0], sizes = [2, 7, 15, 16], strides = [1, 1, 1, 1]} : vector<2x8x16x144xf32> to vector<2x7x15x16xf32>
    %9 = arith.addf %7, %8 : vector<2x7x15x16xf32>
    %c1_15 = arith.constant 1 : index
    %c1_16 = arith.constant 1 : index
    %c0_17 = arith.constant 0 : index
    %c0_18 = arith.constant 0 : index
    %c0_19 = arith.constant 0 : index
    %c0_20 = arith.constant 0 : index
    %10 = vector.load %arg6[%c1_15, %c1_16, %c0_17, %c0_18, %c0_19, %c0_20] : memref<2x2x2x8x16x16xf32, #tpu.memory_space<vmem>>, vector<1x1x2x7x15x16xf32>
    %11 = vector.shape_cast %10 : vector<1x1x2x7x15x16xf32> to vector<2x7x15x16xf32>
    %12 = vector.shape_cast %9 : vector<2x7x15x16xf32> to vector<1x1x2x7x15x16xf32>
    tpu.vector_store %arg6[%c1_15, %c1_16, %c0_17, %c0_18, %c0_19, %c0_20], %12 {strides = array<i32>} : memref<2x2x2x8x16x16xf32, #tpu.memory_space<vmem>>, vector<1x1x2x7x15x16xf32>,
    %c1_21 = arith.constant 1 : index
    %c0_22 = arith.constant 0 : index
    %c0_23 = arith.constant 0 : index
    %c0_24 = arith.constant 0 : index
    %c0_25 = arith.constant 0 : index
    %c0_26 = arith.constant 0 : index
    %13 = vector.load %arg6[%c1_21, %c0_22, %c0_23, %c0_24, %c0_25, %c0_26] : memref<2x2x2x8x16x16xf32, #tpu.memory_space<vmem>>, vector<1x1x2x7x16x16xf32>
    %14 = vector.shape_cast %13 : vector<1x1x2x7x16x16xf32> to vector<2x7x16x16xf32>
    %15 = vector.extract_strided_slice %3 {offsets = [0, 1, 0, 16], sizes = [2, 7, 16, 16], strides = [1, 1, 1, 1]} : vector<2x8x16x144xf32> to vector<2x7x16x16xf32>
    %16 = arith.addf %14, %15 : vector<2x7x16x16xf32>
    %c1_27 = arith.constant 1 : index
    %c0_28 = arith.constant 0 : index
    %c0_29 = arith.constant 0 : index
    %c0_30 = arith.constant 0 : index
    %c0_31 = arith.constant 0 : index
    %c0_32 = arith.constant 0 : index
    %17 = vector.load %arg6[%c1_27, %c0_28, %c0_29, %c0_30, %c0_31, %c0_32] : memref<2x2x2x8x16x16xf32, #tpu.memory_space<vmem>>, vector<1x1x2x7x16x16xf32>
    %18 = vector.shape_cast %17 : vector<1x1x2x7x16x16xf32> to vector<2x7x16x16xf32>
    %19 = vector.shape_cast %16 : vector<2x7x16x16xf32> to vector<1x1x2x7x16x16xf32>
    tpu.vector_store %arg6[%c1_27, %c0_28, %c0_29, %c0_30, %c0_31, %c0_32], %19 {strides = array<i32>} : memref<2x2x2x8x16x16xf32, #tpu.memory_space<vmem>>, vector<1x1x2x7x16x16xf32>,
    %c1_33 = arith.constant 1 : index
    %c1_34 = arith.constant 1 : index
    %c0_35 = arith.constant 0 : index
    %c0_36 = arith.constant 0 : index
    %c0_37 = arith.constant 0 : index
    %c0_38 = arith.constant 0 : index
    %20 = vector.load %arg6[%c1_33, %c1_34, %c0_35, %c0_36, %c0_37, %c0_38] : memref<2x2x2x8x16x16xf32, #tpu.memory_space<vmem>>, vector<1x1x2x7x16x16xf32>
    %21 = vector.shape_cast %20 : vector<1x1x2x7x16x16xf32> to vector<2x7x16x16xf32>
    %22 = vector.extract_strided_slice %3 {offsets = [0, 1, 0, 32], sizes = [2, 7, 16, 16], strides = [1, 1, 1, 1]} : vector<2x8x16x144xf32> to vector<2x7x16x16xf32>
    %23 = arith.addf %21, %22 : vector<2x7x16x16xf32>
    %c1_39 = arith.constant 1 : index
    %c1_40 = arith.constant 1 : index
    %c0_41 = arith.constant 0 : index
    %c0_42 = arith.constant 0 : index
    %c0_43 = arith.constant 0 : index
    %c0_44 = arith.constant 0 : index
    %24 = vector.load %arg6[%c1_39, %c1_40, %c0_41, %c0_42, %c0_43, %c0_44] : memref<2x2x2x8x16x16xf32, #tpu.memory_space<vmem>>, vector<1x1x2x7x16x16xf32>
    %25 = vector.shape_cast %24 : vector<1x1x2x7x16x16xf32> to vector<2x7x16x16xf32>
    %26 = vector.shape_cast %23 : vector<2x7x16x16xf32> to vector<1x1x2x7x16x16xf32>
    tpu.vector_store %arg6[%c1_39, %c1_40, %c0_41, %c0_42, %c0_43, %c0_44], %26 {strides = array<i32>} : memref<2x2x2x8x16x16xf32, #tpu.memory_space<vmem>>, vector<1x1x2x7x16x16xf32>,
    %c0_45 = arith.constant 0 : index
    %c1_46 = arith.constant 1 : index
    %c0_47 = arith.constant 0 : index
    %c0_48 = arith.constant 0 : index
    %c0_49 = arith.constant 0 : index
    %c0_50 = arith.constant 0 : index
    %27 = vector.load %arg6[%c0_45, %c1_46, %c0_47, %c0_48, %c0_49, %c0_50] : memref<2x2x2x8x16x16xf32, #tpu.memory_space<vmem>>, vector<1x1x2x8x15x16xf32>
    %28 = vector.shape_cast %27 : vector<1x1x2x8x15x16xf32> to vector<2x8x15x16xf32>
    %29 = vector.extract_strided_slice %3 {offsets = [0, 0, 1, 48], sizes = [2, 8, 15, 16], strides = [1, 1, 1, 1]} : vector<2x8x16x144xf32> to vector<2x8x15x16xf32>
    %30 = arith.addf %28, %29 : vector<2x8x15x16xf32>
    %c0_51 = arith.constant 0 : index
    %c1_52 = arith.constant 1 : index
    %c0_53 = arith.constant 0 : index
    %c0_54 = arith.constant 0 : index
    %c0_55 = arith.constant 0 : index
    %c0_56 = arith.constant 0 : index
    %31 = vector.load %arg6[%c0_51, %c1_52, %c0_53, %c0_54, %c0_55, %c0_56] : memref<2x2x2x8x16x16xf32, #tpu.memory_space<vmem>>, vector<1x1x2x8x15x16xf32>
    %32 = vector.shape_cast %31 : vector<1x1x2x8x15x16xf32> to vector<2x8x15x16xf32>
    %33 = vector.shape_cast %30 : vector<2x8x15x16xf32> to vector<1x1x2x8x15x16xf32>
    tpu.vector_store %arg6[%c0_51, %c1_52, %c0_53, %c0_54, %c0_55, %c0_56], %33 {strides = array<i32>} : memref<2x2x2x8x16x16xf32, #tpu.memory_space<vmem>>, vector<1x1x2x8x15x16xf32>,
    %c0_57 = arith.constant 0 : index
    %c0_58 = arith.constant 0 : index
    %c0_59 = arith.constant 0 : index
    %c0_60 = arith.constant 0 : index
    %c0_61 = arith.constant 0 : index
    %c0_62 = arith.constant 0 : index
    %34 = vector.load %arg6[%c0_57, %c0_58, %c0_59, %c0_60, %c0_61, %c0_62] : memref<2x2x2x8x16x16xf32, #tpu.memory_space<vmem>>, vector<1x1x2x8x16x16xf32>
    %35 = vector.shape_cast %34 : vector<1x1x2x8x16x16xf32> to vector<2x8x16x16xf32>
    %36 = vector.extract_strided_slice %3 {offsets = [0, 0, 0, 64], sizes = [2, 8, 16, 16], strides = [1, 1, 1, 1]} : vector<2x8x16x144xf32> to vector<2x8x16x16xf32>
    %37 = arith.addf %35, %36 : vector<2x8x16x16xf32>
    %c0_63 = arith.constant 0 : index
    %c0_64 = arith.constant 0 : index
    %c0_65 = arith.constant 0 : index
    %c0_66 = arith.constant 0 : index
    %c0_67 = arith.constant 0 : index
    %c0_68 = arith.constant 0 : index
    %38 = vector.load %arg6[%c0_63, %c0_64, %c0_65, %c0_66, %c0_67, %c0_68] : memref<2x2x2x8x16x16xf32, #tpu.memory_space<vmem>>, vector<1x1x2x8x16x16xf32>
    %39 = vector.shape_cast %38 : vector<1x1x2x8x16x16xf32> to vector<2x8x16x16xf32>
    %40 = vector.shape_cast %37 : vector<2x8x16x16xf32> to vector<1x1x2x8x16x16xf32>
    tpu.vector_store %arg6[%c0_63, %c0_64, %c0_65, %c0_66, %c0_67, %c0_68], %40 {strides = array<i32>} : memref<2x2x2x8x16x16xf32, #tpu.memory_space<vmem>>, vector<1x1x2x8x16x16xf32>,
    %c0_69 = arith.constant 0 : index
    %c1_70 = arith.constant 1 : index
    %c0_71 = arith.constant 0 : index
    %c0_72 = arith.constant 0 : index
    %c0_73 = arith.constant 0 : index
    %c0_74 = arith.constant 0 : index
    %41 = vector.load %arg6[%c0_69, %c1_70, %c0_71, %c0_72, %c0_73, %c0_74] : memref<2x2x2x8x16x16xf32, #tpu.memory_space<vmem>>, vector<1x1x2x8x16x16xf32>
    %42 = vector.shape_cast %41 : vector<1x1x2x8x16x16xf32> to vector<2x8x16x16xf32>
    %43 = vector.extract_strided_slice %3 {offsets = [0, 0, 0, 80], sizes = [2, 8, 16, 16], strides = [1, 1, 1, 1]} : vector<2x8x16x144xf32> to vector<2x8x16x16xf32>
    %44 = arith.addf %42, %43 : vector<2x8x16x16xf32>
    %c0_75 = arith.constant 0 : index
    %c1_76 = arith.constant 1 : index
    %c0_77 = arith.constant 0 : index
    %c0_78 = arith.constant 0 : index
    %c0_79 = arith.constant 0 : index
    %c0_80 = arith.constant 0 : index
    %45 = vector.load %arg6[%c0_75, %c1_76, %c0_77, %c0_78, %c0_79, %c0_80] : memref<2x2x2x8x16x16xf32, #tpu.memory_space<vmem>>, vector<1x1x2x8x16x16xf32>
    %46 = vector.shape_cast %45 : vector<1x1x2x8x16x16xf32> to vector<2x8x16x16xf32>
    %47 = vector.shape_cast %44 : vector<2x8x16x16xf32> to vector<1x1x2x8x16x16xf32>
    tpu.vector_store %arg6[%c0_75, %c1_76, %c0_77, %c0_78, %c0_79, %c0_80], %47 {strides = array<i32>} : memref<2x2x2x8x16x16xf32, #tpu.memory_space<vmem>>, vector<1x1x2x8x16x16xf32>,
    %c1_81 = arith.constant 1 : index
    %c1_82 = arith.constant 1 : index
    %c0_83 = arith.constant 0 : index
    %c0_84 = arith.constant 0 : index
    %c0_85 = arith.constant 0 : index
    %c0_86 = arith.constant 0 : index
    %48 = vector.load %arg6[%c1_81, %c1_82, %c0_83, %c0_84, %c0_85, %c0_86] : memref<2x2x2x8x16x16xf32, #tpu.memory_space<vmem>>, vector<1x1x2x8x15x16xf32>
    %49 = vector.shape_cast %48 : vector<1x1x2x8x15x16xf32> to vector<2x8x15x16xf32>
    %50 = vector.extract_strided_slice %3 {offsets = [0, 0, 1, 96], sizes = [2, 8, 15, 16], strides = [1, 1, 1, 1]} : vector<2x8x16x144xf32> to vector<2x8x15x16xf32>
    %51 = arith.addf %49, %50 : vector<2x8x15x16xf32>
    %c1_87 = arith.constant 1 : index
    %c1_88 = arith.constant 1 : index
    %c0_89 = arith.constant 0 : index
    %c0_90 = arith.constant 0 : index
    %c0_91 = arith.constant 0 : index
    %c0_92 = arith.constant 0 : index
    %52 = vector.load %arg6[%c1_87, %c1_88, %c0_89, %c0_90, %c0_91, %c0_92] : memref<2x2x2x8x16x16xf32, #tpu.memory_space<vmem>>, vector<1x1x2x8x15x16xf32>
    %53 = vector.shape_cast %52 : vector<1x1x2x8x15x16xf32> to vector<2x8x15x16xf32>
    %54 = vector.shape_cast %51 : vector<2x8x15x16xf32> to vector<1x1x2x8x15x16xf32>
    tpu.vector_store %arg6[%c1_87, %c1_88, %c0_89, %c0_90, %c0_91, %c0_92], %54 {strides = array<i32>} : memref<2x2x2x8x16x16xf32, #tpu.memory_space<vmem>>, vector<1x1x2x8x15x16xf32>,
    %c1_93 = arith.constant 1 : index
    %c0_94 = arith.constant 0 : index
    %c0_95 = arith.constant 0 : index
    %c0_96 = arith.constant 0 : index
    %c0_97 = arith.constant 0 : index
    %c0_98 = arith.constant 0 : index
    %55 = vector.load %arg6[%c1_93, %c0_94, %c0_95, %c0_96, %c0_97, %c0_98] : memref<2x2x2x8x16x16xf32, #tpu.memory_space<vmem>>, vector<1x1x2x8x16x16xf32>
    %56 = vector.shape_cast %55 : vector<1x1x2x8x16x16xf32> to vector<2x8x16x16xf32>
    %57 = vector.extract_strided_slice %3 {offsets = [0, 0, 0, 112], sizes = [2, 8, 16, 16], strides = [1, 1, 1, 1]} : vector<2x8x16x144xf32> to vector<2x8x16x16xf32>
    %58 = arith.addf %56, %57 : vector<2x8x16x16xf32>
    %c1_99 = arith.constant 1 : index
    %c0_100 = arith.constant 0 : index
    %c0_101 = arith.constant 0 : index
    %c0_102 = arith.constant 0 : index
    %c0_103 = arith.constant 0 : index
    %c0_104 = arith.constant 0 : index
    %59 = vector.load %arg6[%c1_99, %c0_100, %c0_101, %c0_102, %c0_103, %c0_104] : memref<2x2x2x8x16x16xf32, #tpu.memory_space<vmem>>, vector<1x1x2x8x16x16xf32>
    %60 = vector.shape_cast %59 : vector<1x1x2x8x16x16xf32> to vector<2x8x16x16xf32>
    %61 = vector.shape_cast %58 : vector<2x8x16x16xf32> to vector<1x1x2x8x16x16xf32>
    tpu.vector_store %arg6[%c1_99, %c0_100, %c0_101, %c0_102, %c0_103, %c0_104], %61 {strides = array<i32>} : memref<2x2x2x8x16x16xf32, #tpu.memory_space<vmem>>, vector<1x1x2x8x16x16xf32>,
    %c1_105 = arith.constant 1 : index
    %c1_106 = arith.constant 1 : index
    %c0_107 = arith.constant 0 : index
    %c0_108 = arith.constant 0 : index
    %c0_109 = arith.constant 0 : index
    %c0_110 = arith.constant 0 : index
    %62 = vector.load %arg6[%c1_105, %c1_106, %c0_107, %c0_108, %c0_109, %c0_110] : memref<2x2x2x8x16x16xf32, #tpu.memory_space<vmem>>, vector<1x1x2x8x16x16xf32>
    %63 = vector.shape_cast %62 : vector<1x1x2x8x16x16xf32> to vector<2x8x16x16xf32>
    %64 = vector.extract_strided_slice %3 {offsets = [0, 0, 0, 128], sizes = [2, 8, 16, 16], strides = [1, 1, 1, 1]} : vector<2x8x16x144xf32> to vector<2x8x16x16xf32>
    %65 = arith.addf %63, %64 : vector<2x8x16x16xf32>
    %c1_111 = arith.constant 1 : index
    %c1_112 = arith.constant 1 : index
    %c0_113 = arith.constant 0 : index
    %c0_114 = arith.constant 0 : index
    %c0_115 = arith.constant 0 : index
    %c0_116 = arith.constant 0 : index
    %66 = vector.load %arg6[%c1_111, %c1_112, %c0_113, %c0_114, %c0_115, %c0_116] : memref<2x2x2x8x16x16xf32, #tpu.memory_space<vmem>>, vector<1x1x2x8x16x16xf32>
    %67 = vector.shape_cast %66 : vector<1x1x2x8x16x16xf32> to vector<2x8x16x16xf32>
    %68 = vector.shape_cast %65 : vector<2x8x16x16xf32> to vector<1x1x2x8x16x16xf32>
    tpu.vector_store %arg6[%c1_111, %c1_112, %c0_113, %c0_114, %c0_115, %c0_116], %68 {strides = array<i32>} : memref<2x2x2x8x16x16xf32, #tpu.memory_space<vmem>>, vector<1x1x2x8x16x16xf32>,
    %c0_117 = arith.constant 0 : index
    %c0_118 = arith.constant 0 : index
    %c0_119 = arith.constant 0 : index
    %c0_120 = arith.constant 0 : index
    %c0_121 = arith.constant 0 : index
    %c0_122 = arith.constant 0 : index
    %69 = vector.load %arg6[%c0_117, %c0_118, %c0_119, %c0_120, %c0_121, %c0_122] : memref<2x2x2x8x16x16xf32, #tpu.memory_space<vmem>>, vector<2x2x2x8x16x16xf32>
    %70 = vector.shape_cast %69 : vector<2x2x2x8x16x16xf32> to vector<1024x16xf32>
    %c0_123 = arith.constant 0 : index
    %c0_124 = arith.constant 0 : index
    %71 = vector.load %arg2[%c0_123, %c0_124] : memref<1x16xf32, #tpu.memory_space<vmem>>, vector<1x16xf32>
    %72 = vector.broadcast %71 : vector<1x16xf32> to vector<1024x16xf32>
    %73 = arith.addf %70, %72 : vector<1024x16xf32>
    %cst_125 = arith.constant 0.000000e+00 : f32
    %74 = vector.broadcast %cst_125 : f32 to vector<1024x16xf32>
    %75 = arith.maximumf %73, %74 : vector<1024x16xf32>
    %cst_126 = arith.constant dense<0.000000e+00> : vector<16xf32>
    %76 = vector.multi_reduction <add>, %75, %cst_126 [0] : vector<1024x16xf32> to vector<16xf32>
    %77 = vector.shape_cast %76 : vector<16xf32> to vector<1x16xf32>
    %cst_127 = arith.constant 9.765625E-4 : f32
    %78 = vector.broadcast %cst_127 : f32 to vector<1x16xf32>
    %79 = arith.mulf %77, %78 : vector<1x16xf32>
    %80 = arith.mulf %75, %75 : vector<1024x16xf32>
    %cst_128 = arith.constant dense<0.000000e+00> : vector<16xf32>
    %81 = vector.multi_reduction <add>, %80, %cst_128 [0] : vector<1024x16xf32> to vector<16xf32>
    %82 = vector.shape_cast %81 : vector<16xf32> to vector<1x16xf32>
    %cst_129 = arith.constant 9.765625E-4 : f32
    %83 = vector.broadcast %cst_129 : f32 to vector<1x16xf32>
    %84 = arith.mulf %82, %83 : vector<1x16xf32>
    %85 = arith.mulf %79, %79 : vector<1x16xf32>
    %86 = arith.subf %84, %85 : vector<1x16xf32>
    %cst_130 = arith.constant 9.99999974E-6 : f32
    %87 = vector.broadcast %cst_130 : f32 to vector<1x16xf32>
    %88 = arith.addf %86, %87 : vector<1x16xf32>
    %89 = math.rsqrt %88 : vector<1x16xf32>
    %c0_131 = arith.constant 0 : index
    %c0_132 = arith.constant 0 : index
    %90 = vector.load %arg3[%c0_131, %c0_132] : memref<1x16xf32, #tpu.memory_space<vmem>>, vector<1x16xf32>
    %91 = arith.mulf %89, %90 : vector<1x16xf32>
    %92 = vector.broadcast %79 : vector<1x16xf32> to vector<1024x16xf32>
    %93 = arith.subf %75, %92 : vector<1024x16xf32>
    %94 = vector.broadcast %91 : vector<1x16xf32> to vector<1024x16xf32>
    %95 = arith.mulf %93, %94 : vector<1024x16xf32>
    %c0_133 = arith.constant 0 : index
    %c0_134 = arith.constant 0 : index
    %96 = vector.load %arg4[%c0_133, %c0_134] : memref<1x16xf32, #tpu.memory_space<vmem>>, vector<1x16xf32>
    %97 = vector.broadcast %96 : vector<1x16xf32> to vector<1024x16xf32>
    %98 = arith.addf %95, %97 : vector<1024x16xf32>
    %c0_135 = arith.constant 0 : index
    %c0_136 = arith.constant 0 : index
    %99 = vector.load %arg5[%c0_135, %c0_136] : memref<1024x16xf32, #tpu.memory_space<vmem>>, vector<1024x16xf32>
    tpu.vector_store %arg5[%c0_135, %c0_136], %98 {strides = array<i32>} : memref<1024x16xf32, #tpu.memory_space<vmem>>, vector<1024x16xf32>,
    return
  }
}

</mosaic_0001>

<llo_original>
// kernel: conv_trans_layer_forward.1
$region0: #{conv_trans_layer_forward.1}
  #allocation0 [shape = 'u32[]', space=smem, size = 0x4, offset = 0x4, fixed_abs, tag = 'smem constant byte address 0x4 - core index']
  #allocation1 [shape = 'u32[144,128]{1,0:T(1,128)}', space=vmem, size = 0x12000, scoped, tag = 'internal scratch']
  #allocation2 [shape = 'f32[2,2,2,8,16,16]{5,4,3,2,1,0:T(8,128)}', space=vmem, size = 0x80000, scoped, tag = 'scratch operand']
  %s0 = inlined_call_operand.vmem [shape: bf16[256,16], index: 0, kind: input, shape index: {}]
  %s1 = inlined_call_operand.vmem [shape: bf16[16,144], index: 1, kind: input, shape index: {}]
  %s2 = inlined_call_operand.vmem [shape: f32[1,16], index: 2, kind: input, shape index: {}]
  %s3 = inlined_call_operand.vmem [shape: f32[1,16], index: 3, kind: input, shape index: {}]
  %s4 = inlined_call_operand.vmem [shape: f32[1,16], index: 4, kind: input, shape index: {}]
  %s5 = inlined_call_operand.vmem [shape: f32[1024,16], index: 5, kind: output, shape index: {}]
  %s6 = sld [smem:[#allocation0]]
  $region30: #{conv_trans_layer_forward.1} parent=0
    _
  %s8 = ssub.s32 1, %s6
  %s9 = scalar_select 0, %s8, %s6
  // Predicated region
  $region2: #{conv_trans_layer_forward.1} parent=0 // pred_check
    _
  $region3: #{conv_trans_layer_forward.1} parent=0 // pred_check_branch
    %11 = sbr.rel (0) target = $region5
  $region4: #{conv_trans_layer_forward.1} parent=0 // pred_region
    _
  $region5: #{conv_trans_layer_forward.1} parent=0 // pred_fallthru
    _
  // Predicated region
  $region6: #{conv_trans_layer_forward.1} parent=0 // pred_check
    _
  $region7: #{conv_trans_layer_forward.1} parent=0 // pred_check_branch
    %13 = sbr.rel (0) target = $region9
  $region8: #{conv_trans_layer_forward.1} parent=0 // pred_region
    _
  $region9: #{conv_trans_layer_forward.1} parent=0 // pred_fallthru
    _
  // Predicated region
  $region10: #{conv_trans_layer_forward.1} parent=0 // pred_check
    _
  $region11: #{conv_trans_layer_forward.1} parent=0 // pred_check_branch
    %15 = sbr.rel (0) target = $region13
  $region12: #{conv_trans_layer_forward.1} parent=0 // pred_region
    _
  $region13: #{conv_trans_layer_forward.1} parent=0 // pred_fallthru
    _
  // Predicated region
  $region14: #{conv_trans_layer_forward.1} parent=0 // pred_check
    _
  $region15: #{conv_trans_layer_forward.1} parent=0 // pred_check_branch
    %17 = sbr.rel (0) target = $region17
  $region16: #{conv_trans_layer_forward.1} parent=0 // pred_region
    _
  $region17: #{conv_trans_layer_forward.1} parent=0 // pred_fallthru
    _
  // Predicated region
  $region18: #{conv_trans_layer_forward.1} parent=0 // pred_check
    _
  $region19: #{conv_trans_layer_forward.1} parent=0 // pred_check_branch
    %19 = sbr.rel (0) target = $region21
  $region20: #{conv_trans_layer_forward.1} parent=0 // pred_region
    _
  $region21: #{conv_trans_layer_forward.1} parent=0 // pred_fallthru
    _
  %v21 = vld [vmem:[%s0] sm:$0xf]
  %v22 = vld [vmem:[%s0 + $0x4] sm:$0xf]
  %v23 = vld [vmem:[%s0 + $0x8] sm:$0xf]
  %v24 = vld [vmem:[%s0 + $0xc] sm:$0xf]
  %v25 = vld [vmem:[%s0 + $0x10] sm:$0xf]
  %v26 = vld [vmem:[%s0 + $0x14] sm:$0xf]
  %v27 = vld [vmem:[%s0 + $0x18] sm:$0xf]
  %v28 = vld [vmem:[%s0 + $0x1c] sm:$0xf]
  %v29 = vld [vmem:[%s0 + $0x20] sm:$0xf]
  %v30 = vld [vmem:[%s0 + $0x24] sm:$0xf]
  %v31 = vld [vmem:[%s0 + $0x28] sm:$0xf]
  %v32 = vld [vmem:[%s0 + $0x2c] sm:$0xf]
  %v33 = vld [vmem:[%s0 + $0x30] sm:$0xf]
  %v34 = vld [vmem:[%s0 + $0x34] sm:$0xf]
  %v35 = vld [vmem:[%s0 + $0x38] sm:$0xf]
  %v36 = vld [vmem:[%s0 + $0x3c] sm:$0xf]
  %v37 = vld [vmem:[%s0 + $0x40] sm:$0xf]
  %v38 = vld [vmem:[%s0 + $0x44] sm:$0xf]
  %v39 = vld [vmem:[%s0 + $0x48] sm:$0xf]
  %v40 = vld [vmem:[%s0 + $0x4c] sm:$0xf]
  %v41 = vld [vmem:[%s0 + $0x50] sm:$0xf]
  %v42 = vld [vmem:[%s0 + $0x54] sm:$0xf]
  %v43 = vld [vmem:[%s0 + $0x58] sm:$0xf]
  %v44 = vld [vmem:[%s0 + $0x5c] sm:$0xf]
  %v45 = vld [vmem:[%s0 + $0x60] sm:$0xf]
  %v46 = vld [vmem:[%s0 + $0x64] sm:$0xf]
  %v47 = vld [vmem:[%s0 + $0x68] sm:$0xf]
  %v48 = vld [vmem:[%s0 + $0x6c] sm:$0xf]
  %v49 = vld [vmem:[%s0 + $0x70] sm:$0xf]
  %v50 = vld [vmem:[%s0 + $0x74] sm:$0xf]
  %v51 = vld [vmem:[%s0 + $0x78] sm:$0xf]
  %v52 = vld [vmem:[%s0 + $0x7c] sm:$0xf]
  %v53 = vld [vmem:[%s1] sm:$0xff]
  %v54 = vld [vmem:[%s1 + $0x8] sm:$0xff]
  %v87 = vunpack.c.l.b16 %v21
  %v88 = vunpack.c.l.b16 %v22
  %v89 = vunpack.c.l.b16 %v23
  %v90 = vunpack.c.l.b16 %v24
  %v91 = vunpack.c.l.b16 %v25
  %v92 = vunpack.c.l.b16 %v26
  %v93 = vunpack.c.l.b16 %v27
  %v94 = vunpack.c.l.b16 %v28
  %v95 = vunpack.c.l.b16 %v29
  %v96 = vunpack.c.l.b16 %v30
  %v97 = vunpack.c.l.b16 %v31
  %v98 = vunpack.c.l.b16 %v32
  %v99 = vunpack.c.l.b16 %v33
  %v100 = vunpack.c.l.b16 %v34
  %v101 = vunpack.c.l.b16 %v35
  %v102 = vunpack.c.l.b16 %v36
  %v103 = vunpack.c.l.b16 %v37
  %v104 = vunpack.c.l.b16 %v38
  %v105 = vunpack.c.l.b16 %v39
  %v106 = vunpack.c.l.b16 %v40
  %v107 = vunpack.c.l.b16 %v41
  %v108 = vunpack.c.l.b16 %v42
  %v109 = vunpack.c.l.b16 %v43
  %v110 = vunpack.c.l.b16 %v44
  %v111 = vunpack.c.l.b16 %v45
  %v112 = vunpack.c.l.b16 %v46
  %v113 = vunpack.c.l.b16 %v47
  %v114 = vunpack.c.l.b16 %v48
  %v115 = vunpack.c.l.b16 %v49
  %v116 = vunpack.c.l.b16 %v50
  %v117 = vunpack.c.l.b16 %v51
  %v118 = vunpack.c.l.b16 %v52
  %v119 = vpack.c.b16 %v88, %v87
  %v120 = vpack.c.b16 %v90, %v89
  %v121 = vpack.c.b16 %v92, %v91
  %v122 = vpack.c.b16 %v94, %v93
  %v123 = vpack.c.b16 %v96, %v95
  %v124 = vpack.c.b16 %v98, %v97
  %v125 = vpack.c.b16 %v100, %v99
  %v126 = vpack.c.b16 %v102, %v101
  %v127 = vpack.c.b16 %v104, %v103
  %v128 = vpack.c.b16 %v106, %v105
  %v129 = vpack.c.b16 %v108, %v107
  %v130 = vpack.c.b16 %v110, %v109
  %v131 = vpack.c.b16 %v112, %v111
  %v132 = vpack.c.b16 %v114, %v113
  %v133 = vpack.c.b16 %v116, %v115
  %v134 = vpack.c.b16 %v118, %v117
  %v137 = vunpack.c.l.b16 %v53
  %v138 = vunpack.c.h.b16 %v53
  %v139 = vunpack.c.l.b16 %v54
  %v140 = vunpack.c.h.b16 %v54
  %v141 = vpack.c.b16 %v139, %v137
  %v142 = vpack.c.b16 %v140, %v138
  %vm145 = vcmask 130048
  %v147 = vsel %vm145, %v119, 0
  %v150 = vsel %vm145, %v120, 0
  %v153 = vsel %vm145, %v121, 0
  %v156 = vsel %vm145, %v122, 0
  %v159 = vsel %vm145, %v123, 0
  %v162 = vsel %vm145, %v124, 0
  %v165 = vsel %vm145, %v125, 0
  %v168 = vsel %vm145, %v126, 0
  %v171 = vsel %vm145, %v127, 0
  %v174 = vsel %vm145, %v128, 0
  %v177 = vsel %vm145, %v129, 0
  %v180 = vsel %vm145, %v130, 0
  %v183 = vsel %vm145, %v131, 0
  %v186 = vsel %vm145, %v132, 0
  %v189 = vsel %vm145, %v133, 0
  %v192 = vsel %vm145, %v134, 0
  %194 = vmatprep.subr.bf16.mxu0 %v142
  %195 = vmatpush1.bf16.msra.mxu0 %v141
  %196 = vmatprep.subr.bf16.mxu0 0
  %197 = vmatpush1.bf16.msra.mxu0 0
  %198 = vmatprep.subr.bf16.mxu0 0
  %199 = vmatpush1.bf16.msra.mxu0 0
  %200 = vmatprep.subr.bf16.mxu0 0
  %201 = vmatpush1.bf16.msra.mxu0 0
  %202 = vmatprep.subr.bf16.mxu0 0
  %203 = vmatpush1.bf16.msra.mxu0 0
  %204 = vmatprep.subr.bf16.mxu0 0
  %205 = vmatpush1.bf16.msra.mxu0 0
  %206 = vmatprep.subr.bf16.mxu0 0
  %207 = vmatpush1.bf16.msra.mxu0 0
  %208 = vmatprep.subr.bf16.mxu0 0
  %209 = vmatpush1.bf16.msra.mxu0 0
  %210 = vmatprep.subr.bf16.mxu0 0
  %211 = vmatpush1.bf16.msra.mxu0 0
  %212 = vmatprep.subr.bf16.mxu0 0
  %213 = vmatpush1.bf16.msra.mxu0 0
  %214 = vmatprep.subr.bf16.mxu0 0
  %215 = vmatpush1.bf16.msra.mxu0 0
  %216 = vmatprep.subr.bf16.mxu0 0
  %217 = vmatpush1.bf16.msra.mxu0 0
  %218 = vmatprep.subr.bf16.mxu0 0
  %219 = vmatpush1.bf16.msra.mxu0 0
  %220 = vmatprep.subr.bf16.mxu0 0
  %221 = vmatpush1.bf16.msra.mxu0 0
  %222 = vmatprep.subr.bf16.mxu0 0
  %223 = vmatpush1.bf16.msra.mxu0 0
  %224 = vmatprep.subr.bf16.mxu0 0
  %225 = vmatpush1.bf16.msra.mxu0 0
  %226 = vmatprep.mubr.bf16.mxu0 0
  %227 = vmatmul.mubr.bf16.gmra.mrb[0].mxu0 %v147
  %v228 = vpop.f32.mrb[0].mxu0
  %v229 = vadd.f32 0.0, %v228
  %v230 = vpop.f32.mrb[0].mxu0
  %v231 = vadd.f32 0.0, %v230
  %v232 = vpop.f32.mrb[0].mxu0
  %v233 = vadd.f32 0.0, %v232
  %v234 = vpop.f32.mrb[0].mxu0
  %v235 = vadd.f32 0.0, %v234
  %236 = vmatprep.mubr.bf16.mxu0 0
  %237 = vmatmul.mubr.bf16.gmra.mrb[0].mxu0 %v150
  %v238 = vpop.f32.mrb[0].mxu0
  %v239 = vadd.f32 0.0, %v238
  %v240 = vpop.f32.mrb[0].mxu0
  %v241 = vadd.f32 0.0, %v240
  %v242 = vpop.f32.mrb[0].mxu0
  %v243 = vadd.f32 0.0, %v242
  %v244 = vpop.f32.mrb[0].mxu0
  %v245 = vadd.f32 0.0, %v244
  %246 = vmatprep.mubr.bf16.mxu0 0
  %247 = vmatmul.mubr.bf16.gmra.mrb[0].mxu0 %v153
  %v248 = vpop.f32.mrb[0].mxu0
  %v249 = vadd.f32 0.0, %v248
  %v250 = vpop.f32.mrb[0].mxu0
  %v251 = vadd.f32 0.0, %v250
  %v252 = vpop.f32.mrb[0].mxu0
  %v253 = vadd.f32 0.0, %v252
  %v254 = vpop.f32.mrb[0].mxu0
  %v255 = vadd.f32 0.0, %v254
  %256 = vmatprep.mubr.bf16.mxu0 0
  %257 = vmatmul.mubr.bf16.gmra.mrb[0].mxu0 %v156
  %v258 = vpop.f32.mrb[0].mxu0
  %v259 = vadd.f32 0.0, %v258
  %v260 = vpop.f32.mrb[0].mxu0
  %v261 = vadd.f32 0.0, %v260
  %v262 = vpop.f32.mrb[0].mxu0
  %v263 = vadd.f32 0.0, %v262
  %v264 = vpop.f32.mrb[0].mxu0
  %v265 = vadd.f32 0.0, %v264
  %266 = vmatprep.mubr.bf16.mxu0 0
  %267 = vmatmul.mubr.bf16.gmra.mrb[0].mxu0 %v159
  %v268 = vpop.f32.mrb[0].mxu0
  %v269 = vadd.f32 0.0, %v268
  %v270 = vpop.f32.mrb[0].mxu0
  %v271 = vadd.f32 0.0, %v270
  %v272 = vpop.f32.mrb[0].mxu0
  %v273 = vadd.f32 0.0, %v272
  %v274 = vpop.f32.mrb[0].mxu0
  %v275 = vadd.f32 0.0, %v274
  %276 = vmatprep.mubr.bf16.mxu0 0
  %277 = vmatmul.mubr.bf16.gmra.mrb[0].mxu0 %v162
  %v278 = vpop.f32.mrb[0].mxu0
  %v279 = vadd.f32 0.0, %v278
  %v280 = vpop.f32.mrb[0].mxu0
  %v281 = vadd.f32 0.0, %v280
  %v282 = vpop.f32.mrb[0].mxu0
  %v283 = vadd.f32 0.0, %v282
  %v284 = vpop.f32.mrb[0].mxu0
  %v285 = vadd.f32 0.0, %v284
  %286 = vmatprep.mubr.bf16.mxu0 0
  %287 = vmatmul.mubr.bf16.gmra.mrb[0].mxu0 %v165
  %v288 = vpop.f32.mrb[0].mxu0
  %v289 = vadd.f32 0.0, %v288
  %v290 = vpop.f32.mrb[0].mxu0
  %v291 = vadd.f32 0.0, %v290
  %v292 = vpop.f32.mrb[0].mxu0
  %v293 = vadd.f32 0.0, %v292
  %v294 = vpop.f32.mrb[0].mxu0
  %v295 = vadd.f32 0.0, %v294
  %296 = vmatprep.mubr.bf16.mxu0 0
  %297 = vmatmul.mubr.bf16.gmra.mrb[0].mxu0 %v168
  %v298 = vpop.f32.mrb[0].mxu0
  %v299 = vadd.f32 0.0, %v298
  %v300 = vpop.f32.mrb[0].mxu0
  %v301 = vadd.f32 0.0, %v300
  %v302 = vpop.f32.mrb[0].mxu0
  %v303 = vadd.f32 0.0, %v302
  %v304 = vpop.f32.mrb[0].mxu0
  %v305 = vadd.f32 0.0, %v304
  %306 = vmatprep.mubr.bf16.mxu0 0
  %307 = vmatmul.mubr.bf16.gmra.mrb[0].mxu0 %v171
  %v308 = vpop.f32.mrb[0].mxu0
  %v309 = vadd.f32 0.0, %v308
  %v310 = vpop.f32.mrb[0].mxu0
  %v311 = vadd.f32 0.0, %v310
  %v312 = vpop.f32.mrb[0].mxu0
  %v313 = vadd.f32 0.0, %v312
  %v314 = vpop.f32.mrb[0].mxu0
  %v315 = vadd.f32 0.0, %v314
  %316 = vmatprep.mubr.bf16.mxu0 0
  %317 = vmatmul.mubr.bf16.gmra.mrb[0].mxu0 %v174
  %v318 = vpop.f32.mrb[0].mxu0
  %v319 = vadd.f32 0.0, %v318
  %v320 = vpop.f32.mrb[0].mxu0
  %v321 = vadd.f32 0.0, %v320
  %v322 = vpop.f32.mrb[0].mxu0
  %v323 = vadd.f32 0.0, %v322
  %v324 = vpop.f32.mrb[0].mxu0
  %v325 = vadd.f32 0.0, %v324
  %326 = vmatprep.mubr.bf16.mxu0 0
  %327 = vmatmul.mubr.bf16.gmra.mrb[0].mxu0 %v177
  %v328 = vpop.f32.mrb[0].mxu0
  %v329 = vadd.f32 0.0, %v328
  %v330 = vpop.f32.mrb[0].mxu0
  %v331 = vadd.f32 0.0, %v330
  %v332 = vpop.f32.mrb[0].mxu0
  %v333 = vadd.f32 0.0, %v332
  %v334 = vpop.f32.mrb[0].mxu0
  %v335 = vadd.f32 0.0, %v334
  %336 = vmatprep.mubr.bf16.mxu0 0
  %337 = vmatmul.mubr.bf16.gmra.mrb[0].mxu0 %v180
  %v338 = vpop.f32.mrb[0].mxu0
  %v339 = vadd.f32 0.0, %v338
  %v340 = vpop.f32.mrb[0].mxu0
  %v341 = vadd.f32 0.0, %v340
  %v342 = vpop.f32.mrb[0].mxu0
  %v343 = vadd.f32 0.0, %v342
  %v344 = vpop.f32.mrb[0].mxu0
  %v345 = vadd.f32 0.0, %v344
  %346 = vmatprep.mubr.bf16.mxu0 0
  %347 = vmatmul.mubr.bf16.gmra.mrb[0].mxu0 %v183
  %v348 = vpop.f32.mrb[0].mxu0
  %v349 = vadd.f32 0.0, %v348
  %v350 = vpop.f32.mrb[0].mxu0
  %v351 = vadd.f32 0.0, %v350
  %v352 = vpop.f32.mrb[0].mxu0
  %v353 = vadd.f32 0.0, %v352
  %v354 = vpop.f32.mrb[0].mxu0
  %v355 = vadd.f32 0.0, %v354
  %356 = vmatprep.mubr.bf16.mxu0 0
  %357 = vmatmul.mubr.bf16.gmra.mrb[0].mxu0 %v186
  %v358 = vpop.f32.mrb[0].mxu0
  %v359 = vadd.f32 0.0, %v358
  %v360 = vpop.f32.mrb[0].mxu0
  %v361 = vadd.f32 0.0, %v360
  %v362 = vpop.f32.mrb[0].mxu0
  %v363 = vadd.f32 0.0, %v362
  %v364 = vpop.f32.mrb[0].mxu0
  %v365 = vadd.f32 0.0, %v364
  %366 = vmatprep.mubr.bf16.mxu0 0
  %367 = vmatmul.mubr.bf16.gmra.mrb[0].mxu0 %v189
  %v368 = vpop.f32.mrb[0].mxu0
  %v369 = vadd.f32 0.0, %v368
  %v370 = vpop.f32.mrb[0].mxu0
  %v371 = vadd.f32 0.0, %v370
  %v372 = vpop.f32.mrb[0].mxu0
  %v373 = vadd.f32 0.0, %v372
  %v374 = vpop.f32.mrb[0].mxu0
  %v375 = vadd.f32 0.0, %v374
  %376 = vmatprep.mubr.bf16.mxu0 0
  %377 = vmatmul.mubr.bf16.gmra.mrb[0].mxu0 %v192
  %v378 = vpop.f32.mrb[0].mxu0
  %v379 = vadd.f32 0.0, %v378
  %v380 = vpop.f32.mrb[0].mxu0
  %v381 = vadd.f32 0.0, %v380
  %v382 = vpop.f32.mrb[0].mxu0
  %v383 = vadd.f32 0.0, %v382
  %v384 = vpop.f32.mrb[0].mxu0
  %v385 = vadd.f32 0.0, %v384
  %386 = vdwg.mxu0
  %387 = vst.msk [vmem:[#allocation2] sm:$0xff] %vm145, 0.0
  %388 = vst.msk [vmem:[#allocation2 + $0x8] sm:$0xff] %vm145, 0.0
  %389 = vst.msk [vmem:[#allocation2 + $0x10] sm:$0xff] %vm145, 0.0
  %390 = vst.msk [vmem:[#allocation2 + $0x18] sm:$0xff] %vm145, 0.0
  %391 = vst.msk [vmem:[#allocation2 + $0x20] sm:$0xff] %vm145, 0.0
  %392 = vst.msk [vmem:[#allocation2 + $0x28] sm:$0xff] %vm145, 0.0
  %393 = vst.msk [vmem:[#allocation2 + $0x30] sm:$0xff] %vm145, 0.0
  %394 = vst.msk [vmem:[#allocation2 + $0x38] sm:$0xff] %vm145, 0.0
  %395 = vst.msk [vmem:[#allocation2 + $0x40] sm:$0xff] %vm145, 0.0
  %396 = vst.msk [vmem:[#allocation2 + $0x48] sm:$0xff] %vm145, 0.0
  %397 = vst.msk [vmem:[#allocation2 + $0x50] sm:$0xff] %vm145, 0.0
  %398 = vst.msk [vmem:[#allocation2 + $0x58] sm:$0xff] %vm145, 0.0
  %399 = vst.msk [vmem:[#allocation2 + $0x60] sm:$0xff] %vm145, 0.0
  %400 = vst.msk [vmem:[#allocation2 + $0x68] sm:$0xff] %vm145, 0.0
  %401 = vst.msk [vmem:[#allocation2 + $0x70] sm:$0xff] %vm145, 0.0
  %402 = vst.msk [vmem:[#allocation2 + $0x78] sm:$0xff] %vm145, 0.0
  %403 = vst.msk [vmem:[#allocation2 + $0x80] sm:$0xff] %vm145, 0.0
  %404 = vst.msk [vmem:[#allocation2 + $0x88] sm:$0xff] %vm145, 0.0
  %405 = vst.msk [vmem:[#allocation2 + $0x90] sm:$0xff] %vm145, 0.0
  %406 = vst.msk [vmem:[#allocation2 + $0x98] sm:$0xff] %vm145, 0.0
  %407 = vst.msk [vmem:[#allocation2 + $0xa0] sm:$0xff] %vm145, 0.0
  %408 = vst.msk [vmem:[#allocation2 + $0xa8] sm:$0xff] %vm145, 0.0
  %409 = vst.msk [vmem:[#allocation2 + $0xb0] sm:$0xff] %vm145, 0.0
  %410 = vst.msk [vmem:[#allocation2 + $0xb8] sm:$0xff] %vm145, 0.0
  %411 = vst.msk [vmem:[#allocation2 + $0xc0] sm:$0xff] %vm145, 0.0
  %412 = vst.msk [vmem:[#allocation2 + $0xc8] sm:$0xff] %vm145, 0.0
  %413 = vst.msk [vmem:[#allocation2 + $0xd0] sm:$0xff] %vm145, 0.0
  %414 = vst.msk [vmem:[#allocation2 + $0xd8] sm:$0xff] %vm145, 0.0
  %415 = vst.msk [vmem:[#allocation2 + $0xe0] sm:$0xff] %vm145, 0.0
  %416 = vst.msk [vmem:[#allocation2 + $0xe8] sm:$0xff] %vm145, 0.0
  %417 = vst.msk [vmem:[#allocation2 + $0xf0] sm:$0xff] %vm145, 0.0
  %418 = vst.msk [vmem:[#allocation2 + $0xf8] sm:$0xff] %vm145, 0.0
  %419 = vst.msk [vmem:[#allocation2 + $0x100] sm:$0xff] %vm145, 0.0
  %420 = vst.msk [vmem:[#allocation2 + $0x108] sm:$0xff] %vm145, 0.0
  %421 = vst.msk [vmem:[#allocation2 + $0x110] sm:$0xff] %vm145, 0.0
  %422 = vst.msk [vmem:[#allocation2 + $0x118] sm:$0xff] %vm145, 0.0
  %423 = vst.msk [vmem:[#allocation2 + $0x120] sm:$0xff] %vm145, 0.0
  %424 = vst.msk [vmem:[#allocation2 + $0x128] sm:$0xff] %vm145, 0.0
  %425 = vst.msk [vmem:[#allocation2 + $0x130] sm:$0xff] %vm145, 0.0
  %426 = vst.msk [vmem:[#allocation2 + $0x138] sm:$0xff] %vm145, 0.0
  %427 = vst.msk [vmem:[#allocation2 + $0x140] sm:$0xff] %vm145, 0.0
  %428 = vst.msk [vmem:[#allocation2 + $0x148] sm:$0xff] %vm145, 0.0
  %429 = vst.msk [vmem:[#allocation2 + $0x150] sm:$0xff] %vm145, 0.0
  %430 = vst.msk [vmem:[#allocation2 + $0x158] sm:$0xff] %vm145, 0.0
  %431 = vst.msk [vmem:[#allocation2 + $0x160] sm:$0xff] %vm145, 0.0
  %432 = vst.msk [vmem:[#allocation2 + $0x168] sm:$0xff] %vm145, 0.0
  %433 = vst.msk [vmem:[#allocation2 + $0x170] sm:$0xff] %vm145, 0.0
  %434 = vst.msk [vmem:[#allocation2 + $0x178] sm:$0xff] %vm145, 0.0
  %435 = vst.msk [vmem:[#allocation2 + $0x180] sm:$0xff] %vm145, 0.0
  %436 = vst.msk [vmem:[#allocation2 + $0x188] sm:$0xff] %vm145, 0.0
  %437 = vst.msk [vmem:[#allocation2 + $0x190] sm:$0xff] %vm145, 0.0
  %438 = vst.msk [vmem:[#allocation2 + $0x198] sm:$0xff] %vm145, 0.0
  %439 = vst.msk [vmem:[#allocation2 + $0x1a0] sm:$0xff] %vm145, 0.0
  %440 = vst.msk [vmem:[#allocation2 + $0x1a8] sm:$0xff] %vm145, 0.0
  %441 = vst.msk [vmem:[#allocation2 + $0x1b0] sm:$0xff] %vm145, 0.0
  %442 = vst.msk [vmem:[#allocation2 + $0x1b8] sm:$0xff] %vm145, 0.0
  %443 = vst.msk [vmem:[#allocation2 + $0x1c0] sm:$0xff] %vm145, 0.0
  %444 = vst.msk [vmem:[#allocation2 + $0x1c8] sm:$0xff] %vm145, 0.0
  %445 = vst.msk [vmem:[#allocation2 + $0x1d0] sm:$0xff] %vm145, 0.0
  %446 = vst.msk [vmem:[#allocation2 + $0x1d8] sm:$0xff] %vm145, 0.0
  %447 = vst.msk [vmem:[#allocation2 + $0x1e0] sm:$0xff] %vm145, 0.0
  %448 = vst.msk [vmem:[#allocation2 + $0x1e8] sm:$0xff] %vm145, 0.0
  %449 = vst.msk [vmem:[#allocation2 + $0x1f0] sm:$0xff] %vm145, 0.0
  %450 = vst.msk [vmem:[#allocation2 + $0x1f8] sm:$0xff] %vm145, 0.0
  %451 = vst.msk [vmem:[#allocation2 + $0x200] sm:$0xff] %vm145, 0.0
  %452 = vst.msk [vmem:[#allocation2 + $0x208] sm:$0xff] %vm145, 0.0
  %453 = vst.msk [vmem:[#allocation2 + $0x210] sm:$0xff] %vm145, 0.0
  %454 = vst.msk [vmem:[#allocation2 + $0x218] sm:$0xff] %vm145, 0.0
  %455 = vst.msk [vmem:[#allocation2 + $0x220] sm:$0xff] %vm145, 0.0
  %456 = vst.msk [vmem:[#allocation2 + $0x228] sm:$0xff] %vm145, 0.0
  %457 = vst.msk [vmem:[#allocation2 + $0x230] sm:$0xff] %vm145, 0.0
  %458 = vst.msk [vmem:[#allocation2 + $0x238] sm:$0xff] %vm145, 0.0
  %459 = vst.msk [vmem:[#allocation2 + $0x240] sm:$0xff] %vm145, 0.0
  %460 = vst.msk [vmem:[#allocation2 + $0x248] sm:$0xff] %vm145, 0.0
  %461 = vst.msk [vmem:[#allocation2 + $0x250] sm:$0xff] %vm145, 0.0
  %462 = vst.msk [vmem:[#allocation2 + $0x258] sm:$0xff] %vm145, 0.0
  %463 = vst.msk [vmem:[#allocation2 + $0x260] sm:$0xff] %vm145, 0.0
  %464 = vst.msk [vmem:[#allocation2 + $0x268] sm:$0xff] %vm145, 0.0
  %465 = vst.msk [vmem:[#allocation2 + $0x270] sm:$0xff] %vm145, 0.0
  %466 = vst.msk [vmem:[#allocation2 + $0x278] sm:$0xff] %vm145, 0.0
  %467 = vst.msk [vmem:[#allocation2 + $0x280] sm:$0xff] %vm145, 0.0
  %468 = vst.msk [vmem:[#allocation2 + $0x288] sm:$0xff] %vm145, 0.0
  %469 = vst.msk [vmem:[#allocation2 + $0x290] sm:$0xff] %vm145, 0.0
  %470 = vst.msk [vmem:[#allocation2 + $0x298] sm:$0xff] %vm145, 0.0
  %471 = vst.msk [vmem:[#allocation2 + $0x2a0] sm:$0xff] %vm145, 0.0
  %472 = vst.msk [vmem:[#allocation2 + $0x2a8] sm:$0xff] %vm145, 0.0
  %473 = vst.msk [vmem:[#allocation2 + $0x2b0] sm:$0xff] %vm145, 0.0
  %474 = vst.msk [vmem:[#allocation2 + $0x2b8] sm:$0xff] %vm145, 0.0
  %475 = vst.msk [vmem:[#allocation2 + $0x2c0] sm:$0xff] %vm145, 0.0
  %476 = vst.msk [vmem:[#allocation2 + $0x2c8] sm:$0xff] %vm145, 0.0
  %477 = vst.msk [vmem:[#allocation2 + $0x2d0] sm:$0xff] %vm145, 0.0
  %478 = vst.msk [vmem:[#allocation2 + $0x2d8] sm:$0xff] %vm145, 0.0
  %479 = vst.msk [vmem:[#allocation2 + $0x2e0] sm:$0xff] %vm145, 0.0
  %480 = vst.msk [vmem:[#allocation2 + $0x2e8] sm:$0xff] %vm145, 0.0
  %481 = vst.msk [vmem:[#allocation2 + $0x2f0] sm:$0xff] %vm145, 0.0
  %482 = vst.msk [vmem:[#allocation2 + $0x2f8] sm:$0xff] %vm145, 0.0
  %483 = vst.msk [vmem:[#allocation2 + $0x300] sm:$0xff] %vm145, 0.0
  %484 = vst.msk [vmem:[#allocation2 + $0x308] sm:$0xff] %vm145, 0.0
  %485 = vst.msk [vmem:[#allocation2 + $0x310] sm:$0xff] %vm145, 0.0
  %486 = vst.msk [vmem:[#allocation2 + $0x318] sm:$0xff] %vm145, 0.0
  %487 = vst.msk [vmem:[#allocation2 + $0x320] sm:$0xff] %vm145, 0.0
  %488 = vst.msk [vmem:[#allocation2 + $0x328] sm:$0xff] %vm145, 0.0
  %489 = vst.msk [vmem:[#allocation2 + $0x330] sm:$0xff] %vm145, 0.0
  %490 = vst.msk [vmem:[#allocation2 + $0x338] sm:$0xff] %vm145, 0.0
  %491 = vst.msk [vmem:[#allocation2 + $0x340] sm:$0xff] %vm145, 0.0
  %492 = vst.msk [vmem:[#allocation2 + $0x348] sm:$0xff] %vm145, 0.0
  %493 = vst.msk [vmem:[#allocation2 + $0x350] sm:$0xff] %vm145, 0.0
  %494 = vst.msk [vmem:[#allocation2 + $0x358] sm:$0xff] %vm145, 0.0
  %495 = vst.msk [vmem:[#allocation2 + $0x360] sm:$0xff] %vm145, 0.0
  %496 = vst.msk [vmem:[#allocation2 + $0x368] sm:$0xff] %vm145, 0.0
  %497 = vst.msk [vmem:[#allocation2 + $0x370] sm:$0xff] %vm145, 0.0
  %498 = vst.msk [vmem:[#allocation2 + $0x378] sm:$0xff] %vm145, 0.0
  %499 = vst.msk [vmem:[#allocation2 + $0x380] sm:$0xff] %vm145, 0.0
  %500 = vst.msk [vmem:[#allocation2 + $0x388] sm:$0xff] %vm145, 0.0
  %501 = vst.msk [vmem:[#allocation2 + $0x390] sm:$0xff] %vm145, 0.0
  %502 = vst.msk [vmem:[#allocation2 + $0x398] sm:$0xff] %vm145, 0.0
  %503 = vst.msk [vmem:[#allocation2 + $0x3a0] sm:$0xff] %vm145, 0.0
  %504 = vst.msk [vmem:[#allocation2 + $0x3a8] sm:$0xff] %vm145, 0.0
  %505 = vst.msk [vmem:[#allocation2 + $0x3b0] sm:$0xff] %vm145, 0.0
  %506 = vst.msk [vmem:[#allocation2 + $0x3b8] sm:$0xff] %vm145, 0.0
  %507 = vst.msk [vmem:[#allocation2 + $0x3c0] sm:$0xff] %vm145, 0.0
  %508 = vst.msk [vmem:[#allocation2 + $0x3c8] sm:$0xff] %vm145, 0.0
  %509 = vst.msk [vmem:[#allocation2 + $0x3d0] sm:$0xff] %vm145, 0.0
  %510 = vst.msk [vmem:[#allocation2 + $0x3d8] sm:$0xff] %vm145, 0.0
  %511 = vst.msk [vmem:[#allocation2 + $0x3e0] sm:$0xff] %vm145, 0.0
  %512 = vst.msk [vmem:[#allocation2 + $0x3e8] sm:$0xff] %vm145, 0.0
  %513 = vst.msk [vmem:[#allocation2 + $0x3f0] sm:$0xff] %vm145, 0.0
  %514 = vst.msk [vmem:[#allocation2 + $0x3f8] sm:$0xff] %vm145, 0.0
  %s515 = scalar_lea.vmem [#allocation2], 768
  %v516 = vld [vmem:[%s515] sm:$0xff]
  %v517 = vld [vmem:[%s515 + $0x8] sm:$0x7f]
  %v518 = vld [vmem:[%s515 + $0x10] sm:$0xff]
  %v519 = vld [vmem:[%s515 + $0x18] sm:$0x7f]
  %v520 = vld [vmem:[%s515 + $0x20] sm:$0xff]
  %v521 = vld [vmem:[%s515 + $0x28] sm:$0x7f]
  %v522 = vld [vmem:[%s515 + $0x30] sm:$0xff]
  %v523 = vld [vmem:[%s515 + $0x38] sm:$0x7f]
  %v524 = vld [vmem:[%s515 + $0x40] sm:$0xff]
  %v525 = vld [vmem:[%s515 + $0x48] sm:$0x7f]
  %v526 = vld [vmem:[%s515 + $0x50] sm:$0xff]
  %v527 = vld [vmem:[%s515 + $0x58] sm:$0x7f]
  %v528 = vld [vmem:[%s515 + $0x60] sm:$0xff]
  %v529 = vld [vmem:[%s515 + $0x68] sm:$0x7f]
  %v530 = vld [vmem:[%s515 + $0x80] sm:$0xff]
  %v531 = vld [vmem:[%s515 + $0x88] sm:$0x7f]
  %v532 = vld [vmem:[%s515 + $0x90] sm:$0xff]
  %v533 = vld [vmem:[%s515 + $0x98] sm:$0x7f]
  %v534 = vld [vmem:[%s515 + $0xa0] sm:$0xff]
  %v535 = vld [vmem:[%s515 + $0xa8] sm:$0x7f]
  %v536 = vld [vmem:[%s515 + $0xb0] sm:$0xff]
  %v537 = vld [vmem:[%s515 + $0xb8] sm:$0x7f]
  %v538 = vld [vmem:[%s515 + $0xc0] sm:$0xff]
  %v539 = vld [vmem:[%s515 + $0xc8] sm:$0x7f]
  %v540 = vld [vmem:[%s515 + $0xd0] sm:$0xff]
  %v541 = vld [vmem:[%s515 + $0xd8] sm:$0x7f]
  %v542 = vld [vmem:[%s515 + $0xe0] sm:$0xff]
  %v543 = vld [vmem:[%s515 + $0xe8] sm:$0x7f]
  %vm572 = vcmask 1046528
  %v573 = vrot.slane %v239, 1
  %v574 = vrot.slane %v243, 1
  %v575 = vsel %vm572, %v573, %v574
  %v576 = vrot.slane %v249, 1
  %v577 = vrot.slane %v253, 1
  %v578 = vsel %vm572, %v576, %v577
  %v579 = vrot.slane %v259, 1
  %v580 = vrot.slane %v263, 1
  %v581 = vsel %vm572, %v579, %v580
  %v582 = vrot.slane %v269, 1
  %v583 = vrot.slane %v273, 1
  %v584 = vsel %vm572, %v582, %v583
  %v585 = vrot.slane %v279, 1
  %v586 = vrot.slane %v283, 1
  %v587 = vsel %vm572, %v585, %v586
  %v588 = vrot.slane %v289, 1
  %v589 = vrot.slane %v293, 1
  %v590 = vsel %vm572, %v588, %v589
  %v591 = vrot.slane %v299, 1
  %v592 = vrot.slane %v303, 1
  %v593 = vsel %vm572, %v591, %v592
  %v594 = vrot.slane %v319, 1
  %v595 = vrot.slane %v323, 1
  %v596 = vsel %vm572, %v594, %v595
  %v597 = vrot.slane %v329, 1
  %v598 = vrot.slane %v333, 1
  %v599 = vsel %vm572, %v597, %v598
  %v600 = vrot.slane %v339, 1
  %v601 = vrot.slane %v343, 1
  %v602 = vsel %vm572, %v600, %v601
  %v603 = vrot.slane %v349, 1
  %v604 = vrot.slane %v353, 1
  %v605 = vsel %vm572, %v603, %v604
  %v606 = vrot.slane %v359, 1
  %v607 = vrot.slane %v363, 1
  %v608 = vsel %vm572, %v606, %v607
  %v609 = vrot.slane %v369, 1
  %v610 = vrot.slane %v373, 1
  %v611 = vsel %vm572, %v609, %v610
  %v612 = vrot.slane %v379, 1
  %v613 = vrot.slane %v383, 1
  %v614 = vsel %vm572, %v612, %v613
  %v643 = vadd.f32 %v516, %v575
  %v644 = vadd.f32 %v517, %v574
  %v645 = vadd.f32 %v518, %v578
  %v646 = vadd.f32 %v519, %v577
  %v647 = vadd.f32 %v520, %v581
  %v648 = vadd.f32 %v521, %v580
  %v649 = vadd.f32 %v522, %v584
  %v650 = vadd.f32 %v523, %v583
  %v651 = vadd.f32 %v524, %v587
  %v652 = vadd.f32 %v525, %v586
  %v653 = vadd.f32 %v526, %v590
  %v654 = vadd.f32 %v527, %v589
  %v655 = vadd.f32 %v528, %v593
  %v656 = vadd.f32 %v529, %v592
  %v657 = vadd.f32 %v530, %v596
  %v658 = vadd.f32 %v531, %v595
  %v659 = vadd.f32 %v532, %v599
  %v660 = vadd.f32 %v533, %v598
  %v661 = vadd.f32 %v534, %v602
  %v662 = vadd.f32 %v535, %v601
  %v663 = vadd.f32 %v536, %v605
  %v664 = vadd.f32 %v537, %v604
  %v665 = vadd.f32 %v538, %v608
  %v666 = vadd.f32 %v539, %v607
  %v667 = vadd.f32 %v540, %v611
  %v668 = vadd.f32 %v541, %v610
  %v669 = vadd.f32 %v542, %v614
  %v670 = vadd.f32 %v543, %v613
  %671 = vst.msk [vmem:[%s515] sm:$0xff] %vm145, %v643
  %vm672 = vcmask 129024
  %673 = vst.msk [vmem:[%s515 + $0x8] sm:$0x7f] %vm672, %v644
  %674 = vst.msk [vmem:[%s515 + $0x10] sm:$0xff] %vm145, %v645
  %675 = vst.msk [vmem:[%s515 + $0x18] sm:$0x7f] %vm672, %v646
  %676 = vst.msk [vmem:[%s515 + $0x20] sm:$0xff] %vm145, %v647
  %677 = vst.msk [vmem:[%s515 + $0x28] sm:$0x7f] %vm672, %v648
  %678 = vst.msk [vmem:[%s515 + $0x30] sm:$0xff] %vm145, %v649
  %679 = vst.msk [vmem:[%s515 + $0x38] sm:$0x7f] %vm672, %v650
  %680 = vst.msk [vmem:[%s515 + $0x40] sm:$0xff] %vm145, %v651
  %681 = vst.msk [vmem:[%s515 + $0x48] sm:$0x7f] %vm672, %v652
  %682 = vst.msk [vmem:[%s515 + $0x50] sm:$0xff] %vm145, %v653
  %683 = vst.msk [vmem:[%s515 + $0x58] sm:$0x7f] %vm672, %v654
  %684 = vst.msk [vmem:[%s515 + $0x60] sm:$0xff] %vm145, %v655
  %685 = vst.msk [vmem:[%s515 + $0x68] sm:$0x7f] %vm672, %v656
  %686 = vst.msk [vmem:[%s515 + $0x80] sm:$0xff] %vm145, %v657
  %687 = vst.msk [vmem:[%s515 + $0x88] sm:$0x7f] %vm672, %v658
  %688 = vst.msk [vmem:[%s515 + $0x90] sm:$0xff] %vm145, %v659
  %689 = vst.msk [vmem:[%s515 + $0x98] sm:$0x7f] %vm672, %v660
  %690 = vst.msk [vmem:[%s515 + $0xa0] sm:$0xff] %vm145, %v661
  %691 = vst.msk [vmem:[%s515 + $0xa8] sm:$0x7f] %vm672, %v662
  %692 = vst.msk [vmem:[%s515 + $0xb0] sm:$0xff] %vm145, %v663
  %693 = vst.msk [vmem:[%s515 + $0xb8] sm:$0x7f] %vm672, %v664
  %694 = vst.msk [vmem:[%s515 + $0xc0] sm:$0xff] %vm145, %v665
  %695 = vst.msk [vmem:[%s515 + $0xc8] sm:$0x7f] %vm672, %v666
  %696 = vst.msk [vmem:[%s515 + $0xd0] sm:$0xff] %vm145, %v667
  %697 = vst.msk [vmem:[%s515 + $0xd8] sm:$0x7f] %vm672, %v668
  %698 = vst.msk [vmem:[%s515 + $0xe0] sm:$0xff] %vm145, %v669
  %699 = vst.msk [vmem:[%s515 + $0xe8] sm:$0x7f] %vm672, %v670
  %s700 = scalar_lea.vmem [#allocation2], 512
  %v701 = vld [vmem:[%s700] sm:$0xff]
  %v702 = vld [vmem:[%s700 + $0x8] sm:$0xff]
  %v703 = vld [vmem:[%s700 + $0x10] sm:$0xff]
  %v704 = vld [vmem:[%s700 + $0x18] sm:$0xff]
  %v705 = vld [vmem:[%s700 + $0x20] sm:$0xff]
  %v706 = vld [vmem:[%s700 + $0x28] sm:$0xff]
  %v707 = vld [vmem:[%s700 + $0x30] sm:$0xff]
  %v708 = vld [vmem:[%s700 + $0x38] sm:$0xff]
  %v709 = vld [vmem:[%s700 + $0x40] sm:$0xff]
  %v710 = vld [vmem:[%s700 + $0x48] sm:$0xff]
  %v711 = vld [vmem:[%s700 + $0x50] sm:$0xff]
  %v712 = vld [vmem:[%s700 + $0x58] sm:$0xff]
  %v713 = vld [vmem:[%s700 + $0x60] sm:$0xff]
  %v714 = vld [vmem:[%s700 + $0x68] sm:$0xff]
  %v715 = vld [vmem:[%s700 + $0x80] sm:$0xff]
  %v716 = vld [vmem:[%s700 + $0x88] sm:$0xff]
  %v717 = vld [vmem:[%s700 + $0x90] sm:$0xff]
  %v718 = vld [vmem:[%s700 + $0x98] sm:$0xff]
  %v719 = vld [vmem:[%s700 + $0xa0] sm:$0xff]
  %v720 = vld [vmem:[%s700 + $0xa8] sm:$0xff]
  %v721 = vld [vmem:[%s700 + $0xb0] sm:$0xff]
  %v722 = vld [vmem:[%s700 + $0xb8] sm:$0xff]
  %v723 = vld [vmem:[%s700 + $0xc0] sm:$0xff]
  %v724 = vld [vmem:[%s700 + $0xc8] sm:$0xff]
  %v725 = vld [vmem:[%s700 + $0xd0] sm:$0xff]
  %v726 = vld [vmem:[%s700 + $0xd8] sm:$0xff]
  %v727 = vld [vmem:[%s700 + $0xe0] sm:$0xff]
  %v728 = vld [vmem:[%s700 + $0xe8] sm:$0xff]
  %729 = vrot.lane.b32.xlu0 %v239, 112
  %v730 = vpop.permute.xlu0 %729
  %731 = vrot.lane.b32.xlu0 %v243, 112
  %v732 = vpop.permute.xlu0 %731
  %733 = vrot.lane.b32.xlu0 %v249, 112
  %v734 = vpop.permute.xlu0 %733
  %735 = vrot.lane.b32.xlu0 %v253, 112
  %v736 = vpop.permute.xlu0 %735
  %737 = vrot.lane.b32.xlu0 %v259, 112
  %v738 = vpop.permute.xlu0 %737
  %739 = vrot.lane.b32.xlu0 %v263, 112
  %v740 = vpop.permute.xlu0 %739
  %741 = vrot.lane.b32.xlu0 %v269, 112
  %v742 = vpop.permute.xlu0 %741
  %743 = vrot.lane.b32.xlu0 %v273, 112
  %v744 = vpop.permute.xlu0 %743
  %745 = vrot.lane.b32.xlu0 %v279, 112
  %v746 = vpop.permute.xlu0 %745
  %747 = vrot.lane.b32.xlu0 %v283, 112
  %v748 = vpop.permute.xlu0 %747
  %749 = vrot.lane.b32.xlu0 %v289, 112
  %v750 = vpop.permute.xlu0 %749
  %751 = vrot.lane.b32.xlu0 %v293, 112
  %v752 = vpop.permute.xlu0 %751
  %753 = vrot.lane.b32.xlu0 %v299, 112
  %v754 = vpop.permute.xlu0 %753
  %755 = vrot.lane.b32.xlu0 %v303, 112
  %v756 = vpop.permute.xlu0 %755
  %757 = vrot.lane.b32.xlu0 %v319, 112
  %v758 = vpop.permute.xlu0 %757
  %759 = vrot.lane.b32.xlu0 %v323, 112
  %v760 = vpop.permute.xlu0 %759
  %761 = vrot.lane.b32.xlu0 %v329, 112
  %v762 = vpop.permute.xlu0 %761
  %763 = vrot.lane.b32.xlu0 %v333, 112
  %v764 = vpop.permute.xlu0 %763
  %765 = vrot.lane.b32.xlu0 %v339, 112
  %v766 = vpop.permute.xlu0 %765
  %767 = vrot.lane.b32.xlu0 %v343, 112
  %v768 = vpop.permute.xlu0 %767
  %769 = vrot.lane.b32.xlu0 %v349, 112
  %v770 = vpop.permute.xlu0 %769
  %771 = vrot.lane.b32.xlu0 %v353, 112
  %v772 = vpop.permute.xlu0 %771
  %773 = vrot.lane.b32.xlu0 %v359, 112
  %v774 = vpop.permute.xlu0 %773
  %775 = vrot.lane.b32.xlu0 %v363, 112
  %v776 = vpop.permute.xlu0 %775
  %777 = vrot.lane.b32.xlu0 %v369, 112
  %v778 = vpop.permute.xlu0 %777
  %779 = vrot.lane.b32.xlu0 %v373, 112
  %v780 = vpop.permute.xlu0 %779
  %781 = vrot.lane.b32.xlu0 %v379, 112
  %v782 = vpop.permute.xlu0 %781
  %783 = vrot.lane.b32.xlu0 %v383, 112
  %v784 = vpop.permute.xlu0 %783
  %v813 = vadd.f32 %v701, %v730
  %v814 = vadd.f32 %v702, %v732
  %v815 = vadd.f32 %v703, %v734
  %v816 = vadd.f32 %v704, %v736
  %v817 = vadd.f32 %v705, %v738
  %v818 = vadd.f32 %v706, %v740
  %v819 = vadd.f32 %v707, %v742
  %v820 = vadd.f32 %v708, %v744
  %v821 = vadd.f32 %v709, %v746
  %v822 = vadd.f32 %v710, %v748
  %v823 = vadd.f32 %v711, %v750
  %v824 = vadd.f32 %v712, %v752
  %v825 = vadd.f32 %v713, %v754
  %v826 = vadd.f32 %v714, %v756
  %v827 = vadd.f32 %v715, %v758
  %v828 = vadd.f32 %v716, %v760
  %v829 = vadd.f32 %v717, %v762
  %v830 = vadd.f32 %v718, %v764
  %v831 = vadd.f32 %v719, %v766
  %v832 = vadd.f32 %v720, %v768
  %v833 = vadd.f32 %v721, %v770
  %v834 = vadd.f32 %v722, %v772
  %v835 = vadd.f32 %v723, %v774
  %v836 = vadd.f32 %v724, %v776
  %v837 = vadd.f32 %v725, %v778
  %v838 = vadd.f32 %v726, %v780
  %v839 = vadd.f32 %v727, %v782
  %v840 = vadd.f32 %v728, %v784
  %841 = vst.msk [vmem:[%s700] sm:$0xff] %vm145, %v813
  %842 = vst.msk [vmem:[%s700 + $0x8] sm:$0xff] %vm145, %v814
  %843 = vst.msk [vmem:[%s700 + $0x10] sm:$0xff] %vm145, %v815
  %844 = vst.msk [vmem:[%s700 + $0x18] sm:$0xff] %vm145, %v816
  %845 = vst.msk [vmem:[%s700 + $0x20] sm:$0xff] %vm145, %v817
  %846 = vst.msk [vmem:[%s700 + $0x28] sm:$0xff] %vm145, %v818
  %847 = vst.msk [vmem:[%s700 + $0x30] sm:$0xff] %vm145, %v819
  %848 = vst.msk [vmem:[%s700 + $0x38] sm:$0xff] %vm145, %v820
  %849 = vst.msk [vmem:[%s700 + $0x40] sm:$0xff] %vm145, %v821
  %850 = vst.msk [vmem:[%s700 + $0x48] sm:$0xff] %vm145, %v822
  %851 = vst.msk [vmem:[%s700 + $0x50] sm:$0xff] %vm145, %v823
  %852 = vst.msk [vmem:[%s700 + $0x58] sm:$0xff] %vm145, %v824
  %853 = vst.msk [vmem:[%s700 + $0x60] sm:$0xff] %vm145, %v825
  %854 = vst.msk [vmem:[%s700 + $0x68] sm:$0xff] %vm145, %v826
  %855 = vst.msk [vmem:[%s700 + $0x80] sm:$0xff] %vm145, %v827
  %856 = vst.msk [vmem:[%s700 + $0x88] sm:$0xff] %vm145, %v828
  %857 = vst.msk [vmem:[%s700 + $0x90] sm:$0xff] %vm145, %v829
  %858 = vst.msk [vmem:[%s700 + $0x98] sm:$0xff] %vm145, %v830
  %859 = vst.msk [vmem:[%s700 + $0xa0] sm:$0xff] %vm145, %v831
  %860 = vst.msk [vmem:[%s700 + $0xa8] sm:$0xff] %vm145, %v832
  %861 = vst.msk [vmem:[%s700 + $0xb0] sm:$0xff] %vm145, %v833
  %862 = vst.msk [vmem:[%s700 + $0xb8] sm:$0xff] %vm145, %v834
  %863 = vst.msk [vmem:[%s700 + $0xc0] sm:$0xff] %vm145, %v835
  %864 = vst.msk [vmem:[%s700 + $0xc8] sm:$0xff] %vm145, %v836
  %865 = vst.msk [vmem:[%s700 + $0xd0] sm:$0xff] %vm145, %v837
  %866 = vst.msk [vmem:[%s700 + $0xd8] sm:$0xff] %vm145, %v838
  %867 = vst.msk [vmem:[%s700 + $0xe0] sm:$0xff] %vm145, %v839
  %868 = vst.msk [vmem:[%s700 + $0xe8] sm:$0xff] %vm145, %v840
  %v869 = vld [vmem:[%s515] sm:$0xff]
  %v870 = vld [vmem:[%s515 + $0x8] sm:$0xff]
  %v871 = vld [vmem:[%s515 + $0x10] sm:$0xff]
  %v872 = vld [vmem:[%s515 + $0x18] sm:$0xff]
  %v873 = vld [vmem:[%s515 + $0x20] sm:$0xff]
  %v874 = vld [vmem:[%s515 + $0x28] sm:$0xff]
  %v875 = vld [vmem:[%s515 + $0x30] sm:$0xff]
  %v876 = vld [vmem:[%s515 + $0x38] sm:$0xff]
  %v877 = vld [vmem:[%s515 + $0x40] sm:$0xff]
  %v878 = vld [vmem:[%s515 + $0x48] sm:$0xff]
  %v879 = vld [vmem:[%s515 + $0x50] sm:$0xff]
  %v880 = vld [vmem:[%s515 + $0x58] sm:$0xff]
  %v881 = vld [vmem:[%s515 + $0x60] sm:$0xff]
  %v882 = vld [vmem:[%s515 + $0x68] sm:$0xff]
  %v883 = vld [vmem:[%s515 + $0x80] sm:$0xff]
  %v884 = vld [vmem:[%s515 + $0x88] sm:$0xff]
  %v885 = vld [vmem:[%s515 + $0x90] sm:$0xff]
  %v886 = vld [vmem:[%s515 + $0x98] sm:$0xff]
  %v887 = vld [vmem:[%s515 + $0xa0] sm:$0xff]
  %v888 = vld [vmem:[%s515 + $0xa8] sm:$0xff]
  %v889 = vld [vmem:[%s515 + $0xb0] sm:$0xff]
  %v890 = vld [vmem:[%s515 + $0xb8] sm:$0xff]
  %v891 = vld [vmem:[%s515 + $0xc0] sm:$0xff]
  %v892 = vld [vmem:[%s515 + $0xc8] sm:$0xff]
  %v893 = vld [vmem:[%s515 + $0xd0] sm:$0xff]
  %v894 = vld [vmem:[%s515 + $0xd8] sm:$0xff]
  %v895 = vld [vmem:[%s515 + $0xe0] sm:$0xff]
  %v896 = vld [vmem:[%s515 + $0xe8] sm:$0xff]
  %897 = vrot.lane.b32.xlu0 %v239, 96
  %v898 = vpop.permute.xlu0 %897
  %899 = vrot.lane.b32.xlu0 %v243, 96
  %v900 = vpop.permute.xlu0 %899
  %901 = vrot.lane.b32.xlu0 %v249, 96
  %v902 = vpop.permute.xlu0 %901
  %903 = vrot.lane.b32.xlu0 %v253, 96
  %v904 = vpop.permute.xlu0 %903
  %905 = vrot.lane.b32.xlu0 %v259, 96
  %v906 = vpop.permute.xlu0 %905
  %907 = vrot.lane.b32.xlu0 %v263, 96
  %v908 = vpop.permute.xlu0 %907
  %909 = vrot.lane.b32.xlu0 %v269, 96
  %v910 = vpop.permute.xlu0 %909
  %911 = vrot.lane.b32.xlu0 %v273, 96
  %v912 = vpop.permute.xlu0 %911
  %913 = vrot.lane.b32.xlu0 %v279, 96
  %v914 = vpop.permute.xlu0 %913
  %915 = vrot.lane.b32.xlu0 %v283, 96
  %v916 = vpop.permute.xlu0 %915
  %917 = vrot.lane.b32.xlu0 %v289, 96
  %v918 = vpop.permute.xlu0 %917
  %919 = vrot.lane.b32.xlu0 %v293, 96
  %v920 = vpop.permute.xlu0 %919
  %921 = vrot.lane.b32.xlu0 %v299, 96
  %v922 = vpop.permute.xlu0 %921
  %923 = vrot.lane.b32.xlu0 %v303, 96
  %v924 = vpop.permute.xlu0 %923
  %925 = vrot.lane.b32.xlu0 %v319, 96
  %v926 = vpop.permute.xlu0 %925
  %927 = vrot.lane.b32.xlu0 %v323, 96
  %v928 = vpop.permute.xlu0 %927
  %929 = vrot.lane.b32.xlu0 %v329, 96
  %v930 = vpop.permute.xlu0 %929
  %931 = vrot.lane.b32.xlu0 %v333, 96
  %v932 = vpop.permute.xlu0 %931
  %933 = vrot.lane.b32.xlu0 %v339, 96
  %v934 = vpop.permute.xlu0 %933
  %935 = vrot.lane.b32.xlu0 %v343, 96
  %v936 = vpop.permute.xlu0 %935
  %937 = vrot.lane.b32.xlu0 %v349, 96
  %v938 = vpop.permute.xlu0 %937
  %939 = vrot.lane.b32.xlu0 %v353, 96
  %v940 = vpop.permute.xlu0 %939
  %941 = vrot.lane.b32.xlu0 %v359, 96
  %v942 = vpop.permute.xlu0 %941
  %943 = vrot.lane.b32.xlu0 %v363, 96
  %v944 = vpop.permute.xlu0 %943
  %945 = vrot.lane.b32.xlu0 %v369, 96
  %v946 = vpop.permute.xlu0 %945
  %947 = vrot.lane.b32.xlu0 %v373, 96
  %v948 = vpop.permute.xlu0 %947
  %949 = vrot.lane.b32.xlu0 %v379, 96
  %v950 = vpop.permute.xlu0 %949
  %951 = vrot.lane.b32.xlu0 %v383, 96
  %v952 = vpop.permute.xlu0 %951
  %v981 = vadd.f32 %v869, %v898
  %v982 = vadd.f32 %v870, %v900
  %v983 = vadd.f32 %v871, %v902
  %v984 = vadd.f32 %v872, %v904
  %v985 = vadd.f32 %v873, %v906
  %v986 = vadd.f32 %v874, %v908
  %v987 = vadd.f32 %v875, %v910
  %v988 = vadd.f32 %v876, %v912
  %v989 = vadd.f32 %v877, %v914
  %v990 = vadd.f32 %v878, %v916
  %v991 = vadd.f32 %v879, %v918
  %v992 = vadd.f32 %v880, %v920
  %v993 = vadd.f32 %v881, %v922
  %v994 = vadd.f32 %v882, %v924
  %v995 = vadd.f32 %v883, %v926
  %v996 = vadd.f32 %v884, %v928
  %v997 = vadd.f32 %v885, %v930
  %v998 = vadd.f32 %v886, %v932
  %v999 = vadd.f32 %v887, %v934
  %v1000 = vadd.f32 %v888, %v936
  %v1001 = vadd.f32 %v889, %v938
  %v1002 = vadd.f32 %v890, %v940
  %v1003 = vadd.f32 %v891, %v942
  %v1004 = vadd.f32 %v892, %v944
  %v1005 = vadd.f32 %v893, %v946
  %v1006 = vadd.f32 %v894, %v948
  %v1007 = vadd.f32 %v895, %v950
  %v1008 = vadd.f32 %v896, %v952
  %1009 = vst.msk [vmem:[%s515] sm:$0xff] %vm145, %v981
  %1010 = vst.msk [vmem:[%s515 + $0x8] sm:$0xff] %vm145, %v982
  %1011 = vst.msk [vmem:[%s515 + $0x10] sm:$0xff] %vm145, %v983
  %1012 = vst.msk [vmem:[%s515 + $0x18] sm:$0xff] %vm145, %v984
  %1013 = vst.msk [vmem:[%s515 + $0x20] sm:$0xff] %vm145, %v985
  %1014 = vst.msk [vmem:[%s515 + $0x28] sm:$0xff] %vm145, %v986
  %1015 = vst.msk [vmem:[%s515 + $0x30] sm:$0xff] %vm145, %v987
  %1016 = vst.msk [vmem:[%s515 + $0x38] sm:$0xff] %vm145, %v988
  %1017 = vst.msk [vmem:[%s515 + $0x40] sm:$0xff] %vm145, %v989
  %1018 = vst.msk [vmem:[%s515 + $0x48] sm:$0xff] %vm145, %v990
  %1019 = vst.msk [vmem:[%s515 + $0x50] sm:$0xff] %vm145, %v991
  %1020 = vst.msk [vmem:[%s515 + $0x58] sm:$0xff] %vm145, %v992
  %1021 = vst.msk [vmem:[%s515 + $0x60] sm:$0xff] %vm145, %v993
  %1022 = vst.msk [vmem:[%s515 + $0x68] sm:$0xff] %vm145, %v994
  %1023 = vst.msk [vmem:[%s515 + $0x80] sm:$0xff] %vm145, %v995
  %1024 = vst.msk [vmem:[%s515 + $0x88] sm:$0xff] %vm145, %v996
  %1025 = vst.msk [vmem:[%s515 + $0x90] sm:$0xff] %vm145, %v997
  %1026 = vst.msk [vmem:[%s515 + $0x98] sm:$0xff] %vm145, %v998
  %1027 = vst.msk [vmem:[%s515 + $0xa0] sm:$0xff] %vm145, %v999
  %1028 = vst.msk [vmem:[%s515 + $0xa8] sm:$0xff] %vm145, %v1000
  %1029 = vst.msk [vmem:[%s515 + $0xb0] sm:$0xff] %vm145, %v1001
  %1030 = vst.msk [vmem:[%s515 + $0xb8] sm:$0xff] %vm145, %v1002
  %1031 = vst.msk [vmem:[%s515 + $0xc0] sm:$0xff] %vm145, %v1003
  %1032 = vst.msk [vmem:[%s515 + $0xc8] sm:$0xff] %vm145, %v1004
  %1033 = vst.msk [vmem:[%s515 + $0xd0] sm:$0xff] %vm145, %v1005
  %1034 = vst.msk [vmem:[%s515 + $0xd8] sm:$0xff] %vm145, %v1006
  %1035 = vst.msk [vmem:[%s515 + $0xe0] sm:$0xff] %vm145, %v1007
  %1036 = vst.msk [vmem:[%s515 + $0xe8] sm:$0xff] %vm145, %v1008
  %s1037 = scalar_lea.vmem [#allocation2], 256
  %v1038 = vld [vmem:[%s1037] sm:$0xff]
  %v1039 = vld [vmem:[%s1037 + $0x8] sm:$0x7f]
  %v1040 = vld [vmem:[%s1037 + $0x10] sm:$0xff]
  %v1041 = vld [vmem:[%s1037 + $0x18] sm:$0x7f]
  %v1042 = vld [vmem:[%s1037 + $0x20] sm:$0xff]
  %v1043 = vld [vmem:[%s1037 + $0x28] sm:$0x7f]
  %v1044 = vld [vmem:[%s1037 + $0x30] sm:$0xff]
  %v1045 = vld [vmem:[%s1037 + $0x38] sm:$0x7f]
  %v1046 = vld [vmem:[%s1037 + $0x40] sm:$0xff]
  %v1047 = vld [vmem:[%s1037 + $0x48] sm:$0x7f]
  %v1048 = vld [vmem:[%s1037 + $0x50] sm:$0xff]
  %v1049 = vld [vmem:[%s1037 + $0x58] sm:$0x7f]
  %v1050 = vld [vmem:[%s1037 + $0x60] sm:$0xff]
  %v1051 = vld [vmem:[%s1037 + $0x68] sm:$0x7f]
  %v1052 = vld [vmem:[%s1037 + $0x70] sm:$0xff]
  %v1053 = vld [vmem:[%s1037 + $0x78] sm:$0x7f]
  %v1054 = vld [vmem:[%s1037 + $0x80] sm:$0xff]
  %v1055 = vld [vmem:[%s1037 + $0x88] sm:$0x7f]
  %v1056 = vld [vmem:[%s1037 + $0x90] sm:$0xff]
  %v1057 = vld [vmem:[%s1037 + $0x98] sm:$0x7f]
  %v1058 = vld [vmem:[%s1037 + $0xa0] sm:$0xff]
  %v1059 = vld [vmem:[%s1037 + $0xa8] sm:$0x7f]
  %v1060 = vld [vmem:[%s1037 + $0xb0] sm:$0xff]
  %v1061 = vld [vmem:[%s1037 + $0xb8] sm:$0x7f]
  %v1062 = vld [vmem:[%s1037 + $0xc0] sm:$0xff]
  %v1063 = vld [vmem:[%s1037 + $0xc8] sm:$0x7f]
  %v1064 = vld [vmem:[%s1037 + $0xd0] sm:$0xff]
  %v1065 = vld [vmem:[%s1037 + $0xd8] sm:$0x7f]
  %v1066 = vld [vmem:[%s1037 + $0xe0] sm:$0xff]
  %v1067 = vld [vmem:[%s1037 + $0xe8] sm:$0x7f]
  %v1068 = vld [vmem:[%s1037 + $0xf0] sm:$0xff]
  %v1069 = vld [vmem:[%s1037 + $0xf8] sm:$0x7f]
  %v1074 = vrot.slane %v229, 1
  %v1075 = vrot.slane %v233, 1
  %v1076 = vsel %vm572, %v1074, %v1075
  %v1077 = vrot.slane %v309, 1
  %v1078 = vrot.slane %v313, 1
  %v1079 = vsel %vm572, %v1077, %v1078
  %1080 = vrot.lane.b32.xlu0 %v1076, 80
  %v1081 = vpop.permute.xlu0 %1080
  %1082 = vrot.lane.b32.xlu0 %v1075, 80
  %v1083 = vpop.permute.xlu0 %1082
  %1084 = vrot.lane.b32.xlu0 %v575, 80
  %v1085 = vpop.permute.xlu0 %1084
  %1086 = vrot.lane.b32.xlu0 %v574, 80
  %v1087 = vpop.permute.xlu0 %1086
  %1088 = vrot.lane.b32.xlu0 %v578, 80
  %v1089 = vpop.permute.xlu0 %1088
  %1090 = vrot.lane.b32.xlu0 %v577, 80
  %v1091 = vpop.permute.xlu0 %1090
  %1092 = vrot.lane.b32.xlu0 %v581, 80
  %v1093 = vpop.permute.xlu0 %1092
  %1094 = vrot.lane.b32.xlu0 %v580, 80
  %v1095 = vpop.permute.xlu0 %1094
  %1096 = vrot.lane.b32.xlu0 %v584, 80
  %v1097 = vpop.permute.xlu0 %1096
  %1098 = vrot.lane.b32.xlu0 %v583, 80
  %v1099 = vpop.permute.xlu0 %1098
  %1100 = vrot.lane.b32.xlu0 %v587, 80
  %v1101 = vpop.permute.xlu0 %1100
  %1102 = vrot.lane.b32.xlu0 %v586, 80
  %v1103 = vpop.permute.xlu0 %1102
  %1104 = vrot.lane.b32.xlu0 %v590, 80
  %v1105 = vpop.permute.xlu0 %1104
  %1106 = vrot.lane.b32.xlu0 %v589, 80
  %v1107 = vpop.permute.xlu0 %1106
  %1108 = vrot.lane.b32.xlu0 %v593, 80
  %v1109 = vpop.permute.xlu0 %1108
  %1110 = vrot.lane.b32.xlu0 %v592, 80
  %v1111 = vpop.permute.xlu0 %1110
  %1112 = vrot.lane.b32.xlu0 %v1079, 80
  %v1113 = vpop.permute.xlu0 %1112
  %1114 = vrot.lane.b32.xlu0 %v1078, 80
  %v1115 = vpop.permute.xlu0 %1114
  %1116 = vrot.lane.b32.xlu0 %v596, 80
  %v1117 = vpop.permute.xlu0 %1116
  %1118 = vrot.lane.b32.xlu0 %v595, 80
  %v1119 = vpop.permute.xlu0 %1118
  %1120 = vrot.lane.b32.xlu0 %v599, 80
  %v1121 = vpop.permute.xlu0 %1120
  %1122 = vrot.lane.b32.xlu0 %v598, 80
  %v1123 = vpop.permute.xlu0 %1122
  %1124 = vrot.lane.b32.xlu0 %v602, 80
  %v1125 = vpop.permute.xlu0 %1124
  %1126 = vrot.lane.b32.xlu0 %v601, 80
  %v1127 = vpop.permute.xlu0 %1126
  %1128 = vrot.lane.b32.xlu0 %v605, 80
  %v1129 = vpop.permute.xlu0 %1128
  %1130 = vrot.lane.b32.xlu0 %v604, 80
  %v1131 = vpop.permute.xlu0 %1130
  %1132 = vrot.lane.b32.xlu0 %v608, 80
  %v1133 = vpop.permute.xlu0 %1132
  %1134 = vrot.lane.b32.xlu0 %v607, 80
  %v1135 = vpop.permute.xlu0 %1134
  %1136 = vrot.lane.b32.xlu0 %v611, 80
  %v1137 = vpop.permute.xlu0 %1136
  %1138 = vrot.lane.b32.xlu0 %v610, 80
  %v1139 = vpop.permute.xlu0 %1138
  %1140 = vrot.lane.b32.xlu0 %v614, 80
  %v1141 = vpop.permute.xlu0 %1140
  %1142 = vrot.lane.b32.xlu0 %v613, 80
  %v1143 = vpop.permute.xlu0 %1142
  %v1176 = vadd.f32 %v1038, %v1081
  %v1177 = vadd.f32 %v1039, %v1083
  %v1178 = vadd.f32 %v1040, %v1085
  %v1179 = vadd.f32 %v1041, %v1087
  %v1180 = vadd.f32 %v1042, %v1089
  %v1181 = vadd.f32 %v1043, %v1091
  %v1182 = vadd.f32 %v1044, %v1093
  %v1183 = vadd.f32 %v1045, %v1095
  %v1184 = vadd.f32 %v1046, %v1097
  %v1185 = vadd.f32 %v1047, %v1099
  %v1186 = vadd.f32 %v1048, %v1101
  %v1187 = vadd.f32 %v1049, %v1103
  %v1188 = vadd.f32 %v1050, %v1105
  %v1189 = vadd.f32 %v1051, %v1107
  %v1190 = vadd.f32 %v1052, %v1109
  %v1191 = vadd.f32 %v1053, %v1111
  %v1192 = vadd.f32 %v1054, %v1113
  %v1193 = vadd.f32 %v1055, %v1115
  %v1194 = vadd.f32 %v1056, %v1117
  %v1195 = vadd.f32 %v1057, %v1119
  %v1196 = vadd.f32 %v1058, %v1121
  %v1197 = vadd.f32 %v1059, %v1123
  %v1198 = vadd.f32 %v1060, %v1125
  %v1199 = vadd.f32 %v1061, %v1127
  %v1200 = vadd.f32 %v1062, %v1129
  %v1201 = vadd.f32 %v1063, %v1131
  %v1202 = vadd.f32 %v1064, %v1133
  %v1203 = vadd.f32 %v1065, %v1135
  %v1204 = vadd.f32 %v1066, %v1137
  %v1205 = vadd.f32 %v1067, %v1139
  %v1206 = vadd.f32 %v1068, %v1141
  %v1207 = vadd.f32 %v1069, %v1143
  %1208 = vst.msk [vmem:[%s1037] sm:$0xff] %vm145, %v1176
  %1209 = vst.msk [vmem:[%s1037 + $0x8] sm:$0x7f] %vm672, %v1177
  %1210 = vst.msk [vmem:[%s1037 + $0x10] sm:$0xff] %vm145, %v1178
  %1211 = vst.msk [vmem:[%s1037 + $0x18] sm:$0x7f] %vm672, %v1179
  %1212 = vst.msk [vmem:[%s1037 + $0x20] sm:$0xff] %vm145, %v1180
  %1213 = vst.msk [vmem:[%s1037 + $0x28] sm:$0x7f] %vm672, %v1181
  %1214 = vst.msk [vmem:[%s1037 + $0x30] sm:$0xff] %vm145, %v1182
  %1215 = vst.msk [vmem:[%s1037 + $0x38] sm:$0x7f] %vm672, %v1183
  %1216 = vst.msk [vmem:[%s1037 + $0x40] sm:$0xff] %vm145, %v1184
  %1217 = vst.msk [vmem:[%s1037 + $0x48] sm:$0x7f] %vm672, %v1185
  %1218 = vst.msk [vmem:[%s1037 + $0x50] sm:$0xff] %vm145, %v1186
  %1219 = vst.msk [vmem:[%s1037 + $0x58] sm:$0x7f] %vm672, %v1187
  %1220 = vst.msk [vmem:[%s1037 + $0x60] sm:$0xff] %vm145, %v1188
  %1221 = vst.msk [vmem:[%s1037 + $0x68] sm:$0x7f] %vm672, %v1189
  %1222 = vst.msk [vmem:[%s1037 + $0x70] sm:$0xff] %vm145, %v1190
  %1223 = vst.msk [vmem:[%s1037 + $0x78] sm:$0x7f] %vm672, %v1191
  %1224 = vst.msk [vmem:[%s1037 + $0x80] sm:$0xff] %vm145, %v1192
  %1225 = vst.msk [vmem:[%s1037 + $0x88] sm:$0x7f] %vm672, %v1193
  %1226 = vst.msk [vmem:[%s1037 + $0x90] sm:$0xff] %vm145, %v1194
  %1227 = vst.msk [vmem:[%s1037 + $0x98] sm:$0x7f] %vm672, %v1195
  %1228 = vst.msk [vmem:[%s1037 + $0xa0] sm:$0xff] %vm145, %v1196
  %1229 = vst.msk [vmem:[%s1037 + $0xa8] sm:$0x7f] %vm672, %v1197
  %1230 = vst.msk [vmem:[%s1037 + $0xb0] sm:$0xff] %vm145, %v1198
  %1231 = vst.msk [vmem:[%s1037 + $0xb8] sm:$0x7f] %vm672, %v1199
  %1232 = vst.msk [vmem:[%s1037 + $0xc0] sm:$0xff] %vm145, %v1200
  %1233 = vst.msk [vmem:[%s1037 + $0xc8] sm:$0x7f] %vm672, %v1201
  %1234 = vst.msk [vmem:[%s1037 + $0xd0] sm:$0xff] %vm145, %v1202
  %1235 = vst.msk [vmem:[%s1037 + $0xd8] sm:$0x7f] %vm672, %v1203
  %1236 = vst.msk [vmem:[%s1037 + $0xe0] sm:$0xff] %vm145, %v1204
  %1237 = vst.msk [vmem:[%s1037 + $0xe8] sm:$0x7f] %vm672, %v1205
  %1238 = vst.msk [vmem:[%s1037 + $0xf0] sm:$0xff] %vm145, %v1206
  %1239 = vst.msk [vmem:[%s1037 + $0xf8] sm:$0x7f] %vm672, %v1207
  %v1240 = vld [vmem:[#allocation2] sm:$0xff]
  %v1241 = vld [vmem:[#allocation2 + $0x8] sm:$0xff]
  %v1242 = vld [vmem:[#allocation2 + $0x10] sm:$0xff]
  %v1243 = vld [vmem:[#allocation2 + $0x18] sm:$0xff]
  %v1244 = vld [vmem:[#allocation2 + $0x20] sm:$0xff]
  %v1245 = vld [vmem:[#allocation2 + $0x28] sm:$0xff]
  %v1246 = vld [vmem:[#allocation2 + $0x30] sm:$0xff]
  %v1247 = vld [vmem:[#allocation2 + $0x38] sm:$0xff]
  %v1248 = vld [vmem:[#allocation2 + $0x40] sm:$0xff]
  %v1249 = vld [vmem:[#allocation2 + $0x48] sm:$0xff]
  %v1250 = vld [vmem:[#allocation2 + $0x50] sm:$0xff]
  %v1251 = vld [vmem:[#allocation2 + $0x58] sm:$0xff]
  %v1252 = vld [vmem:[#allocation2 + $0x60] sm:$0xff]
  %v1253 = vld [vmem:[#allocation2 + $0x68] sm:$0xff]
  %v1254 = vld [vmem:[#allocation2 + $0x70] sm:$0xff]
  %v1255 = vld [vmem:[#allocation2 + $0x78] sm:$0xff]
  %v1256 = vld [vmem:[#allocation2 + $0x80] sm:$0xff]
  %v1257 = vld [vmem:[#allocation2 + $0x88] sm:$0xff]
  %v1258 = vld [vmem:[#allocation2 + $0x90] sm:$0xff]
  %v1259 = vld [vmem:[#allocation2 + $0x98] sm:$0xff]
  %v1260 = vld [vmem:[#allocation2 + $0xa0] sm:$0xff]
  %v1261 = vld [vmem:[#allocation2 + $0xa8] sm:$0xff]
  %v1262 = vld [vmem:[#allocation2 + $0xb0] sm:$0xff]
  %v1263 = vld [vmem:[#allocation2 + $0xb8] sm:$0xff]
  %v1264 = vld [vmem:[#allocation2 + $0xc0] sm:$0xff]
  %v1265 = vld [vmem:[#allocation2 + $0xc8] sm:$0xff]
  %v1266 = vld [vmem:[#allocation2 + $0xd0] sm:$0xff]
  %v1267 = vld [vmem:[#allocation2 + $0xd8] sm:$0xff]
  %v1268 = vld [vmem:[#allocation2 + $0xe0] sm:$0xff]
  %v1269 = vld [vmem:[#allocation2 + $0xe8] sm:$0xff]
  %v1270 = vld [vmem:[#allocation2 + $0xf0] sm:$0xff]
  %v1271 = vld [vmem:[#allocation2 + $0xf8] sm:$0xff]
  %1272 = vrot.lane.b32.xlu0 %v229, 64
  %v1273 = vpop.permute.xlu0 %1272
  %1274 = vrot.lane.b32.xlu0 %v233, 64
  %v1275 = vpop.permute.xlu0 %1274
  %1276 = vrot.lane.b32.xlu0 %v239, 64
  %v1277 = vpop.permute.xlu0 %1276
  %1278 = vrot.lane.b32.xlu0 %v243, 64
  %v1279 = vpop.permute.xlu0 %1278
  %1280 = vrot.lane.b32.xlu0 %v249, 64
  %v1281 = vpop.permute.xlu0 %1280
  %1282 = vrot.lane.b32.xlu0 %v253, 64
  %v1283 = vpop.permute.xlu0 %1282
  %1284 = vrot.lane.b32.xlu0 %v259, 64
  %v1285 = vpop.permute.xlu0 %1284
  %1286 = vrot.lane.b32.xlu0 %v263, 64
  %v1287 = vpop.permute.xlu0 %1286
  %1288 = vrot.lane.b32.xlu0 %v269, 64
  %v1289 = vpop.permute.xlu0 %1288
  %1290 = vrot.lane.b32.xlu0 %v273, 64
  %v1291 = vpop.permute.xlu0 %1290
  %1292 = vrot.lane.b32.xlu0 %v279, 64
  %v1293 = vpop.permute.xlu0 %1292
  %1294 = vrot.lane.b32.xlu0 %v283, 64
  %v1295 = vpop.permute.xlu0 %1294
  %1296 = vrot.lane.b32.xlu0 %v289, 64
  %v1297 = vpop.permute.xlu0 %1296
  %1298 = vrot.lane.b32.xlu0 %v293, 64
  %v1299 = vpop.permute.xlu0 %1298
  %1300 = vrot.lane.b32.xlu0 %v299, 64
  %v1301 = vpop.permute.xlu0 %1300
  %1302 = vrot.lane.b32.xlu0 %v303, 64
  %v1303 = vpop.permute.xlu0 %1302
  %1304 = vrot.lane.b32.xlu0 %v309, 64
  %v1305 = vpop.permute.xlu0 %1304
  %1306 = vrot.lane.b32.xlu0 %v313, 64
  %v1307 = vpop.permute.xlu0 %1306
  %1308 = vrot.lane.b32.xlu0 %v319, 64
  %v1309 = vpop.permute.xlu0 %1308
  %1310 = vrot.lane.b32.xlu0 %v323, 64
  %v1311 = vpop.permute.xlu0 %1310
  %1312 = vrot.lane.b32.xlu0 %v329, 64
  %v1313 = vpop.permute.xlu0 %1312
  %1314 = vrot.lane.b32.xlu0 %v333, 64
  %v1315 = vpop.permute.xlu0 %1314
  %1316 = vrot.lane.b32.xlu0 %v339, 64
  %v1317 = vpop.permute.xlu0 %1316
  %1318 = vrot.lane.b32.xlu0 %v343, 64
  %v1319 = vpop.permute.xlu0 %1318
  %1320 = vrot.lane.b32.xlu0 %v349, 64
  %v1321 = vpop.permute.xlu0 %1320
  %1322 = vrot.lane.b32.xlu0 %v353, 64
  %v1323 = vpop.permute.xlu0 %1322
  %1324 = vrot.lane.b32.xlu0 %v359, 64
  %v1325 = vpop.permute.xlu0 %1324
  %1326 = vrot.lane.b32.xlu0 %v363, 64
  %v1327 = vpop.permute.xlu0 %1326
  %1328 = vrot.lane.b32.xlu0 %v369, 64
  %v1329 = vpop.permute.xlu0 %1328
  %1330 = vrot.lane.b32.xlu0 %v373, 64
  %v1331 = vpop.permute.xlu0 %1330
  %1332 = vrot.lane.b32.xlu0 %v379, 64
  %v1333 = vpop.permute.xlu0 %1332
  %1334 = vrot.lane.b32.xlu0 %v383, 64
  %v1335 = vpop.permute.xlu0 %1334
  %v1368 = vadd.f32 %v1240, %v1273
  %v1369 = vadd.f32 %v1241, %v1275
  %v1370 = vadd.f32 %v1242, %v1277
  %v1371 = vadd.f32 %v1243, %v1279
  %v1372 = vadd.f32 %v1244, %v1281
  %v1373 = vadd.f32 %v1245, %v1283
  %v1374 = vadd.f32 %v1246, %v1285
  %v1375 = vadd.f32 %v1247, %v1287
  %v1376 = vadd.f32 %v1248, %v1289
  %v1377 = vadd.f32 %v1249, %v1291
  %v1378 = vadd.f32 %v1250, %v1293
  %v1379 = vadd.f32 %v1251, %v1295
  %v1380 = vadd.f32 %v1252, %v1297
  %v1381 = vadd.f32 %v1253, %v1299
  %v1382 = vadd.f32 %v1254, %v1301
  %v1383 = vadd.f32 %v1255, %v1303
  %v1384 = vadd.f32 %v1256, %v1305
  %v1385 = vadd.f32 %v1257, %v1307
  %v1386 = vadd.f32 %v1258, %v1309
  %v1387 = vadd.f32 %v1259, %v1311
  %v1388 = vadd.f32 %v1260, %v1313
  %v1389 = vadd.f32 %v1261, %v1315
  %v1390 = vadd.f32 %v1262, %v1317
  %v1391 = vadd.f32 %v1263, %v1319
  %v1392 = vadd.f32 %v1264, %v1321
  %v1393 = vadd.f32 %v1265, %v1323
  %v1394 = vadd.f32 %v1266, %v1325
  %v1395 = vadd.f32 %v1267, %v1327
  %v1396 = vadd.f32 %v1268, %v1329
  %v1397 = vadd.f32 %v1269, %v1331
  %v1398 = vadd.f32 %v1270, %v1333
  %v1399 = vadd.f32 %v1271, %v1335
  %1400 = vst.msk [vmem:[#allocation2] sm:$0xff] %vm145, %v1368
  %1401 = vst.msk [vmem:[#allocation2 + $0x8] sm:$0xff] %vm145, %v1369
  %1402 = vst.msk [vmem:[#allocation2 + $0x10] sm:$0xff] %vm145, %v1370
  %1403 = vst.msk [vmem:[#allocation2 + $0x18] sm:$0xff] %vm145, %v1371
  %1404 = vst.msk [vmem:[#allocation2 + $0x20] sm:$0xff] %vm145, %v1372
  %1405 = vst.msk [vmem:[#allocation2 + $0x28] sm:$0xff] %vm145, %v1373
  %1406 = vst.msk [vmem:[#allocation2 + $0x30] sm:$0xff] %vm145, %v1374
  %1407 = vst.msk [vmem:[#allocation2 + $0x38] sm:$0xff] %vm145, %v1375
  %1408 = vst.msk [vmem:[#allocation2 + $0x40] sm:$0xff] %vm145, %v1376
  %1409 = vst.msk [vmem:[#allocation2 + $0x48] sm:$0xff] %vm145, %v1377
  %1410 = vst.msk [vmem:[#allocation2 + $0x50] sm:$0xff] %vm145, %v1378
  %1411 = vst.msk [vmem:[#allocation2 + $0x58] sm:$0xff] %vm145, %v1379
  %1412 = vst.msk [vmem:[#allocation2 + $0x60] sm:$0xff] %vm145, %v1380
  %1413 = vst.msk [vmem:[#allocation2 + $0x68] sm:$0xff] %vm145, %v1381
  %1414 = vst.msk [vmem:[#allocation2 + $0x70] sm:$0xff] %vm145, %v1382
  %1415 = vst.msk [vmem:[#allocation2 + $0x78] sm:$0xff] %vm145, %v1383
  %1416 = vst.msk [vmem:[#allocation2 + $0x80] sm:$0xff] %vm145, %v1384
  %1417 = vst.msk [vmem:[#allocation2 + $0x88] sm:$0xff] %vm145, %v1385
  %1418 = vst.msk [vmem:[#allocation2 + $0x90] sm:$0xff] %vm145, %v1386
  %1419 = vst.msk [vmem:[#allocation2 + $0x98] sm:$0xff] %vm145, %v1387
  %1420 = vst.msk [vmem:[#allocation2 + $0xa0] sm:$0xff] %vm145, %v1388
  %1421 = vst.msk [vmem:[#allocation2 + $0xa8] sm:$0xff] %vm145, %v1389
  %1422 = vst.msk [vmem:[#allocation2 + $0xb0] sm:$0xff] %vm145, %v1390
  %1423 = vst.msk [vmem:[#allocation2 + $0xb8] sm:$0xff] %vm145, %v1391
  %1424 = vst.msk [vmem:[#allocation2 + $0xc0] sm:$0xff] %vm145, %v1392
  %1425 = vst.msk [vmem:[#allocation2 + $0xc8] sm:$0xff] %vm145, %v1393
  %1426 = vst.msk [vmem:[#allocation2 + $0xd0] sm:$0xff] %vm145, %v1394
  %1427 = vst.msk [vmem:[#allocation2 + $0xd8] sm:$0xff] %vm145, %v1395
  %1428 = vst.msk [vmem:[#allocation2 + $0xe0] sm:$0xff] %vm145, %v1396
  %1429 = vst.msk [vmem:[#allocation2 + $0xe8] sm:$0xff] %vm145, %v1397
  %1430 = vst.msk [vmem:[#allocation2 + $0xf0] sm:$0xff] %vm145, %v1398
  %1431 = vst.msk [vmem:[#allocation2 + $0xf8] sm:$0xff] %vm145, %v1399
  %v1432 = vld [vmem:[%s1037] sm:$0xff]
  %v1433 = vld [vmem:[%s1037 + $0x8] sm:$0xff]
  %v1434 = vld [vmem:[%s1037 + $0x10] sm:$0xff]
  %v1435 = vld [vmem:[%s1037 + $0x18] sm:$0xff]
  %v1436 = vld [vmem:[%s1037 + $0x20] sm:$0xff]
  %v1437 = vld [vmem:[%s1037 + $0x28] sm:$0xff]
  %v1438 = vld [vmem:[%s1037 + $0x30] sm:$0xff]
  %v1439 = vld [vmem:[%s1037 + $0x38] sm:$0xff]
  %v1440 = vld [vmem:[%s1037 + $0x40] sm:$0xff]
  %v1441 = vld [vmem:[%s1037 + $0x48] sm:$0xff]
  %v1442 = vld [vmem:[%s1037 + $0x50] sm:$0xff]
  %v1443 = vld [vmem:[%s1037 + $0x58] sm:$0xff]
  %v1444 = vld [vmem:[%s1037 + $0x60] sm:$0xff]
  %v1445 = vld [vmem:[%s1037 + $0x68] sm:$0xff]
  %v1446 = vld [vmem:[%s1037 + $0x70] sm:$0xff]
  %v1447 = vld [vmem:[%s1037 + $0x78] sm:$0xff]
  %v1448 = vld [vmem:[%s1037 + $0x80] sm:$0xff]
  %v1449 = vld [vmem:[%s1037 + $0x88] sm:$0xff]
  %v1450 = vld [vmem:[%s1037 + $0x90] sm:$0xff]
  %v1451 = vld [vmem:[%s1037 + $0x98] sm:$0xff]
  %v1452 = vld [vmem:[%s1037 + $0xa0] sm:$0xff]
  %v1453 = vld [vmem:[%s1037 + $0xa8] sm:$0xff]
  %v1454 = vld [vmem:[%s1037 + $0xb0] sm:$0xff]
  %v1455 = vld [vmem:[%s1037 + $0xb8] sm:$0xff]
  %v1456 = vld [vmem:[%s1037 + $0xc0] sm:$0xff]
  %v1457 = vld [vmem:[%s1037 + $0xc8] sm:$0xff]
  %v1458 = vld [vmem:[%s1037 + $0xd0] sm:$0xff]
  %v1459 = vld [vmem:[%s1037 + $0xd8] sm:$0xff]
  %v1460 = vld [vmem:[%s1037 + $0xe0] sm:$0xff]
  %v1461 = vld [vmem:[%s1037 + $0xe8] sm:$0xff]
  %v1462 = vld [vmem:[%s1037 + $0xf0] sm:$0xff]
  %v1463 = vld [vmem:[%s1037 + $0xf8] sm:$0xff]
  %1464 = vrot.lane.b32.xlu0 %v229, 48
  %v1465 = vpop.permute.xlu0 %1464
  %1466 = vrot.lane.b32.xlu0 %v233, 48
  %v1467 = vpop.permute.xlu0 %1466
  %1468 = vrot.lane.b32.xlu0 %v239, 48
  %v1469 = vpop.permute.xlu0 %1468
  %1470 = vrot.lane.b32.xlu0 %v243, 48
  %v1471 = vpop.permute.xlu0 %1470
  %1472 = vrot.lane.b32.xlu0 %v249, 48
  %v1473 = vpop.permute.xlu0 %1472
  %1474 = vrot.lane.b32.xlu0 %v253, 48
  %v1475 = vpop.permute.xlu0 %1474
  %1476 = vrot.lane.b32.xlu0 %v259, 48
  %v1477 = vpop.permute.xlu0 %1476
  %1478 = vrot.lane.b32.xlu0 %v263, 48
  %v1479 = vpop.permute.xlu0 %1478
  %1480 = vrot.lane.b32.xlu0 %v269, 48
  %v1481 = vpop.permute.xlu0 %1480
  %1482 = vrot.lane.b32.xlu0 %v273, 48
  %v1483 = vpop.permute.xlu0 %1482
  %1484 = vrot.lane.b32.xlu0 %v279, 48
  %v1485 = vpop.permute.xlu0 %1484
  %1486 = vrot.lane.b32.xlu0 %v283, 48
  %v1487 = vpop.permute.xlu0 %1486
  %1488 = vrot.lane.b32.xlu0 %v289, 48
  %v1489 = vpop.permute.xlu0 %1488
  %1490 = vrot.lane.b32.xlu0 %v293, 48
  %v1491 = vpop.permute.xlu0 %1490
  %1492 = vrot.lane.b32.xlu0 %v299, 48
  %v1493 = vpop.permute.xlu0 %1492
  %1494 = vrot.lane.b32.xlu0 %v303, 48
  %v1495 = vpop.permute.xlu0 %1494
  %1496 = vrot.lane.b32.xlu0 %v309, 48
  %v1497 = vpop.permute.xlu0 %1496
  %1498 = vrot.lane.b32.xlu0 %v313, 48
  %v1499 = vpop.permute.xlu0 %1498
  %1500 = vrot.lane.b32.xlu0 %v319, 48
  %v1501 = vpop.permute.xlu0 %1500
  %1502 = vrot.lane.b32.xlu0 %v323, 48
  %v1503 = vpop.permute.xlu0 %1502
  %1504 = vrot.lane.b32.xlu0 %v329, 48
  %v1505 = vpop.permute.xlu0 %1504
  %1506 = vrot.lane.b32.xlu0 %v333, 48
  %v1507 = vpop.permute.xlu0 %1506
  %1508 = vrot.lane.b32.xlu0 %v339, 48
  %v1509 = vpop.permute.xlu0 %1508
  %1510 = vrot.lane.b32.xlu0 %v343, 48
  %v1511 = vpop.permute.xlu0 %1510
  %1512 = vrot.lane.b32.xlu0 %v349, 48
  %v1513 = vpop.permute.xlu0 %1512
  %1514 = vrot.lane.b32.xlu0 %v353, 48
  %v1515 = vpop.permute.xlu0 %1514
  %1516 = vrot.lane.b32.xlu0 %v359, 48
  %v1517 = vpop.permute.xlu0 %1516
  %1518 = vrot.lane.b32.xlu0 %v363, 48
  %v1519 = vpop.permute.xlu0 %1518
  %1520 = vrot.lane.b32.xlu0 %v369, 48
  %v1521 = vpop.permute.xlu0 %1520
  %1522 = vrot.lane.b32.xlu0 %v373, 48
  %v1523 = vpop.permute.xlu0 %1522
  %1524 = vrot.lane.b32.xlu0 %v379, 48
  %v1525 = vpop.permute.xlu0 %1524
  %1526 = vrot.lane.b32.xlu0 %v383, 48
  %v1527 = vpop.permute.xlu0 %1526
  %v1560 = vadd.f32 %v1432, %v1465
  %v1561 = vadd.f32 %v1433, %v1467
  %v1562 = vadd.f32 %v1434, %v1469
  %v1563 = vadd.f32 %v1435, %v1471
  %v1564 = vadd.f32 %v1436, %v1473
  %v1565 = vadd.f32 %v1437, %v1475
  %v1566 = vadd.f32 %v1438, %v1477
  %v1567 = vadd.f32 %v1439, %v1479
  %v1568 = vadd.f32 %v1440, %v1481
  %v1569 = vadd.f32 %v1441, %v1483
  %v1570 = vadd.f32 %v1442, %v1485
  %v1571 = vadd.f32 %v1443, %v1487
  %v1572 = vadd.f32 %v1444, %v1489
  %v1573 = vadd.f32 %v1445, %v1491
  %v1574 = vadd.f32 %v1446, %v1493
  %v1575 = vadd.f32 %v1447, %v1495
  %v1576 = vadd.f32 %v1448, %v1497
  %v1577 = vadd.f32 %v1449, %v1499
  %v1578 = vadd.f32 %v1450, %v1501
  %v1579 = vadd.f32 %v1451, %v1503
  %v1580 = vadd.f32 %v1452, %v1505
  %v1581 = vadd.f32 %v1453, %v1507
  %v1582 = vadd.f32 %v1454, %v1509
  %v1583 = vadd.f32 %v1455, %v1511
  %v1584 = vadd.f32 %v1456, %v1513
  %v1585 = vadd.f32 %v1457, %v1515
  %v1586 = vadd.f32 %v1458, %v1517
  %v1587 = vadd.f32 %v1459, %v1519
  %v1588 = vadd.f32 %v1460, %v1521
  %v1589 = vadd.f32 %v1461, %v1523
  %v1590 = vadd.f32 %v1462, %v1525
  %v1591 = vadd.f32 %v1463, %v1527
  %1592 = vst.msk [vmem:[%s1037] sm:$0xff] %vm145, %v1560
  %1593 = vst.msk [vmem:[%s1037 + $0x8] sm:$0xff] %vm145, %v1561
  %1594 = vst.msk [vmem:[%s1037 + $0x10] sm:$0xff] %vm145, %v1562
  %1595 = vst.msk [vmem:[%s1037 + $0x18] sm:$0xff] %vm145, %v1563
  %1596 = vst.msk [vmem:[%s1037 + $0x20] sm:$0xff] %vm145, %v1564
  %1597 = vst.msk [vmem:[%s1037 + $0x28] sm:$0xff] %vm145, %v1565
  %1598 = vst.msk [vmem:[%s1037 + $0x30] sm:$0xff] %vm145, %v1566
  %1599 = vst.msk [vmem:[%s1037 + $0x38] sm:$0xff] %vm145, %v1567
  %1600 = vst.msk [vmem:[%s1037 + $0x40] sm:$0xff] %vm145, %v1568
  %1601 = vst.msk [vmem:[%s1037 + $0x48] sm:$0xff] %vm145, %v1569
  %1602 = vst.msk [vmem:[%s1037 + $0x50] sm:$0xff] %vm145, %v1570
  %1603 = vst.msk [vmem:[%s1037 + $0x58] sm:$0xff] %vm145, %v1571
  %1604 = vst.msk [vmem:[%s1037 + $0x60] sm:$0xff] %vm145, %v1572
  %1605 = vst.msk [vmem:[%s1037 + $0x68] sm:$0xff] %vm145, %v1573
  %1606 = vst.msk [vmem:[%s1037 + $0x70] sm:$0xff] %vm145, %v1574
  %1607 = vst.msk [vmem:[%s1037 + $0x78] sm:$0xff] %vm145, %v1575
  %1608 = vst.msk [vmem:[%s1037 + $0x80] sm:$0xff] %vm145, %v1576
  %1609 = vst.msk [vmem:[%s1037 + $0x88] sm:$0xff] %vm145, %v1577
  %1610 = vst.msk [vmem:[%s1037 + $0x90] sm:$0xff] %vm145, %v1578
  %1611 = vst.msk [vmem:[%s1037 + $0x98] sm:$0xff] %vm145, %v1579
  %1612 = vst.msk [vmem:[%s1037 + $0xa0] sm:$0xff] %vm145, %v1580
  %1613 = vst.msk [vmem:[%s1037 + $0xa8] sm:$0xff] %vm145, %v1581
  %1614 = vst.msk [vmem:[%s1037 + $0xb0] sm:$0xff] %vm145, %v1582
  %1615 = vst.msk [vmem:[%s1037 + $0xb8] sm:$0xff] %vm145, %v1583
  %1616 = vst.msk [vmem:[%s1037 + $0xc0] sm:$0xff] %vm145, %v1584
  %1617 = vst.msk [vmem:[%s1037 + $0xc8] sm:$0xff] %vm145, %v1585
  %1618 = vst.msk [vmem:[%s1037 + $0xd0] sm:$0xff] %vm145, %v1586
  %1619 = vst.msk [vmem:[%s1037 + $0xd8] sm:$0xff] %vm145, %v1587
  %1620 = vst.msk [vmem:[%s1037 + $0xe0] sm:$0xff] %vm145, %v1588
  %1621 = vst.msk [vmem:[%s1037 + $0xe8] sm:$0xff] %vm145, %v1589
  %1622 = vst.msk [vmem:[%s1037 + $0xf0] sm:$0xff] %vm145, %v1590
  %1623 = vst.msk [vmem:[%s1037 + $0xf8] sm:$0xff] %vm145, %v1591
  %v1624 = vld [vmem:[%s515] sm:$0xff]
  %v1625 = vld [vmem:[%s515 + $0x8] sm:$0x7f]
  %v1626 = vld [vmem:[%s515 + $0x10] sm:$0xff]
  %v1627 = vld [vmem:[%s515 + $0x18] sm:$0x7f]
  %v1628 = vld [vmem:[%s515 + $0x20] sm:$0xff]
  %v1629 = vld [vmem:[%s515 + $0x28] sm:$0x7f]
  %v1630 = vld [vmem:[%s515 + $0x30] sm:$0xff]
  %v1631 = vld [vmem:[%s515 + $0x38] sm:$0x7f]
  %v1632 = vld [vmem:[%s515 + $0x40] sm:$0xff]
  %v1633 = vld [vmem:[%s515 + $0x48] sm:$0x7f]
  %v1634 = vld [vmem:[%s515 + $0x50] sm:$0xff]
  %v1635 = vld [vmem:[%s515 + $0x58] sm:$0x7f]
  %v1636 = vld [vmem:[%s515 + $0x60] sm:$0xff]
  %v1637 = vld [vmem:[%s515 + $0x68] sm:$0x7f]
  %v1638 = vld [vmem:[%s515 + $0x70] sm:$0xff]
  %v1639 = vld [vmem:[%s515 + $0x78] sm:$0x7f]
  %v1640 = vld [vmem:[%s515 + $0x80] sm:$0xff]
  %v1641 = vld [vmem:[%s515 + $0x88] sm:$0x7f]
  %v1642 = vld [vmem:[%s515 + $0x90] sm:$0xff]
  %v1643 = vld [vmem:[%s515 + $0x98] sm:$0x7f]
  %v1644 = vld [vmem:[%s515 + $0xa0] sm:$0xff]
  %v1645 = vld [vmem:[%s515 + $0xa8] sm:$0x7f]
  %v1646 = vld [vmem:[%s515 + $0xb0] sm:$0xff]
  %v1647 = vld [vmem:[%s515 + $0xb8] sm:$0x7f]
  %v1648 = vld [vmem:[%s515 + $0xc0] sm:$0xff]
  %v1649 = vld [vmem:[%s515 + $0xc8] sm:$0x7f]
  %v1650 = vld [vmem:[%s515 + $0xd0] sm:$0xff]
  %v1651 = vld [vmem:[%s515 + $0xd8] sm:$0x7f]
  %v1652 = vld [vmem:[%s515 + $0xe0] sm:$0xff]
  %v1653 = vld [vmem:[%s515 + $0xe8] sm:$0x7f]
  %v1654 = vld [vmem:[%s515 + $0xf0] sm:$0xff]
  %v1655 = vld [vmem:[%s515 + $0xf8] sm:$0x7f]
  %1656 = vrot.lane.b32.xlu0 %v1076, 32
  %v1657 = vpop.permute.xlu0 %1656
  %1658 = vrot.lane.b32.xlu0 %v1075, 32
  %v1659 = vpop.permute.xlu0 %1658
  %1660 = vrot.lane.b32.xlu0 %v575, 32
  %v1661 = vpop.permute.xlu0 %1660
  %1662 = vrot.lane.b32.xlu0 %v574, 32
  %v1663 = vpop.permute.xlu0 %1662
  %1664 = vrot.lane.b32.xlu0 %v578, 32
  %v1665 = vpop.permute.xlu0 %1664
  %1666 = vrot.lane.b32.xlu0 %v577, 32
  %v1667 = vpop.permute.xlu0 %1666
  %1668 = vrot.lane.b32.xlu0 %v581, 32
  %v1669 = vpop.permute.xlu0 %1668
  %1670 = vrot.lane.b32.xlu0 %v580, 32
  %v1671 = vpop.permute.xlu0 %1670
  %1672 = vrot.lane.b32.xlu0 %v584, 32
  %v1673 = vpop.permute.xlu0 %1672
  %1674 = vrot.lane.b32.xlu0 %v583, 32
  %v1675 = vpop.permute.xlu0 %1674
  %1676 = vrot.lane.b32.xlu0 %v587, 32
  %v1677 = vpop.permute.xlu0 %1676
  %1678 = vrot.lane.b32.xlu0 %v586, 32
  %v1679 = vpop.permute.xlu0 %1678
  %1680 = vrot.lane.b32.xlu0 %v590, 32
  %v1681 = vpop.permute.xlu0 %1680
  %1682 = vrot.lane.b32.xlu0 %v589, 32
  %v1683 = vpop.permute.xlu0 %1682
  %1684 = vrot.lane.b32.xlu0 %v593, 32
  %v1685 = vpop.permute.xlu0 %1684
  %1686 = vrot.lane.b32.xlu0 %v592, 32
  %v1687 = vpop.permute.xlu0 %1686
  %1688 = vrot.lane.b32.xlu0 %v1079, 32
  %v1689 = vpop.permute.xlu0 %1688
  %1690 = vrot.lane.b32.xlu0 %v1078, 32
  %v1691 = vpop.permute.xlu0 %1690
  %1692 = vrot.lane.b32.xlu0 %v596, 32
  %v1693 = vpop.permute.xlu0 %1692
  %1694 = vrot.lane.b32.xlu0 %v595, 32
  %v1695 = vpop.permute.xlu0 %1694
  %1696 = vrot.lane.b32.xlu0 %v599, 32
  %v1697 = vpop.permute.xlu0 %1696
  %1698 = vrot.lane.b32.xlu0 %v598, 32
  %v1699 = vpop.permute.xlu0 %1698
  %1700 = vrot.lane.b32.xlu0 %v602, 32
  %v1701 = vpop.permute.xlu0 %1700
  %1702 = vrot.lane.b32.xlu0 %v601, 32
  %v1703 = vpop.permute.xlu0 %1702
  %1704 = vrot.lane.b32.xlu0 %v605, 32
  %v1705 = vpop.permute.xlu0 %1704
  %1706 = vrot.lane.b32.xlu0 %v604, 32
  %v1707 = vpop.permute.xlu0 %1706
  %1708 = vrot.lane.b32.xlu0 %v608, 32
  %v1709 = vpop.permute.xlu0 %1708
  %1710 = vrot.lane.b32.xlu0 %v607, 32
  %v1711 = vpop.permute.xlu0 %1710
  %1712 = vrot.lane.b32.xlu0 %v611, 32
  %v1713 = vpop.permute.xlu0 %1712
  %1714 = vrot.lane.b32.xlu0 %v610, 32
  %v1715 = vpop.permute.xlu0 %1714
  %1716 = vrot.lane.b32.xlu0 %v614, 32
  %v1717 = vpop.permute.xlu0 %1716
  %1718 = vrot.lane.b32.xlu0 %v613, 32
  %v1719 = vpop.permute.xlu0 %1718
  %v1752 = vadd.f32 %v1624, %v1657
  %v1753 = vadd.f32 %v1625, %v1659
  %v1754 = vadd.f32 %v1626, %v1661
  %v1755 = vadd.f32 %v1627, %v1663
  %v1756 = vadd.f32 %v1628, %v1665
  %v1757 = vadd.f32 %v1629, %v1667
  %v1758 = vadd.f32 %v1630, %v1669
  %v1759 = vadd.f32 %v1631, %v1671
  %v1760 = vadd.f32 %v1632, %v1673
  %v1761 = vadd.f32 %v1633, %v1675
  %v1762 = vadd.f32 %v1634, %v1677
  %v1763 = vadd.f32 %v1635, %v1679
  %v1764 = vadd.f32 %v1636, %v1681
  %v1765 = vadd.f32 %v1637, %v1683
  %v1766 = vadd.f32 %v1638, %v1685
  %v1767 = vadd.f32 %v1639, %v1687
  %v1768 = vadd.f32 %v1640, %v1689
  %v1769 = vadd.f32 %v1641, %v1691
  %v1770 = vadd.f32 %v1642, %v1693
  %v1771 = vadd.f32 %v1643, %v1695
  %v1772 = vadd.f32 %v1644, %v1697
  %v1773 = vadd.f32 %v1645, %v1699
  %v1774 = vadd.f32 %v1646, %v1701
  %v1775 = vadd.f32 %v1647, %v1703
  %v1776 = vadd.f32 %v1648, %v1705
  %v1777 = vadd.f32 %v1649, %v1707
  %v1778 = vadd.f32 %v1650, %v1709
  %v1779 = vadd.f32 %v1651, %v1711
  %v1780 = vadd.f32 %v1652, %v1713
  %v1781 = vadd.f32 %v1653, %v1715
  %v1782 = vadd.f32 %v1654, %v1717
  %v1783 = vadd.f32 %v1655, %v1719
  %1784 = vst.msk [vmem:[%s515] sm:$0xff] %vm145, %v1752
  %1785 = vst.msk [vmem:[%s515 + $0x8] sm:$0x7f] %vm672, %v1753
  %1786 = vst.msk [vmem:[%s515 + $0x10] sm:$0xff] %vm145, %v1754
  %1787 = vst.msk [vmem:[%s515 + $0x18] sm:$0x7f] %vm672, %v1755
  %1788 = vst.msk [vmem:[%s515 + $0x20] sm:$0xff] %vm145, %v1756
  %1789 = vst.msk [vmem:[%s515 + $0x28] sm:$0x7f] %vm672, %v1757
  %1790 = vst.msk [vmem:[%s515 + $0x30] sm:$0xff] %vm145, %v1758
  %1791 = vst.msk [vmem:[%s515 + $0x38] sm:$0x7f] %vm672, %v1759
  %1792 = vst.msk [vmem:[%s515 + $0x40] sm:$0xff] %vm145, %v1760
  %1793 = vst.msk [vmem:[%s515 + $0x48] sm:$0x7f] %vm672, %v1761
  %1794 = vst.msk [vmem:[%s515 + $0x50] sm:$0xff] %vm145, %v1762
  %1795 = vst.msk [vmem:[%s515 + $0x58] sm:$0x7f] %vm672, %v1763
  %1796 = vst.msk [vmem:[%s515 + $0x60] sm:$0xff] %vm145, %v1764
  %1797 = vst.msk [vmem:[%s515 + $0x68] sm:$0x7f] %vm672, %v1765
  %1798 = vst.msk [vmem:[%s515 + $0x70] sm:$0xff] %vm145, %v1766
  %1799 = vst.msk [vmem:[%s515 + $0x78] sm:$0x7f] %vm672, %v1767
  %1800 = vst.msk [vmem:[%s515 + $0x80] sm:$0xff] %vm145, %v1768
  %1801 = vst.msk [vmem:[%s515 + $0x88] sm:$0x7f] %vm672, %v1769
  %1802 = vst.msk [vmem:[%s515 + $0x90] sm:$0xff] %vm145, %v1770
  %1803 = vst.msk [vmem:[%s515 + $0x98] sm:$0x7f] %vm672, %v1771
  %1804 = vst.msk [vmem:[%s515 + $0xa0] sm:$0xff] %vm145, %v1772
  %1805 = vst.msk [vmem:[%s515 + $0xa8] sm:$0x7f] %vm672, %v1773
  %1806 = vst.msk [vmem:[%s515 + $0xb0] sm:$0xff] %vm145, %v1774
  %1807 = vst.msk [vmem:[%s515 + $0xb8] sm:$0x7f] %vm672, %v1775
  %1808 = vst.msk [vmem:[%s515 + $0xc0] sm:$0xff] %vm145, %v1776
  %1809 = vst.msk [vmem:[%s515 + $0xc8] sm:$0x7f] %vm672, %v1777
  %1810 = vst.msk [vmem:[%s515 + $0xd0] sm:$0xff] %vm145, %v1778
  %1811 = vst.msk [vmem:[%s515 + $0xd8] sm:$0x7f] %vm672, %v1779
  %1812 = vst.msk [vmem:[%s515 + $0xe0] sm:$0xff] %vm145, %v1780
  %1813 = vst.msk [vmem:[%s515 + $0xe8] sm:$0x7f] %vm672, %v1781
  %1814 = vst.msk [vmem:[%s515 + $0xf0] sm:$0xff] %vm145, %v1782
  %1815 = vst.msk [vmem:[%s515 + $0xf8] sm:$0x7f] %vm672, %v1783
  %v1816 = vld [vmem:[%s700] sm:$0xff]
  %v1817 = vld [vmem:[%s700 + $0x8] sm:$0xff]
  %v1818 = vld [vmem:[%s700 + $0x10] sm:$0xff]
  %v1819 = vld [vmem:[%s700 + $0x18] sm:$0xff]
  %v1820 = vld [vmem:[%s700 + $0x20] sm:$0xff]
  %v1821 = vld [vmem:[%s700 + $0x28] sm:$0xff]
  %v1822 = vld [vmem:[%s700 + $0x30] sm:$0xff]
  %v1823 = vld [vmem:[%s700 + $0x38] sm:$0xff]
  %v1824 = vld [vmem:[%s700 + $0x40] sm:$0xff]
  %v1825 = vld [vmem:[%s700 + $0x48] sm:$0xff]
  %v1826 = vld [vmem:[%s700 + $0x50] sm:$0xff]
  %v1827 = vld [vmem:[%s700 + $0x58] sm:$0xff]
  %v1828 = vld [vmem:[%s700 + $0x60] sm:$0xff]
  %v1829 = vld [vmem:[%s700 + $0x68] sm:$0xff]
  %v1830 = vld [vmem:[%s700 + $0x70] sm:$0xff]
  %v1831 = vld [vmem:[%s700 + $0x78] sm:$0xff]
  %v1832 = vld [vmem:[%s700 + $0x80] sm:$0xff]
  %v1833 = vld [vmem:[%s700 + $0x88] sm:$0xff]
  %v1834 = vld [vmem:[%s700 + $0x90] sm:$0xff]
  %v1835 = vld [vmem:[%s700 + $0x98] sm:$0xff]
  %v1836 = vld [vmem:[%s700 + $0xa0] sm:$0xff]
  %v1837 = vld [vmem:[%s700 + $0xa8] sm:$0xff]
  %v1838 = vld [vmem:[%s700 + $0xb0] sm:$0xff]
  %v1839 = vld [vmem:[%s700 + $0xb8] sm:$0xff]
  %v1840 = vld [vmem:[%s700 + $0xc0] sm:$0xff]
  %v1841 = vld [vmem:[%s700 + $0xc8] sm:$0xff]
  %v1842 = vld [vmem:[%s700 + $0xd0] sm:$0xff]
  %v1843 = vld [vmem:[%s700 + $0xd8] sm:$0xff]
  %v1844 = vld [vmem:[%s700 + $0xe0] sm:$0xff]
  %v1845 = vld [vmem:[%s700 + $0xe8] sm:$0xff]
  %v1846 = vld [vmem:[%s700 + $0xf0] sm:$0xff]
  %v1847 = vld [vmem:[%s700 + $0xf8] sm:$0xff]
  %1848 = vrot.lane.b32.xlu0 %v229, 16
  %v1849 = vpop.permute.xlu0 %1848
  %1850 = vrot.lane.b32.xlu0 %v233, 16
  %v1851 = vpop.permute.xlu0 %1850
  %1852 = vrot.lane.b32.xlu0 %v239, 16
  %v1853 = vpop.permute.xlu0 %1852
  %1854 = vrot.lane.b32.xlu0 %v243, 16
  %v1855 = vpop.permute.xlu0 %1854
  %1856 = vrot.lane.b32.xlu0 %v249, 16
  %v1857 = vpop.permute.xlu0 %1856
  %1858 = vrot.lane.b32.xlu0 %v253, 16
  %v1859 = vpop.permute.xlu0 %1858
  %1860 = vrot.lane.b32.xlu0 %v259, 16
  %v1861 = vpop.permute.xlu0 %1860
  %1862 = vrot.lane.b32.xlu0 %v263, 16
  %v1863 = vpop.permute.xlu0 %1862
  %1864 = vrot.lane.b32.xlu0 %v269, 16
  %v1865 = vpop.permute.xlu0 %1864
  %1866 = vrot.lane.b32.xlu0 %v273, 16
  %v1867 = vpop.permute.xlu0 %1866
  %1868 = vrot.lane.b32.xlu0 %v279, 16
  %v1869 = vpop.permute.xlu0 %1868
  %1870 = vrot.lane.b32.xlu0 %v283, 16
  %v1871 = vpop.permute.xlu0 %1870
  %1872 = vrot.lane.b32.xlu0 %v289, 16
  %v1873 = vpop.permute.xlu0 %1872
  %1874 = vrot.lane.b32.xlu0 %v293, 16
  %v1875 = vpop.permute.xlu0 %1874
  %1876 = vrot.lane.b32.xlu0 %v299, 16
  %v1877 = vpop.permute.xlu0 %1876
  %1878 = vrot.lane.b32.xlu0 %v303, 16
  %v1879 = vpop.permute.xlu0 %1878
  %1880 = vrot.lane.b32.xlu0 %v309, 16
  %v1881 = vpop.permute.xlu0 %1880
  %1882 = vrot.lane.b32.xlu0 %v313, 16
  %v1883 = vpop.permute.xlu0 %1882
  %1884 = vrot.lane.b32.xlu0 %v319, 16
  %v1885 = vpop.permute.xlu0 %1884
  %1886 = vrot.lane.b32.xlu0 %v323, 16
  %v1887 = vpop.permute.xlu0 %1886
  %1888 = vrot.lane.b32.xlu0 %v329, 16
  %v1889 = vpop.permute.xlu0 %1888
  %1890 = vrot.lane.b32.xlu0 %v333, 16
  %v1891 = vpop.permute.xlu0 %1890
  %1892 = vrot.lane.b32.xlu0 %v339, 16
  %v1893 = vpop.permute.xlu0 %1892
  %1894 = vrot.lane.b32.xlu0 %v343, 16
  %v1895 = vpop.permute.xlu0 %1894
  %1896 = vrot.lane.b32.xlu0 %v349, 16
  %v1897 = vpop.permute.xlu0 %1896
  %1898 = vrot.lane.b32.xlu0 %v353, 16
  %v1899 = vpop.permute.xlu0 %1898
  %1900 = vrot.lane.b32.xlu0 %v359, 16
  %v1901 = vpop.permute.xlu0 %1900
  %1902 = vrot.lane.b32.xlu0 %v363, 16
  %v1903 = vpop.permute.xlu0 %1902
  %1904 = vrot.lane.b32.xlu0 %v369, 16
  %v1905 = vpop.permute.xlu0 %1904
  %1906 = vrot.lane.b32.xlu0 %v373, 16
  %v1907 = vpop.permute.xlu0 %1906
  %1908 = vrot.lane.b32.xlu0 %v379, 16
  %v1909 = vpop.permute.xlu0 %1908
  %1910 = vrot.lane.b32.xlu0 %v383, 16
  %v1911 = vpop.permute.xlu0 %1910
  %v1944 = vadd.f32 %v1816, %v1849
  %v1945 = vadd.f32 %v1817, %v1851
  %v1946 = vadd.f32 %v1818, %v1853
  %v1947 = vadd.f32 %v1819, %v1855
  %v1948 = vadd.f32 %v1820, %v1857
  %v1949 = vadd.f32 %v1821, %v1859
  %v1950 = vadd.f32 %v1822, %v1861
  %v1951 = vadd.f32 %v1823, %v1863
  %v1952 = vadd.f32 %v1824, %v1865
  %v1953 = vadd.f32 %v1825, %v1867
  %v1954 = vadd.f32 %v1826, %v1869
  %v1955 = vadd.f32 %v1827, %v1871
  %v1956 = vadd.f32 %v1828, %v1873
  %v1957 = vadd.f32 %v1829, %v1875
  %v1958 = vadd.f32 %v1830, %v1877
  %v1959 = vadd.f32 %v1831, %v1879
  %v1960 = vadd.f32 %v1832, %v1881
  %v1961 = vadd.f32 %v1833, %v1883
  %v1962 = vadd.f32 %v1834, %v1885
  %v1963 = vadd.f32 %v1835, %v1887
  %v1964 = vadd.f32 %v1836, %v1889
  %v1965 = vadd.f32 %v1837, %v1891
  %v1966 = vadd.f32 %v1838, %v1893
  %v1967 = vadd.f32 %v1839, %v1895
  %v1968 = vadd.f32 %v1840, %v1897
  %v1969 = vadd.f32 %v1841, %v1899
  %v1970 = vadd.f32 %v1842, %v1901
  %v1971 = vadd.f32 %v1843, %v1903
  %v1972 = vadd.f32 %v1844, %v1905
  %v1973 = vadd.f32 %v1845, %v1907
  %v1974 = vadd.f32 %v1846, %v1909
  %v1975 = vadd.f32 %v1847, %v1911
  %1976 = vst.msk [vmem:[%s700] sm:$0xff] %vm145, %v1944
  %1977 = vst.msk [vmem:[%s700 + $0x8] sm:$0xff] %vm145, %v1945
  %1978 = vst.msk [vmem:[%s700 + $0x10] sm:$0xff] %vm145, %v1946
  %1979 = vst.msk [vmem:[%s700 + $0x18] sm:$0xff] %vm145, %v1947
  %1980 = vst.msk [vmem:[%s700 + $0x20] sm:$0xff] %vm145, %v1948
  %1981 = vst.msk [vmem:[%s700 + $0x28] sm:$0xff] %vm145, %v1949
  %1982 = vst.msk [vmem:[%s700 + $0x30] sm:$0xff] %vm145, %v1950
  %1983 = vst.msk [vmem:[%s700 + $0x38] sm:$0xff] %vm145, %v1951
  %1984 = vst.msk [vmem:[%s700 + $0x40] sm:$0xff] %vm145, %v1952
  %1985 = vst.msk [vmem:[%s700 + $0x48] sm:$0xff] %vm145, %v1953
  %1986 = vst.msk [vmem:[%s700 + $0x50] sm:$0xff] %vm145, %v1954
  %1987 = vst.msk [vmem:[%s700 + $0x58] sm:$0xff] %vm145, %v1955
  %1988 = vst.msk [vmem:[%s700 + $0x60] sm:$0xff] %vm145, %v1956
  %1989 = vst.msk [vmem:[%s700 + $0x68] sm:$0xff] %vm145, %v1957
  %1990 = vst.msk [vmem:[%s700 + $0x70] sm:$0xff] %vm145, %v1958
  %1991 = vst.msk [vmem:[%s700 + $0x78] sm:$0xff] %vm145, %v1959
  %1992 = vst.msk [vmem:[%s700 + $0x80] sm:$0xff] %vm145, %v1960
  %1993 = vst.msk [vmem:[%s700 + $0x88] sm:$0xff] %vm145, %v1961
  %1994 = vst.msk [vmem:[%s700 + $0x90] sm:$0xff] %vm145, %v1962
  %1995 = vst.msk [vmem:[%s700 + $0x98] sm:$0xff] %vm145, %v1963
  %1996 = vst.msk [vmem:[%s700 + $0xa0] sm:$0xff] %vm145, %v1964
  %1997 = vst.msk [vmem:[%s700 + $0xa8] sm:$0xff] %vm145, %v1965
  %1998 = vst.msk [vmem:[%s700 + $0xb0] sm:$0xff] %vm145, %v1966
  %1999 = vst.msk [vmem:[%s700 + $0xb8] sm:$0xff] %vm145, %v1967
  %2000 = vst.msk [vmem:[%s700 + $0xc0] sm:$0xff] %vm145, %v1968
  %2001 = vst.msk [vmem:[%s700 + $0xc8] sm:$0xff] %vm145, %v1969
  %2002 = vst.msk [vmem:[%s700 + $0xd0] sm:$0xff] %vm145, %v1970
  %2003 = vst.msk [vmem:[%s700 + $0xd8] sm:$0xff] %vm145, %v1971
  %2004 = vst.msk [vmem:[%s700 + $0xe0] sm:$0xff] %vm145, %v1972
  %2005 = vst.msk [vmem:[%s700 + $0xe8] sm:$0xff] %vm145, %v1973
  %2006 = vst.msk [vmem:[%s700 + $0xf0] sm:$0xff] %vm145, %v1974
  %2007 = vst.msk [vmem:[%s700 + $0xf8] sm:$0xff] %vm145, %v1975
  %v2008 = vld [vmem:[%s515] sm:$0xff]
  %v2009 = vld [vmem:[%s515 + $0x8] sm:$0xff]
  %v2010 = vld [vmem:[%s515 + $0x10] sm:$0xff]
  %v2011 = vld [vmem:[%s515 + $0x18] sm:$0xff]
  %v2012 = vld [vmem:[%s515 + $0x20] sm:$0xff]
  %v2013 = vld [vmem:[%s515 + $0x28] sm:$0xff]
  %v2014 = vld [vmem:[%s515 + $0x30] sm:$0xff]
  %v2015 = vld [vmem:[%s515 + $0x38] sm:$0xff]
  %v2016 = vld [vmem:[%s515 + $0x40] sm:$0xff]
  %v2017 = vld [vmem:[%s515 + $0x48] sm:$0xff]
  %v2018 = vld [vmem:[%s515 + $0x50] sm:$0xff]
  %v2019 = vld [vmem:[%s515 + $0x58] sm:$0xff]
  %v2020 = vld [vmem:[%s515 + $0x60] sm:$0xff]
  %v2021 = vld [vmem:[%s515 + $0x68] sm:$0xff]
  %v2022 = vld [vmem:[%s515 + $0x70] sm:$0xff]
  %v2023 = vld [vmem:[%s515 + $0x78] sm:$0xff]
  %v2024 = vld [vmem:[%s515 + $0x80] sm:$0xff]
  %v2025 = vld [vmem:[%s515 + $0x88] sm:$0xff]
  %v2026 = vld [vmem:[%s515 + $0x90] sm:$0xff]
  %v2027 = vld [vmem:[%s515 + $0x98] sm:$0xff]
  %v2028 = vld [vmem:[%s515 + $0xa0] sm:$0xff]
  %v2029 = vld [vmem:[%s515 + $0xa8] sm:$0xff]
  %v2030 = vld [vmem:[%s515 + $0xb0] sm:$0xff]
  %v2031 = vld [vmem:[%s515 + $0xb8] sm:$0xff]
  %v2032 = vld [vmem:[%s515 + $0xc0] sm:$0xff]
  %v2033 = vld [vmem:[%s515 + $0xc8] sm:$0xff]
  %v2034 = vld [vmem:[%s515 + $0xd0] sm:$0xff]
  %v2035 = vld [vmem:[%s515 + $0xd8] sm:$0xff]
  %v2036 = vld [vmem:[%s515 + $0xe0] sm:$0xff]
  %v2037 = vld [vmem:[%s515 + $0xe8] sm:$0xff]
  %v2038 = vld [vmem:[%s515 + $0xf0] sm:$0xff]
  %v2039 = vld [vmem:[%s515 + $0xf8] sm:$0xff]
  %v2040 = vadd.f32 %v2008, %v231
  %v2041 = vadd.f32 %v2009, %v235
  %v2042 = vadd.f32 %v2010, %v241
  %v2043 = vadd.f32 %v2011, %v245
  %v2044 = vadd.f32 %v2012, %v251
  %v2045 = vadd.f32 %v2013, %v255
  %v2046 = vadd.f32 %v2014, %v261
  %v2047 = vadd.f32 %v2015, %v265
  %v2048 = vadd.f32 %v2016, %v271
  %v2049 = vadd.f32 %v2017, %v275
  %v2050 = vadd.f32 %v2018, %v281
  %v2051 = vadd.f32 %v2019, %v285
  %v2052 = vadd.f32 %v2020, %v291
  %v2053 = vadd.f32 %v2021, %v295
  %v2054 = vadd.f32 %v2022, %v301
  %v2055 = vadd.f32 %v2023, %v305
  %v2056 = vadd.f32 %v2024, %v311
  %v2057 = vadd.f32 %v2025, %v315
  %v2058 = vadd.f32 %v2026, %v321
  %v2059 = vadd.f32 %v2027, %v325
  %v2060 = vadd.f32 %v2028, %v331
  %v2061 = vadd.f32 %v2029, %v335
  %v2062 = vadd.f32 %v2030, %v341
  %v2063 = vadd.f32 %v2031, %v345
  %v2064 = vadd.f32 %v2032, %v351
  %v2065 = vadd.f32 %v2033, %v355
  %v2066 = vadd.f32 %v2034, %v361
  %v2067 = vadd.f32 %v2035, %v365
  %v2068 = vadd.f32 %v2036, %v371
  %v2069 = vadd.f32 %v2037, %v375
  %v2070 = vadd.f32 %v2038, %v381
  %v2071 = vadd.f32 %v2039, %v385
  %2072 = vst.msk [vmem:[%s515] sm:$0xff] %vm145, %v2040
  %2073 = vst.msk [vmem:[%s515 + $0x8] sm:$0xff] %vm145, %v2041
  %2074 = vst.msk [vmem:[%s515 + $0x10] sm:$0xff] %vm145, %v2042
  %2075 = vst.msk [vmem:[%s515 + $0x18] sm:$0xff] %vm145, %v2043
  %2076 = vst.msk [vmem:[%s515 + $0x20] sm:$0xff] %vm145, %v2044
  %2077 = vst.msk [vmem:[%s515 + $0x28] sm:$0xff] %vm145, %v2045
  %2078 = vst.msk [vmem:[%s515 + $0x30] sm:$0xff] %vm145, %v2046
  %2079 = vst.msk [vmem:[%s515 + $0x38] sm:$0xff] %vm145, %v2047
  %2080 = vst.msk [vmem:[%s515 + $0x40] sm:$0xff] %vm145, %v2048
  %2081 = vst.msk [vmem:[%s515 + $0x48] sm:$0xff] %vm145, %v2049
  %2082 = vst.msk [vmem:[%s515 + $0x50] sm:$0xff] %vm145, %v2050
  %2083 = vst.msk [vmem:[%s515 + $0x58] sm:$0xff] %vm145, %v2051
  %2084 = vst.msk [vmem:[%s515 + $0x60] sm:$0xff] %vm145, %v2052
  %2085 = vst.msk [vmem:[%s515 + $0x68] sm:$0xff] %vm145, %v2053
  %2086 = vst.msk [vmem:[%s515 + $0x70] sm:$0xff] %vm145, %v2054
  %2087 = vst.msk [vmem:[%s515 + $0x78] sm:$0xff] %vm145, %v2055
  %2088 = vst.msk [vmem:[%s515 + $0x80] sm:$0xff] %vm145, %v2056
  %2089 = vst.msk [vmem:[%s515 + $0x88] sm:$0xff] %vm145, %v2057
  %2090 = vst.msk [vmem:[%s515 + $0x90] sm:$0xff] %vm145, %v2058
  %2091 = vst.msk [vmem:[%s515 + $0x98] sm:$0xff] %vm145, %v2059
  %2092 = vst.msk [vmem:[%s515 + $0xa0] sm:$0xff] %vm145, %v2060
  %2093 = vst.msk [vmem:[%s515 + $0xa8] sm:$0xff] %vm145, %v2061
  %2094 = vst.msk [vmem:[%s515 + $0xb0] sm:$0xff] %vm145, %v2062
  %2095 = vst.msk [vmem:[%s515 + $0xb8] sm:$0xff] %vm145, %v2063
  %2096 = vst.msk [vmem:[%s515 + $0xc0] sm:$0xff] %vm145, %v2064
  %2097 = vst.msk [vmem:[%s515 + $0xc8] sm:$0xff] %vm145, %v2065
  %2098 = vst.msk [vmem:[%s515 + $0xd0] sm:$0xff] %vm145, %v2066
  %2099 = vst.msk [vmem:[%s515 + $0xd8] sm:$0xff] %vm145, %v2067
  %2100 = vst.msk [vmem:[%s515 + $0xe0] sm:$0xff] %vm145, %v2068
  %2101 = vst.msk [vmem:[%s515 + $0xe8] sm:$0xff] %vm145, %v2069
  %2102 = vst.msk [vmem:[%s515 + $0xf0] sm:$0xff] %vm145, %v2070
  %2103 = vst.msk [vmem:[%s515 + $0xf8] sm:$0xff] %vm145, %v2071
  %v2104 = vld [vmem:[#allocation2] sm:$0xff]
  %v2105 = vld [vmem:[#allocation2 + $0x8] sm:$0xff]
  %v2106 = vld [vmem:[#allocation2 + $0x10] sm:$0xff]
  %v2107 = vld [vmem:[#allocation2 + $0x18] sm:$0xff]
  %v2108 = vld [vmem:[#allocation2 + $0x20] sm:$0xff]
  %v2109 = vld [vmem:[#allocation2 + $0x28] sm:$0xff]
  %v2110 = vld [vmem:[#allocation2 + $0x30] sm:$0xff]
  %v2111 = vld [vmem:[#allocation2 + $0x38] sm:$0xff]
  %v2112 = vld [vmem:[#allocation2 + $0x40] sm:$0xff]
  %v2113 = vld [vmem:[#allocation2 + $0x48] sm:$0xff]
  %v2114 = vld [vmem:[#allocation2 + $0x50] sm:$0xff]
  %v2115 = vld [vmem:[#allocation2 + $0x58] sm:$0xff]
  %v2116 = vld [vmem:[#allocation2 + $0x60] sm:$0xff]
  %v2117 = vld [vmem:[#allocation2 + $0x68] sm:$0xff]
  %v2118 = vld [vmem:[#allocation2 + $0x70] sm:$0xff]
  %v2119 = vld [vmem:[#allocation2 + $0x78] sm:$0xff]
  %v2120 = vld [vmem:[#allocation2 + $0x80] sm:$0xff]
  %v2121 = vld [vmem:[#allocation2 + $0x88] sm:$0xff]
  %v2122 = vld [vmem:[#allocation2 + $0x90] sm:$0xff]
  %v2123 = vld [vmem:[#allocation2 + $0x98] sm:$0xff]
  %v2124 = vld [vmem:[#allocation2 + $0xa0] sm:$0xff]
  %v2125 = vld [vmem:[#allocation2 + $0xa8] sm:$0xff]
  %v2126 = vld [vmem:[#allocation2 + $0xb0] sm:$0xff]
  %v2127 = vld [vmem:[#allocation2 + $0xb8] sm:$0xff]
  %v2128 = vld [vmem:[#allocation2 + $0xc0] sm:$0xff]
  %v2129 = vld [vmem:[#allocation2 + $0xc8] sm:$0xff]
  %v2130 = vld [vmem:[#allocation2 + $0xd0] sm:$0xff]
  %v2131 = vld [vmem:[#allocation2 + $0xd8] sm:$0xff]
  %v2132 = vld [vmem:[#allocation2 + $0xe0] sm:$0xff]
  %v2133 = vld [vmem:[#allocation2 + $0xe8] sm:$0xff]
  %v2134 = vld [vmem:[#allocation2 + $0xf0] sm:$0xff]
  %v2135 = vld [vmem:[#allocation2 + $0xf8] sm:$0xff]
  %v2136 = vld [vmem:[#allocation2 + $0x100] sm:$0xff]
  %v2137 = vld [vmem:[#allocation2 + $0x108] sm:$0xff]
  %v2138 = vld [vmem:[#allocation2 + $0x110] sm:$0xff]
  %v2139 = vld [vmem:[#allocation2 + $0x118] sm:$0xff]
  %v2140 = vld [vmem:[#allocation2 + $0x120] sm:$0xff]
  %v2141 = vld [vmem:[#allocation2 + $0x128] sm:$0xff]
  %v2142 = vld [vmem:[#allocation2 + $0x130] sm:$0xff]
  %v2143 = vld [vmem:[#allocation2 + $0x138] sm:$0xff]
  %v2144 = vld [vmem:[#allocation2 + $0x140] sm:$0xff]
  %v2145 = vld [vmem:[#allocation2 + $0x148] sm:$0xff]
  %v2146 = vld [vmem:[#allocation2 + $0x150] sm:$0xff]
  %v2147 = vld [vmem:[#allocation2 + $0x158] sm:$0xff]
  %v2148 = vld [vmem:[#allocation2 + $0x160] sm:$0xff]
  %v2149 = vld [vmem:[#allocation2 + $0x168] sm:$0xff]
  %v2150 = vld [vmem:[#allocation2 + $0x170] sm:$0xff]
  %v2151 = vld [vmem:[#allocation2 + $0x178] sm:$0xff]
  %v2152 = vld [vmem:[#allocation2 + $0x180] sm:$0xff]
  %v2153 = vld [vmem:[#allocation2 + $0x188] sm:$0xff]
  %v2154 = vld [vmem:[#allocation2 + $0x190] sm:$0xff]
  %v2155 = vld [vmem:[#allocation2 + $0x198] sm:$0xff]
  %v2156 = vld [vmem:[#allocation2 + $0x1a0] sm:$0xff]
  %v2157 = vld [vmem:[#allocation2 + $0x1a8] sm:$0xff]
  %v2158 = vld [vmem:[#allocation2 + $0x1b0] sm:$0xff]
  %v2159 = vld [vmem:[#allocation2 + $0x1b8] sm:$0xff]
  %v2160 = vld [vmem:[#allocation2 + $0x1c0] sm:$0xff]
  %v2161 = vld [vmem:[#allocation2 + $0x1c8] sm:$0xff]
  %v2162 = vld [vmem:[#allocation2 + $0x1d0] sm:$0xff]
  %v2163 = vld [vmem:[#allocation2 + $0x1d8] sm:$0xff]
  %v2164 = vld [vmem:[#allocation2 + $0x1e0] sm:$0xff]
  %v2165 = vld [vmem:[#allocation2 + $0x1e8] sm:$0xff]
  %v2166 = vld [vmem:[#allocation2 + $0x1f0] sm:$0xff]
  %v2167 = vld [vmem:[#allocation2 + $0x1f8] sm:$0xff]
  %v2168 = vld [vmem:[#allocation2 + $0x200] sm:$0xff]
  %v2169 = vld [vmem:[#allocation2 + $0x208] sm:$0xff]
  %v2170 = vld [vmem:[#allocation2 + $0x210] sm:$0xff]
  %v2171 = vld [vmem:[#allocation2 + $0x218] sm:$0xff]
  %v2172 = vld [vmem:[#allocation2 + $0x220] sm:$0xff]
  %v2173 = vld [vmem:[#allocation2 + $0x228] sm:$0xff]
  %v2174 = vld [vmem:[#allocation2 + $0x230] sm:$0xff]
  %v2175 = vld [vmem:[#allocation2 + $0x238] sm:$0xff]
  %v2176 = vld [vmem:[#allocation2 + $0x240] sm:$0xff]
  %v2177 = vld [vmem:[#allocation2 + $0x248] sm:$0xff]
  %v2178 = vld [vmem:[#allocation2 + $0x250] sm:$0xff]
  %v2179 = vld [vmem:[#allocation2 + $0x258] sm:$0xff]
  %v2180 = vld [vmem:[#allocation2 + $0x260] sm:$0xff]
  %v2181 = vld [vmem:[#allocation2 + $0x268] sm:$0xff]
  %v2182 = vld [vmem:[#allocation2 + $0x270] sm:$0xff]
  %v2183 = vld [vmem:[#allocation2 + $0x278] sm:$0xff]
  %v2184 = vld [vmem:[#allocation2 + $0x280] sm:$0xff]
  %v2185 = vld [vmem:[#allocation2 + $0x288] sm:$0xff]
  %v2186 = vld [vmem:[#allocation2 + $0x290] sm:$0xff]
  %v2187 = vld [vmem:[#allocation2 + $0x298] sm:$0xff]
  %v2188 = vld [vmem:[#allocation2 + $0x2a0] sm:$0xff]
  %v2189 = vld [vmem:[#allocation2 + $0x2a8] sm:$0xff]
  %v2190 = vld [vmem:[#allocation2 + $0x2b0] sm:$0xff]
  %v2191 = vld [vmem:[#allocation2 + $0x2b8] sm:$0xff]
  %v2192 = vld [vmem:[#allocation2 + $0x2c0] sm:$0xff]
  %v2193 = vld [vmem:[#allocation2 + $0x2c8] sm:$0xff]
  %v2194 = vld [vmem:[#allocation2 + $0x2d0] sm:$0xff]
  %v2195 = vld [vmem:[#allocation2 + $0x2d8] sm:$0xff]
  %v2196 = vld [vmem:[#allocation2 + $0x2e0] sm:$0xff]
  %v2197 = vld [vmem:[#allocation2 + $0x2e8] sm:$0xff]
  %v2198 = vld [vmem:[#allocation2 + $0x2f0] sm:$0xff]
  %v2199 = vld [vmem:[#allocation2 + $0x2f8] sm:$0xff]
  %v2200 = vld [vmem:[#allocation2 + $0x300] sm:$0xff]
  %v2201 = vld [vmem:[#allocation2 + $0x308] sm:$0xff]
  %v2202 = vld [vmem:[#allocation2 + $0x310] sm:$0xff]
  %v2203 = vld [vmem:[#allocation2 + $0x318] sm:$0xff]
  %v2204 = vld [vmem:[#allocation2 + $0x320] sm:$0xff]
  %v2205 = vld [vmem:[#allocation2 + $0x328] sm:$0xff]
  %v2206 = vld [vmem:[#allocation2 + $0x330] sm:$0xff]
  %v2207 = vld [vmem:[#allocation2 + $0x338] sm:$0xff]
  %v2208 = vld [vmem:[#allocation2 + $0x340] sm:$0xff]
  %v2209 = vld [vmem:[#allocation2 + $0x348] sm:$0xff]
  %v2210 = vld [vmem:[#allocation2 + $0x350] sm:$0xff]
  %v2211 = vld [vmem:[#allocation2 + $0x358] sm:$0xff]
  %v2212 = vld [vmem:[#allocation2 + $0x360] sm:$0xff]
  %v2213 = vld [vmem:[#allocation2 + $0x368] sm:$0xff]
  %v2214 = vld [vmem:[#allocation2 + $0x370] sm:$0xff]
  %v2215 = vld [vmem:[#allocation2 + $0x378] sm:$0xff]
  %v2216 = vld [vmem:[#allocation2 + $0x380] sm:$0xff]
  %v2217 = vld [vmem:[#allocation2 + $0x388] sm:$0xff]
  %v2218 = vld [vmem:[#allocation2 + $0x390] sm:$0xff]
  %v2219 = vld [vmem:[#allocation2 + $0x398] sm:$0xff]
  %v2220 = vld [vmem:[#allocation2 + $0x3a0] sm:$0xff]
  %v2221 = vld [vmem:[#allocation2 + $0x3a8] sm:$0xff]
  %v2222 = vld [vmem:[#allocation2 + $0x3b0] sm:$0xff]
  %v2223 = vld [vmem:[#allocation2 + $0x3b8] sm:$0xff]
  %v2224 = vld [vmem:[#allocation2 + $0x3c0] sm:$0xff]
  %v2225 = vld [vmem:[#allocation2 + $0x3c8] sm:$0xff]
  %v2226 = vld [vmem:[#allocation2 + $0x3d0] sm:$0xff]
  %v2227 = vld [vmem:[#allocation2 + $0x3d8] sm:$0xff]
  %v2228 = vld [vmem:[#allocation2 + $0x3e0] sm:$0xff]
  %v2229 = vld [vmem:[#allocation2 + $0x3e8] sm:$0xff]
  %v2230 = vld [vmem:[#allocation2 + $0x3f0] sm:$0xff]
  %v2231 = vld [vmem:[#allocation2 + $0x3f8] sm:$0xff]
  %v2232 = vld [vmem:[%s2] sm:$0x1]
  %v2234 = vlaneseq
  %v2235 = vshrl.u32 %v2234, 7
  %v2236 = vsub.s32 0, %v2235
  %v2237 = vrot.slane %v2232, %v2236
  %v2239 = vadd.f32 %v2104, %v2237
  %v2240 = vadd.f32 %v2105, %v2237
  %v2241 = vadd.f32 %v2106, %v2237
  %v2242 = vadd.f32 %v2107, %v2237
  %v2243 = vadd.f32 %v2108, %v2237
  %v2244 = vadd.f32 %v2109, %v2237
  %v2245 = vadd.f32 %v2110, %v2237
  %v2246 = vadd.f32 %v2111, %v2237
  %v2247 = vadd.f32 %v2112, %v2237
  %v2248 = vadd.f32 %v2113, %v2237
  %v2249 = vadd.f32 %v2114, %v2237
  %v2250 = vadd.f32 %v2115, %v2237
  %v2251 = vadd.f32 %v2116, %v2237
  %v2252 = vadd.f32 %v2117, %v2237
  %v2253 = vadd.f32 %v2118, %v2237
  %v2254 = vadd.f32 %v2119, %v2237
  %v2255 = vadd.f32 %v2120, %v2237
  %v2256 = vadd.f32 %v2121, %v2237
  %v2257 = vadd.f32 %v2122, %v2237
  %v2258 = vadd.f32 %v2123, %v2237
  %v2259 = vadd.f32 %v2124, %v2237
  %v2260 = vadd.f32 %v2125, %v2237
  %v2261 = vadd.f32 %v2126, %v2237
  %v2262 = vadd.f32 %v2127, %v2237
  %v2263 = vadd.f32 %v2128, %v2237
  %v2264 = vadd.f32 %v2129, %v2237
  %v2265 = vadd.f32 %v2130, %v2237
  %v2266 = vadd.f32 %v2131, %v2237
  %v2267 = vadd.f32 %v2132, %v2237
  %v2268 = vadd.f32 %v2133, %v2237
  %v2269 = vadd.f32 %v2134, %v2237
  %v2270 = vadd.f32 %v2135, %v2237
  %v2271 = vadd.f32 %v2136, %v2237
  %v2272 = vadd.f32 %v2137, %v2237
  %v2273 = vadd.f32 %v2138, %v2237
  %v2274 = vadd.f32 %v2139, %v2237
  %v2275 = vadd.f32 %v2140, %v2237
  %v2276 = vadd.f32 %v2141, %v2237
  %v2277 = vadd.f32 %v2142, %v2237
  %v2278 = vadd.f32 %v2143, %v2237
  %v2279 = vadd.f32 %v2144, %v2237
  %v2280 = vadd.f32 %v2145, %v2237
  %v2281 = vadd.f32 %v2146, %v2237
  %v2282 = vadd.f32 %v2147, %v2237
  %v2283 = vadd.f32 %v2148, %v2237
  %v2284 = vadd.f32 %v2149, %v2237
  %v2285 = vadd.f32 %v2150, %v2237
  %v2286 = vadd.f32 %v2151, %v2237
  %v2287 = vadd.f32 %v2152, %v2237
  %v2288 = vadd.f32 %v2153, %v2237
  %v2289 = vadd.f32 %v2154, %v2237
  %v2290 = vadd.f32 %v2155, %v2237
  %v2291 = vadd.f32 %v2156, %v2237
  %v2292 = vadd.f32 %v2157, %v2237
  %v2293 = vadd.f32 %v2158, %v2237
  %v2294 = vadd.f32 %v2159, %v2237
  %v2295 = vadd.f32 %v2160, %v2237
  %v2296 = vadd.f32 %v2161, %v2237
  %v2297 = vadd.f32 %v2162, %v2237
  %v2298 = vadd.f32 %v2163, %v2237
  %v2299 = vadd.f32 %v2164, %v2237
  %v2300 = vadd.f32 %v2165, %v2237
  %v2301 = vadd.f32 %v2166, %v2237
  %v2302 = vadd.f32 %v2167, %v2237
  %v2303 = vadd.f32 %v2168, %v2237
  %v2304 = vadd.f32 %v2169, %v2237
  %v2305 = vadd.f32 %v2170, %v2237
  %v2306 = vadd.f32 %v2171, %v2237
  %v2307 = vadd.f32 %v2172, %v2237
  %v2308 = vadd.f32 %v2173, %v2237
  %v2309 = vadd.f32 %v2174, %v2237
  %v2310 = vadd.f32 %v2175, %v2237
  %v2311 = vadd.f32 %v2176, %v2237
  %v2312 = vadd.f32 %v2177, %v2237
  %v2313 = vadd.f32 %v2178, %v2237
  %v2314 = vadd.f32 %v2179, %v2237
  %v2315 = vadd.f32 %v2180, %v2237
  %v2316 = vadd.f32 %v2181, %v2237
  %v2317 = vadd.f32 %v2182, %v2237
  %v2318 = vadd.f32 %v2183, %v2237
  %v2319 = vadd.f32 %v2184, %v2237
  %v2320 = vadd.f32 %v2185, %v2237
  %v2321 = vadd.f32 %v2186, %v2237
  %v2322 = vadd.f32 %v2187, %v2237
  %v2323 = vadd.f32 %v2188, %v2237
  %v2324 = vadd.f32 %v2189, %v2237
  %v2325 = vadd.f32 %v2190, %v2237
  %v2326 = vadd.f32 %v2191, %v2237
  %v2327 = vadd.f32 %v2192, %v2237
  %v2328 = vadd.f32 %v2193, %v2237
  %v2329 = vadd.f32 %v2194, %v2237
  %v2330 = vadd.f32 %v2195, %v2237
  %v2331 = vadd.f32 %v2196, %v2237
  %v2332 = vadd.f32 %v2197, %v2237
  %v2333 = vadd.f32 %v2198, %v2237
  %v2334 = vadd.f32 %v2199, %v2237
  %v2335 = vadd.f32 %v2200, %v2237
  %v2336 = vadd.f32 %v2201, %v2237
  %v2337 = vadd.f32 %v2202, %v2237
  %v2338 = vadd.f32 %v2203, %v2237
  %v2339 = vadd.f32 %v2204, %v2237
  %v2340 = vadd.f32 %v2205, %v2237
  %v2341 = vadd.f32 %v2206, %v2237
  %v2342 = vadd.f32 %v2207, %v2237
  %v2343 = vadd.f32 %v2208, %v2237
  %v2344 = vadd.f32 %v2209, %v2237
  %v2345 = vadd.f32 %v2210, %v2237
  %v2346 = vadd.f32 %v2211, %v2237
  %v2347 = vadd.f32 %v2212, %v2237
  %v2348 = vadd.f32 %v2213, %v2237
  %v2349 = vadd.f32 %v2214, %v2237
  %v2350 = vadd.f32 %v2215, %v2237
  %v2351 = vadd.f32 %v2216, %v2237
  %v2352 = vadd.f32 %v2217, %v2237
  %v2353 = vadd.f32 %v2218, %v2237
  %v2354 = vadd.f32 %v2219, %v2237
  %v2355 = vadd.f32 %v2220, %v2237
  %v2356 = vadd.f32 %v2221, %v2237
  %v2357 = vadd.f32 %v2222, %v2237
  %v2358 = vadd.f32 %v2223, %v2237
  %v2359 = vadd.f32 %v2224, %v2237
  %v2360 = vadd.f32 %v2225, %v2237
  %v2361 = vadd.f32 %v2226, %v2237
  %v2362 = vadd.f32 %v2227, %v2237
  %v2363 = vadd.f32 %v2228, %v2237
  %v2364 = vadd.f32 %v2229, %v2237
  %v2365 = vadd.f32 %v2230, %v2237
  %v2366 = vadd.f32 %v2231, %v2237
  %v2367 = vmax.f32 %v2239, 0.0
  %v2368 = vmax.f32 %v2240, 0.0
  %v2369 = vmax.f32 %v2241, 0.0
  %v2370 = vmax.f32 %v2242, 0.0
  %v2371 = vmax.f32 %v2243, 0.0
  %v2372 = vmax.f32 %v2244, 0.0
  %v2373 = vmax.f32 %v2245, 0.0
  %v2374 = vmax.f32 %v2246, 0.0
  %v2375 = vmax.f32 %v2247, 0.0
  %v2376 = vmax.f32 %v2248, 0.0
  %v2377 = vmax.f32 %v2249, 0.0
  %v2378 = vmax.f32 %v2250, 0.0
  %v2379 = vmax.f32 %v2251, 0.0
  %v2380 = vmax.f32 %v2252, 0.0
  %v2381 = vmax.f32 %v2253, 0.0
  %v2382 = vmax.f32 %v2254, 0.0
  %v2383 = vmax.f32 %v2255, 0.0
  %v2384 = vmax.f32 %v2256, 0.0
  %v2385 = vmax.f32 %v2257, 0.0
  %v2386 = vmax.f32 %v2258, 0.0
  %v2387 = vmax.f32 %v2259, 0.0
  %v2388 = vmax.f32 %v2260, 0.0
  %v2389 = vmax.f32 %v2261, 0.0
  %v2390 = vmax.f32 %v2262, 0.0
  %v2391 = vmax.f32 %v2263, 0.0
  %v2392 = vmax.f32 %v2264, 0.0
  %v2393 = vmax.f32 %v2265, 0.0
  %v2394 = vmax.f32 %v2266, 0.0
  %v2395 = vmax.f32 %v2267, 0.0
  %v2396 = vmax.f32 %v2268, 0.0
  %v2397 = vmax.f32 %v2269, 0.0
  %v2398 = vmax.f32 %v2270, 0.0
  %v2399 = vmax.f32 %v2271, 0.0
  %v2400 = vmax.f32 %v2272, 0.0
  %v2401 = vmax.f32 %v2273, 0.0
  %v2402 = vmax.f32 %v2274, 0.0
  %v2403 = vmax.f32 %v2275, 0.0
  %v2404 = vmax.f32 %v2276, 0.0
  %v2405 = vmax.f32 %v2277, 0.0
  %v2406 = vmax.f32 %v2278, 0.0
  %v2407 = vmax.f32 %v2279, 0.0
  %v2408 = vmax.f32 %v2280, 0.0
  %v2409 = vmax.f32 %v2281, 0.0
  %v2410 = vmax.f32 %v2282, 0.0
  %v2411 = vmax.f32 %v2283, 0.0
  %v2412 = vmax.f32 %v2284, 0.0
  %v2413 = vmax.f32 %v2285, 0.0
  %v2414 = vmax.f32 %v2286, 0.0
  %v2415 = vmax.f32 %v2287, 0.0
  %v2416 = vmax.f32 %v2288, 0.0
  %v2417 = vmax.f32 %v2289, 0.0
  %v2418 = vmax.f32 %v2290, 0.0
  %v2419 = vmax.f32 %v2291, 0.0
  %v2420 = vmax.f32 %v2292, 0.0
  %v2421 = vmax.f32 %v2293, 0.0
  %v2422 = vmax.f32 %v2294, 0.0
  %v2423 = vmax.f32 %v2295, 0.0
  %v2424 = vmax.f32 %v2296, 0.0
  %v2425 = vmax.f32 %v2297, 0.0
  %v2426 = vmax.f32 %v2298, 0.0
  %v2427 = vmax.f32 %v2299, 0.0
  %v2428 = vmax.f32 %v2300, 0.0
  %v2429 = vmax.f32 %v2301, 0.0
  %v2430 = vmax.f32 %v2302, 0.0
  %v2431 = vmax.f32 %v2303, 0.0
  %v2432 = vmax.f32 %v2304, 0.0
  %v2433 = vmax.f32 %v2305, 0.0
  %v2434 = vmax.f32 %v2306, 0.0
  %v2435 = vmax.f32 %v2307, 0.0
  %v2436 = vmax.f32 %v2308, 0.0
  %v2437 = vmax.f32 %v2309, 0.0
  %v2438 = vmax.f32 %v2310, 0.0
  %v2439 = vmax.f32 %v2311, 0.0
  %v2440 = vmax.f32 %v2312, 0.0
  %v2441 = vmax.f32 %v2313, 0.0
  %v2442 = vmax.f32 %v2314, 0.0
  %v2443 = vmax.f32 %v2315, 0.0
  %v2444 = vmax.f32 %v2316, 0.0
  %v2445 = vmax.f32 %v2317, 0.0
  %v2446 = vmax.f32 %v2318, 0.0
  %v2447 = vmax.f32 %v2319, 0.0
  %v2448 = vmax.f32 %v2320, 0.0
  %v2449 = vmax.f32 %v2321, 0.0
  %v2450 = vmax.f32 %v2322, 0.0
  %v2451 = vmax.f32 %v2323, 0.0
  %v2452 = vmax.f32 %v2324, 0.0
  %v2453 = vmax.f32 %v2325, 0.0
  %v2454 = vmax.f32 %v2326, 0.0
  %v2455 = vmax.f32 %v2327, 0.0
  %v2456 = vmax.f32 %v2328, 0.0
  %v2457 = vmax.f32 %v2329, 0.0
  %v2458 = vmax.f32 %v2330, 0.0
  %v2459 = vmax.f32 %v2331, 0.0
  %v2460 = vmax.f32 %v2332, 0.0
  %v2461 = vmax.f32 %v2333, 0.0
  %v2462 = vmax.f32 %v2334, 0.0
  %v2463 = vmax.f32 %v2335, 0.0
  %v2464 = vmax.f32 %v2336, 0.0
  %v2465 = vmax.f32 %v2337, 0.0
  %v2466 = vmax.f32 %v2338, 0.0
  %v2467 = vmax.f32 %v2339, 0.0
  %v2468 = vmax.f32 %v2340, 0.0
  %v2469 = vmax.f32 %v2341, 0.0
  %v2470 = vmax.f32 %v2342, 0.0
  %v2471 = vmax.f32 %v2343, 0.0
  %v2472 = vmax.f32 %v2344, 0.0
  %v2473 = vmax.f32 %v2345, 0.0
  %v2474 = vmax.f32 %v2346, 0.0
  %v2475 = vmax.f32 %v2347, 0.0
  %v2476 = vmax.f32 %v2348, 0.0
  %v2477 = vmax.f32 %v2349, 0.0
  %v2478 = vmax.f32 %v2350, 0.0
  %v2479 = vmax.f32 %v2351, 0.0
  %v2480 = vmax.f32 %v2352, 0.0
  %v2481 = vmax.f32 %v2353, 0.0
  %v2482 = vmax.f32 %v2354, 0.0
  %v2483 = vmax.f32 %v2355, 0.0
  %v2484 = vmax.f32 %v2356, 0.0
  %v2485 = vmax.f32 %v2357, 0.0
  %v2486 = vmax.f32 %v2358, 0.0
  %v2487 = vmax.f32 %v2359, 0.0
  %v2488 = vmax.f32 %v2360, 0.0
  %v2489 = vmax.f32 %v2361, 0.0
  %v2490 = vmax.f32 %v2362, 0.0
  %v2491 = vmax.f32 %v2363, 0.0
  %v2492 = vmax.f32 %v2364, 0.0
  %v2493 = vmax.f32 %v2365, 0.0
  %v2494 = vmax.f32 %v2366, 0.0
  %v2495 = vsel %vm145, %v2367, 0.0
  %v2496 = vsel %vm145, %v2368, 0.0
  %v2497 = vadd.f32 %v2495, %v2496
  %v2498 = vsel %vm145, %v2369, 0.0
  %v2499 = vadd.f32 %v2497, %v2498
  %v2500 = vsel %vm145, %v2370, 0.0
  %v2501 = vadd.f32 %v2499, %v2500
  %v2502 = vsel %vm145, %v2371, 0.0
  %v2503 = vadd.f32 %v2501, %v2502
  %v2504 = vsel %vm145, %v2372, 0.0
  %v2505 = vadd.f32 %v2503, %v2504
  %v2506 = vsel %vm145, %v2373, 0.0
  %v2507 = vadd.f32 %v2505, %v2506
  %v2508 = vsel %vm145, %v2374, 0.0
  %v2509 = vadd.f32 %v2507, %v2508
  %v2510 = vsel %vm145, %v2375, 0.0
  %v2511 = vadd.f32 %v2509, %v2510
  %v2512 = vsel %vm145, %v2376, 0.0
  %v2513 = vadd.f32 %v2511, %v2512
  %v2514 = vsel %vm145, %v2377, 0.0
  %v2515 = vadd.f32 %v2513, %v2514
  %v2516 = vsel %vm145, %v2378, 0.0
  %v2517 = vadd.f32 %v2515, %v2516
  %v2518 = vsel %vm145, %v2379, 0.0
  %v2519 = vadd.f32 %v2517, %v2518
  %v2520 = vsel %vm145, %v2380, 0.0
  %v2521 = vadd.f32 %v2519, %v2520
  %v2522 = vsel %vm145, %v2381, 0.0
  %v2523 = vadd.f32 %v2521, %v2522
  %v2524 = vsel %vm145, %v2382, 0.0
  %v2525 = vadd.f32 %v2523, %v2524
  %v2526 = vsel %vm145, %v2383, 0.0
  %v2527 = vadd.f32 %v2525, %v2526
  %v2528 = vsel %vm145, %v2384, 0.0
  %v2529 = vadd.f32 %v2527, %v2528
  %v2530 = vsel %vm145, %v2385, 0.0
  %v2531 = vadd.f32 %v2529, %v2530
  %v2532 = vsel %vm145, %v2386, 0.0
  %v2533 = vadd.f32 %v2531, %v2532
  %v2534 = vsel %vm145, %v2387, 0.0
  %v2535 = vadd.f32 %v2533, %v2534
  %v2536 = vsel %vm145, %v2388, 0.0
  %v2537 = vadd.f32 %v2535, %v2536
  %v2538 = vsel %vm145, %v2389, 0.0
  %v2539 = vadd.f32 %v2537, %v2538
  %v2540 = vsel %vm145, %v2390, 0.0
  %v2541 = vadd.f32 %v2539, %v2540
  %v2542 = vsel %vm145, %v2391, 0.0
  %v2543 = vadd.f32 %v2541, %v2542
  %v2544 = vsel %vm145, %v2392, 0.0
  %v2545 = vadd.f32 %v2543, %v2544
  %v2546 = vsel %vm145, %v2393, 0.0
  %v2547 = vadd.f32 %v2545, %v2546
  %v2548 = vsel %vm145, %v2394, 0.0
  %v2549 = vadd.f32 %v2547, %v2548
  %v2550 = vsel %vm145, %v2395, 0.0
  %v2551 = vadd.f32 %v2549, %v2550
  %v2552 = vsel %vm145, %v2396, 0.0
  %v2553 = vadd.f32 %v2551, %v2552
  %v2554 = vsel %vm145, %v2397, 0.0
  %v2555 = vadd.f32 %v2553, %v2554
  %v2556 = vsel %vm145, %v2398, 0.0
  %v2557 = vadd.f32 %v2555, %v2556
  %v2558 = vsel %vm145, %v2399, 0.0
  %v2559 = vadd.f32 %v2557, %v2558
  %v2560 = vsel %vm145, %v2400, 0.0
  %v2561 = vadd.f32 %v2559, %v2560
  %v2562 = vsel %vm145, %v2401, 0.0
  %v2563 = vadd.f32 %v2561, %v2562
  %v2564 = vsel %vm145, %v2402, 0.0
  %v2565 = vadd.f32 %v2563, %v2564
  %v2566 = vsel %vm145, %v2403, 0.0
  %v2567 = vadd.f32 %v2565, %v2566
  %v2568 = vsel %vm145, %v2404, 0.0
  %v2569 = vadd.f32 %v2567, %v2568
  %v2570 = vsel %vm145, %v2405, 0.0
  %v2571 = vadd.f32 %v2569, %v2570
  %v2572 = vsel %vm145, %v2406, 0.0
  %v2573 = vadd.f32 %v2571, %v2572
  %v2574 = vsel %vm145, %v2407, 0.0
  %v2575 = vadd.f32 %v2573, %v2574
  %v2576 = vsel %vm145, %v2408, 0.0
  %v2577 = vadd.f32 %v2575, %v2576
  %v2578 = vsel %vm145, %v2409, 0.0
  %v2579 = vadd.f32 %v2577, %v2578
  %v2580 = vsel %vm145, %v2410, 0.0
  %v2581 = vadd.f32 %v2579, %v2580
  %v2582 = vsel %vm145, %v2411, 0.0
  %v2583 = vadd.f32 %v2581, %v2582
  %v2584 = vsel %vm145, %v2412, 0.0
  %v2585 = vadd.f32 %v2583, %v2584
  %v2586 = vsel %vm145, %v2413, 0.0
  %v2587 = vadd.f32 %v2585, %v2586
  %v2588 = vsel %vm145, %v2414, 0.0
  %v2589 = vadd.f32 %v2587, %v2588
  %v2590 = vsel %vm145, %v2415, 0.0
  %v2591 = vadd.f32 %v2589, %v2590
  %v2592 = vsel %vm145, %v2416, 0.0
  %v2593 = vadd.f32 %v2591, %v2592
  %v2594 = vsel %vm145, %v2417, 0.0
  %v2595 = vadd.f32 %v2593, %v2594
  %v2596 = vsel %vm145, %v2418, 0.0
  %v2597 = vadd.f32 %v2595, %v2596
  %v2598 = vsel %vm145, %v2419, 0.0
  %v2599 = vadd.f32 %v2597, %v2598
  %v2600 = vsel %vm145, %v2420, 0.0
  %v2601 = vadd.f32 %v2599, %v2600
  %v2602 = vsel %vm145, %v2421, 0.0
  %v2603 = vadd.f32 %v2601, %v2602
  %v2604 = vsel %vm145, %v2422, 0.0
  %v2605 = vadd.f32 %v2603, %v2604
  %v2606 = vsel %vm145, %v2423, 0.0
  %v2607 = vadd.f32 %v2605, %v2606
  %v2608 = vsel %vm145, %v2424, 0.0
  %v2609 = vadd.f32 %v2607, %v2608
  %v2610 = vsel %vm145, %v2425, 0.0
  %v2611 = vadd.f32 %v2609, %v2610
  %v2612 = vsel %vm145, %v2426, 0.0
  %v2613 = vadd.f32 %v2611, %v2612
  %v2614 = vsel %vm145, %v2427, 0.0
  %v2615 = vadd.f32 %v2613, %v2614
  %v2616 = vsel %vm145, %v2428, 0.0
  %v2617 = vadd.f32 %v2615, %v2616
  %v2618 = vsel %vm145, %v2429, 0.0
  %v2619 = vadd.f32 %v2617, %v2618
  %v2620 = vsel %vm145, %v2430, 0.0
  %v2621 = vadd.f32 %v2619, %v2620
  %v2622 = vsel %vm145, %v2431, 0.0
  %v2623 = vadd.f32 %v2621, %v2622
  %v2624 = vsel %vm145, %v2432, 0.0
  %v2625 = vadd.f32 %v2623, %v2624
  %v2626 = vsel %vm145, %v2433, 0.0
  %v2627 = vadd.f32 %v2625, %v2626
  %v2628 = vsel %vm145, %v2434, 0.0
  %v2629 = vadd.f32 %v2627, %v2628
  %v2630 = vsel %vm145, %v2435, 0.0
  %v2631 = vadd.f32 %v2629, %v2630
  %v2632 = vsel %vm145, %v2436, 0.0
  %v2633 = vadd.f32 %v2631, %v2632
  %v2634 = vsel %vm145, %v2437, 0.0
  %v2635 = vadd.f32 %v2633, %v2634
  %v2636 = vsel %vm145, %v2438, 0.0
  %v2637 = vadd.f32 %v2635, %v2636
  %v2638 = vsel %vm145, %v2439, 0.0
  %v2639 = vadd.f32 %v2637, %v2638
  %v2640 = vsel %vm145, %v2440, 0.0
  %v2641 = vadd.f32 %v2639, %v2640
  %v2642 = vsel %vm145, %v2441, 0.0
  %v2643 = vadd.f32 %v2641, %v2642
  %v2644 = vsel %vm145, %v2442, 0.0
  %v2645 = vadd.f32 %v2643, %v2644
  %v2646 = vsel %vm145, %v2443, 0.0
  %v2647 = vadd.f32 %v2645, %v2646
  %v2648 = vsel %vm145, %v2444, 0.0
  %v2649 = vadd.f32 %v2647, %v2648
  %v2650 = vsel %vm145, %v2445, 0.0
  %v2651 = vadd.f32 %v2649, %v2650
  %v2652 = vsel %vm145, %v2446, 0.0
  %v2653 = vadd.f32 %v2651, %v2652
  %v2654 = vsel %vm145, %v2447, 0.0
  %v2655 = vadd.f32 %v2653, %v2654
  %v2656 = vsel %vm145, %v2448, 0.0
  %v2657 = vadd.f32 %v2655, %v2656
  %v2658 = vsel %vm145, %v2449, 0.0
  %v2659 = vadd.f32 %v2657, %v2658
  %v2660 = vsel %vm145, %v2450, 0.0
  %v2661 = vadd.f32 %v2659, %v2660
  %v2662 = vsel %vm145, %v2451, 0.0
  %v2663 = vadd.f32 %v2661, %v2662
  %v2664 = vsel %vm145, %v2452, 0.0
  %v2665 = vadd.f32 %v2663, %v2664
  %v2666 = vsel %vm145, %v2453, 0.0
  %v2667 = vadd.f32 %v2665, %v2666
  %v2668 = vsel %vm145, %v2454, 0.0
  %v2669 = vadd.f32 %v2667, %v2668
  %v2670 = vsel %vm145, %v2455, 0.0
  %v2671 = vadd.f32 %v2669, %v2670
  %v2672 = vsel %vm145, %v2456, 0.0
  %v2673 = vadd.f32 %v2671, %v2672
  %v2674 = vsel %vm145, %v2457, 0.0
  %v2675 = vadd.f32 %v2673, %v2674
  %v2676 = vsel %vm145, %v2458, 0.0
  %v2677 = vadd.f32 %v2675, %v2676
  %v2678 = vsel %vm145, %v2459, 0.0
  %v2679 = vadd.f32 %v2677, %v2678
  %v2680 = vsel %vm145, %v2460, 0.0
  %v2681 = vadd.f32 %v2679, %v2680
  %v2682 = vsel %vm145, %v2461, 0.0
  %v2683 = vadd.f32 %v2681, %v2682
  %v2684 = vsel %vm145, %v2462, 0.0
  %v2685 = vadd.f32 %v2683, %v2684
  %v2686 = vsel %vm145, %v2463, 0.0
  %v2687 = vadd.f32 %v2685, %v2686
  %v2688 = vsel %vm145, %v2464, 0.0
  %v2689 = vadd.f32 %v2687, %v2688
  %v2690 = vsel %vm145, %v2465, 0.0
  %v2691 = vadd.f32 %v2689, %v2690
  %v2692 = vsel %vm145, %v2466, 0.0
  %v2693 = vadd.f32 %v2691, %v2692
  %v2694 = vsel %vm145, %v2467, 0.0
  %v2695 = vadd.f32 %v2693, %v2694
  %v2696 = vsel %vm145, %v2468, 0.0
  %v2697 = vadd.f32 %v2695, %v2696
  %v2698 = vsel %vm145, %v2469, 0.0
  %v2699 = vadd.f32 %v2697, %v2698
  %v2700 = vsel %vm145, %v2470, 0.0
  %v2701 = vadd.f32 %v2699, %v2700
  %v2702 = vsel %vm145, %v2471, 0.0
  %v2703 = vadd.f32 %v2701, %v2702
  %v2704 = vsel %vm145, %v2472, 0.0
  %v2705 = vadd.f32 %v2703, %v2704
  %v2706 = vsel %vm145, %v2473, 0.0
  %v2707 = vadd.f32 %v2705, %v2706
  %v2708 = vsel %vm145, %v2474, 0.0
  %v2709 = vadd.f32 %v2707, %v2708
  %v2710 = vsel %vm145, %v2475, 0.0
  %v2711 = vadd.f32 %v2709, %v2710
  %v2712 = vsel %vm145, %v2476, 0.0
  %v2713 = vadd.f32 %v2711, %v2712
  %v2714 = vsel %vm145, %v2477, 0.0
  %v2715 = vadd.f32 %v2713, %v2714
  %v2716 = vsel %vm145, %v2478, 0.0
  %v2717 = vadd.f32 %v2715, %v2716
  %v2718 = vsel %vm145, %v2479, 0.0
  %v2719 = vadd.f32 %v2717, %v2718
  %v2720 = vsel %vm145, %v2480, 0.0
  %v2721 = vadd.f32 %v2719, %v2720
  %v2722 = vsel %vm145, %v2481, 0.0
  %v2723 = vadd.f32 %v2721, %v2722
  %v2724 = vsel %vm145, %v2482, 0.0
  %v2725 = vadd.f32 %v2723, %v2724
  %v2726 = vsel %vm145, %v2483, 0.0
  %v2727 = vadd.f32 %v2725, %v2726
  %v2728 = vsel %vm145, %v2484, 0.0
  %v2729 = vadd.f32 %v2727, %v2728
  %v2730 = vsel %vm145, %v2485, 0.0
  %v2731 = vadd.f32 %v2729, %v2730
  %v2732 = vsel %vm145, %v2486, 0.0
  %v2733 = vadd.f32 %v2731, %v2732
  %v2734 = vsel %vm145, %v2487, 0.0
  %v2735 = vadd.f32 %v2733, %v2734
  %v2736 = vsel %vm145, %v2488, 0.0
  %v2737 = vadd.f32 %v2735, %v2736
  %v2738 = vsel %vm145, %v2489, 0.0
  %v2739 = vadd.f32 %v2737, %v2738
  %v2740 = vsel %vm145, %v2490, 0.0
  %v2741 = vadd.f32 %v2739, %v2740
  %v2742 = vsel %vm145, %v2491, 0.0
  %v2743 = vadd.f32 %v2741, %v2742
  %v2744 = vsel %vm145, %v2492, 0.0
  %v2745 = vadd.f32 %v2743, %v2744
  %v2746 = vsel %vm145, %v2493, 0.0
  %v2747 = vadd.f32 %v2745, %v2746
  %v2748 = vsel %vm145, %v2494, 0.0
  %v2749 = vadd.f32 %v2747, %v2748
  %v2750 = vrot.slane %v2749, 4
  %v2751 = vadd.f32 %v2749, %v2750
  %v2752 = vrot.slane %v2751, 2
  %v2753 = vadd.f32 %v2751, %v2752
  %v2754 = vrot.slane %v2753, 1
  %v2755 = vadd.f32 %v2753, %v2754
  %v2756 = vmul.f32 %v2755, 0.0009765625
  %v2757 = vmul.f32 %v2367, %v2367
  %v2758 = vmul.f32 %v2368, %v2368
  %v2759 = vmul.f32 %v2369, %v2369
  %v2760 = vmul.f32 %v2370, %v2370
  %v2761 = vmul.f32 %v2371, %v2371
  %v2762 = vmul.f32 %v2372, %v2372
  %v2763 = vmul.f32 %v2373, %v2373
  %v2764 = vmul.f32 %v2374, %v2374
  %v2765 = vmul.f32 %v2375, %v2375
  %v2766 = vmul.f32 %v2376, %v2376
  %v2767 = vmul.f32 %v2377, %v2377
  %v2768 = vmul.f32 %v2378, %v2378
  %v2769 = vmul.f32 %v2379, %v2379
  %v2770 = vmul.f32 %v2380, %v2380
  %v2771 = vmul.f32 %v2381, %v2381
  %v2772 = vmul.f32 %v2382, %v2382
  %v2773 = vmul.f32 %v2383, %v2383
  %v2774 = vmul.f32 %v2384, %v2384
  %v2775 = vmul.f32 %v2385, %v2385
  %v2776 = vmul.f32 %v2386, %v2386
  %v2777 = vmul.f32 %v2387, %v2387
  %v2778 = vmul.f32 %v2388, %v2388
  %v2779 = vmul.f32 %v2389, %v2389
  %v2780 = vmul.f32 %v2390, %v2390
  %v2781 = vmul.f32 %v2391, %v2391
  %v2782 = vmul.f32 %v2392, %v2392
  %v2783 = vmul.f32 %v2393, %v2393
  %v2784 = vmul.f32 %v2394, %v2394
  %v2785 = vmul.f32 %v2395, %v2395
  %v2786 = vmul.f32 %v2396, %v2396
  %v2787 = vmul.f32 %v2397, %v2397
  %v2788 = vmul.f32 %v2398, %v2398
  %v2789 = vmul.f32 %v2399, %v2399
  %v2790 = vmul.f32 %v2400, %v2400
  %v2791 = vmul.f32 %v2401, %v2401
  %v2792 = vmul.f32 %v2402, %v2402
  %v2793 = vmul.f32 %v2403, %v2403
  %v2794 = vmul.f32 %v2404, %v2404
  %v2795 = vmul.f32 %v2405, %v2405
  %v2796 = vmul.f32 %v2406, %v2406
  %v2797 = vmul.f32 %v2407, %v2407
  %v2798 = vmul.f32 %v2408, %v2408
  %v2799 = vmul.f32 %v2409, %v2409
  %v2800 = vmul.f32 %v2410, %v2410
  %v2801 = vmul.f32 %v2411, %v2411
  %v2802 = vmul.f32 %v2412, %v2412
  %v2803 = vmul.f32 %v2413, %v2413
  %v2804 = vmul.f32 %v2414, %v2414
  %v2805 = vmul.f32 %v2415, %v2415
  %v2806 = vmul.f32 %v2416, %v2416
  %v2807 = vmul.f32 %v2417, %v2417
  %v2808 = vmul.f32 %v2418, %v2418
  %v2809 = vmul.f32 %v2419, %v2419
  %v2810 = vmul.f32 %v2420, %v2420
  %v2811 = vmul.f32 %v2421, %v2421
  %v2812 = vmul.f32 %v2422, %v2422
  %v2813 = vmul.f32 %v2423, %v2423
  %v2814 = vmul.f32 %v2424, %v2424
  %v2815 = vmul.f32 %v2425, %v2425
  %v2816 = vmul.f32 %v2426, %v2426
  %v2817 = vmul.f32 %v2427, %v2427
  %v2818 = vmul.f32 %v2428, %v2428
  %v2819 = vmul.f32 %v2429, %v2429
  %v2820 = vmul.f32 %v2430, %v2430
  %v2821 = vmul.f32 %v2431, %v2431
  %v2822 = vmul.f32 %v2432, %v2432
  %v2823 = vmul.f32 %v2433, %v2433
  %v2824 = vmul.f32 %v2434, %v2434
  %v2825 = vmul.f32 %v2435, %v2435
  %v2826 = vmul.f32 %v2436, %v2436
  %v2827 = vmul.f32 %v2437, %v2437
  %v2828 = vmul.f32 %v2438, %v2438
  %v2829 = vmul.f32 %v2439, %v2439
  %v2830 = vmul.f32 %v2440, %v2440
  %v2831 = vmul.f32 %v2441, %v2441
  %v2832 = vmul.f32 %v2442, %v2442
  %v2833 = vmul.f32 %v2443, %v2443
  %v2834 = vmul.f32 %v2444, %v2444
  %v2835 = vmul.f32 %v2445, %v2445
  %v2836 = vmul.f32 %v2446, %v2446
  %v2837 = vmul.f32 %v2447, %v2447
  %v2838 = vmul.f32 %v2448, %v2448
  %v2839 = vmul.f32 %v2449, %v2449
  %v2840 = vmul.f32 %v2450, %v2450
  %v2841 = vmul.f32 %v2451, %v2451
  %v2842 = vmul.f32 %v2452, %v2452
  %v2843 = vmul.f32 %v2453, %v2453
  %v2844 = vmul.f32 %v2454, %v2454
  %v2845 = vmul.f32 %v2455, %v2455
  %v2846 = vmul.f32 %v2456, %v2456
  %v2847 = vmul.f32 %v2457, %v2457
  %v2848 = vmul.f32 %v2458, %v2458
  %v2849 = vmul.f32 %v2459, %v2459
  %v2850 = vmul.f32 %v2460, %v2460
  %v2851 = vmul.f32 %v2461, %v2461
  %v2852 = vmul.f32 %v2462, %v2462
  %v2853 = vmul.f32 %v2463, %v2463
  %v2854 = vmul.f32 %v2464, %v2464
  %v2855 = vmul.f32 %v2465, %v2465
  %v2856 = vmul.f32 %v2466, %v2466
  %v2857 = vmul.f32 %v2467, %v2467
  %v2858 = vmul.f32 %v2468, %v2468
  %v2859 = vmul.f32 %v2469, %v2469
  %v2860 = vmul.f32 %v2470, %v2470
  %v2861 = vmul.f32 %v2471, %v2471
  %v2862 = vmul.f32 %v2472, %v2472
  %v2863 = vmul.f32 %v2473, %v2473
  %v2864 = vmul.f32 %v2474, %v2474
  %v2865 = vmul.f32 %v2475, %v2475
  %v2866 = vmul.f32 %v2476, %v2476
  %v2867 = vmul.f32 %v2477, %v2477
  %v2868 = vmul.f32 %v2478, %v2478
  %v2869 = vmul.f32 %v2479, %v2479
  %v2870 = vmul.f32 %v2480, %v2480
  %v2871 = vmul.f32 %v2481, %v2481
  %v2872 = vmul.f32 %v2482, %v2482
  %v2873 = vmul.f32 %v2483, %v2483
  %v2874 = vmul.f32 %v2484, %v2484
  %v2875 = vmul.f32 %v2485, %v2485
  %v2876 = vmul.f32 %v2486, %v2486
  %v2877 = vmul.f32 %v2487, %v2487
  %v2878 = vmul.f32 %v2488, %v2488
  %v2879 = vmul.f32 %v2489, %v2489
  %v2880 = vmul.f32 %v2490, %v2490
  %v2881 = vmul.f32 %v2491, %v2491
  %v2882 = vmul.f32 %v2492, %v2492
  %v2883 = vmul.f32 %v2493, %v2493
  %v2884 = vmul.f32 %v2494, %v2494
  %v2885 = vsel %vm145, %v2757, 0.0
  %v2886 = vsel %vm145, %v2758, 0.0
  %v2887 = vadd.f32 %v2885, %v2886
  %v2888 = vsel %vm145, %v2759, 0.0
  %v2889 = vadd.f32 %v2887, %v2888
  %v2890 = vsel %vm145, %v2760, 0.0
  %v2891 = vadd.f32 %v2889, %v2890
  %v2892 = vsel %vm145, %v2761, 0.0
  %v2893 = vadd.f32 %v2891, %v2892
  %v2894 = vsel %vm145, %v2762, 0.0
  %v2895 = vadd.f32 %v2893, %v2894
  %v2896 = vsel %vm145, %v2763, 0.0
  %v2897 = vadd.f32 %v2895, %v2896
  %v2898 = vsel %vm145, %v2764, 0.0
  %v2899 = vadd.f32 %v2897, %v2898
  %v2900 = vsel %vm145, %v2765, 0.0
  %v2901 = vadd.f32 %v2899, %v2900
  %v2902 = vsel %vm145, %v2766, 0.0
  %v2903 = vadd.f32 %v2901, %v2902
  %v2904 = vsel %vm145, %v2767, 0.0
  %v2905 = vadd.f32 %v2903, %v2904
  %v2906 = vsel %vm145, %v2768, 0.0
  %v2907 = vadd.f32 %v2905, %v2906
  %v2908 = vsel %vm145, %v2769, 0.0
  %v2909 = vadd.f32 %v2907, %v2908
  %v2910 = vsel %vm145, %v2770, 0.0
  %v2911 = vadd.f32 %v2909, %v2910
  %v2912 = vsel %vm145, %v2771, 0.0
  %v2913 = vadd.f32 %v2911, %v2912
  %v2914 = vsel %vm145, %v2772, 0.0
  %v2915 = vadd.f32 %v2913, %v2914
  %v2916 = vsel %vm145, %v2773, 0.0
  %v2917 = vadd.f32 %v2915, %v2916
  %v2918 = vsel %vm145, %v2774, 0.0
  %v2919 = vadd.f32 %v2917, %v2918
  %v2920 = vsel %vm145, %v2775, 0.0
  %v2921 = vadd.f32 %v2919, %v2920
  %v2922 = vsel %vm145, %v2776, 0.0
  %v2923 = vadd.f32 %v2921, %v2922
  %v2924 = vsel %vm145, %v2777, 0.0
  %v2925 = vadd.f32 %v2923, %v2924
  %v2926 = vsel %vm145, %v2778, 0.0
  %v2927 = vadd.f32 %v2925, %v2926
  %v2928 = vsel %vm145, %v2779, 0.0
  %v2929 = vadd.f32 %v2927, %v2928
  %v2930 = vsel %vm145, %v2780, 0.0
  %v2931 = vadd.f32 %v2929, %v2930
  %v2932 = vsel %vm145, %v2781, 0.0
  %v2933 = vadd.f32 %v2931, %v2932
  %v2934 = vsel %vm145, %v2782, 0.0
  %v2935 = vadd.f32 %v2933, %v2934
  %v2936 = vsel %vm145, %v2783, 0.0
  %v2937 = vadd.f32 %v2935, %v2936
  %v2938 = vsel %vm145, %v2784, 0.0
  %v2939 = vadd.f32 %v2937, %v2938
  %v2940 = vsel %vm145, %v2785, 0.0
  %v2941 = vadd.f32 %v2939, %v2940
  %v2942 = vsel %vm145, %v2786, 0.0
  %v2943 = vadd.f32 %v2941, %v2942
  %v2944 = vsel %vm145, %v2787, 0.0
  %v2945 = vadd.f32 %v2943, %v2944
  %v2946 = vsel %vm145, %v2788, 0.0
  %v2947 = vadd.f32 %v2945, %v2946
  %v2948 = vsel %vm145, %v2789, 0.0
  %v2949 = vadd.f32 %v2947, %v2948
  %v2950 = vsel %vm145, %v2790, 0.0
  %v2951 = vadd.f32 %v2949, %v2950
  %v2952 = vsel %vm145, %v2791, 0.0
  %v2953 = vadd.f32 %v2951, %v2952
  %v2954 = vsel %vm145, %v2792, 0.0
  %v2955 = vadd.f32 %v2953, %v2954
  %v2956 = vsel %vm145, %v2793, 0.0
  %v2957 = vadd.f32 %v2955, %v2956
  %v2958 = vsel %vm145, %v2794, 0.0
  %v2959 = vadd.f32 %v2957, %v2958
  %v2960 = vsel %vm145, %v2795, 0.0
  %v2961 = vadd.f32 %v2959, %v2960
  %v2962 = vsel %vm145, %v2796, 0.0
  %v2963 = vadd.f32 %v2961, %v2962
  %v2964 = vsel %vm145, %v2797, 0.0
  %v2965 = vadd.f32 %v2963, %v2964
  %v2966 = vsel %vm145, %v2798, 0.0
  %v2967 = vadd.f32 %v2965, %v2966
  %v2968 = vsel %vm145, %v2799, 0.0
  %v2969 = vadd.f32 %v2967, %v2968
  %v2970 = vsel %vm145, %v2800, 0.0
  %v2971 = vadd.f32 %v2969, %v2970
  %v2972 = vsel %vm145, %v2801, 0.0
  %v2973 = vadd.f32 %v2971, %v2972
  %v2974 = vsel %vm145, %v2802, 0.0
  %v2975 = vadd.f32 %v2973, %v2974
  %v2976 = vsel %vm145, %v2803, 0.0
  %v2977 = vadd.f32 %v2975, %v2976
  %v2978 = vsel %vm145, %v2804, 0.0
  %v2979 = vadd.f32 %v2977, %v2978
  %v2980 = vsel %vm145, %v2805, 0.0
  %v2981 = vadd.f32 %v2979, %v2980
  %v2982 = vsel %vm145, %v2806, 0.0
  %v2983 = vadd.f32 %v2981, %v2982
  %v2984 = vsel %vm145, %v2807, 0.0
  %v2985 = vadd.f32 %v2983, %v2984
  %v2986 = vsel %vm145, %v2808, 0.0
  %v2987 = vadd.f32 %v2985, %v2986
  %v2988 = vsel %vm145, %v2809, 0.0
  %v2989 = vadd.f32 %v2987, %v2988
  %v2990 = vsel %vm145, %v2810, 0.0
  %v2991 = vadd.f32 %v2989, %v2990
  %v2992 = vsel %vm145, %v2811, 0.0
  %v2993 = vadd.f32 %v2991, %v2992
  %v2994 = vsel %vm145, %v2812, 0.0
  %v2995 = vadd.f32 %v2993, %v2994
  %v2996 = vsel %vm145, %v2813, 0.0
  %v2997 = vadd.f32 %v2995, %v2996
  %v2998 = vsel %vm145, %v2814, 0.0
  %v2999 = vadd.f32 %v2997, %v2998
  %v3000 = vsel %vm145, %v2815, 0.0
  %v3001 = vadd.f32 %v2999, %v3000
  %v3002 = vsel %vm145, %v2816, 0.0
  %v3003 = vadd.f32 %v3001, %v3002
  %v3004 = vsel %vm145, %v2817, 0.0
  %v3005 = vadd.f32 %v3003, %v3004
  %v3006 = vsel %vm145, %v2818, 0.0
  %v3007 = vadd.f32 %v3005, %v3006
  %v3008 = vsel %vm145, %v2819, 0.0
  %v3009 = vadd.f32 %v3007, %v3008
  %v3010 = vsel %vm145, %v2820, 0.0
  %v3011 = vadd.f32 %v3009, %v3010
  %v3012 = vsel %vm145, %v2821, 0.0
  %v3013 = vadd.f32 %v3011, %v3012
  %v3014 = vsel %vm145, %v2822, 0.0
  %v3015 = vadd.f32 %v3013, %v3014
  %v3016 = vsel %vm145, %v2823, 0.0
  %v3017 = vadd.f32 %v3015, %v3016
  %v3018 = vsel %vm145, %v2824, 0.0
  %v3019 = vadd.f32 %v3017, %v3018
  %v3020 = vsel %vm145, %v2825, 0.0
  %v3021 = vadd.f32 %v3019, %v3020
  %v3022 = vsel %vm145, %v2826, 0.0
  %v3023 = vadd.f32 %v3021, %v3022
  %v3024 = vsel %vm145, %v2827, 0.0
  %v3025 = vadd.f32 %v3023, %v3024
  %v3026 = vsel %vm145, %v2828, 0.0
  %v3027 = vadd.f32 %v3025, %v3026
  %v3028 = vsel %vm145, %v2829, 0.0
  %v3029 = vadd.f32 %v3027, %v3028
  %v3030 = vsel %vm145, %v2830, 0.0
  %v3031 = vadd.f32 %v3029, %v3030
  %v3032 = vsel %vm145, %v2831, 0.0
  %v3033 = vadd.f32 %v3031, %v3032
  %v3034 = vsel %vm145, %v2832, 0.0
  %v3035 = vadd.f32 %v3033, %v3034
  %v3036 = vsel %vm145, %v2833, 0.0
  %v3037 = vadd.f32 %v3035, %v3036
  %v3038 = vsel %vm145, %v2834, 0.0
  %v3039 = vadd.f32 %v3037, %v3038
  %v3040 = vsel %vm145, %v2835, 0.0
  %v3041 = vadd.f32 %v3039, %v3040
  %v3042 = vsel %vm145, %v2836, 0.0
  %v3043 = vadd.f32 %v3041, %v3042
  %v3044 = vsel %vm145, %v2837, 0.0
  %v3045 = vadd.f32 %v3043, %v3044
  %v3046 = vsel %vm145, %v2838, 0.0
  %v3047 = vadd.f32 %v3045, %v3046
  %v3048 = vsel %vm145, %v2839, 0.0
  %v3049 = vadd.f32 %v3047, %v3048
  %v3050 = vsel %vm145, %v2840, 0.0
  %v3051 = vadd.f32 %v3049, %v3050
  %v3052 = vsel %vm145, %v2841, 0.0
  %v3053 = vadd.f32 %v3051, %v3052
  %v3054 = vsel %vm145, %v2842, 0.0
  %v3055 = vadd.f32 %v3053, %v3054
  %v3056 = vsel %vm145, %v2843, 0.0
  %v3057 = vadd.f32 %v3055, %v3056
  %v3058 = vsel %vm145, %v2844, 0.0
  %v3059 = vadd.f32 %v3057, %v3058
  %v3060 = vsel %vm145, %v2845, 0.0
  %v3061 = vadd.f32 %v3059, %v3060
  %v3062 = vsel %vm145, %v2846, 0.0
  %v3063 = vadd.f32 %v3061, %v3062
  %v3064 = vsel %vm145, %v2847, 0.0
  %v3065 = vadd.f32 %v3063, %v3064
  %v3066 = vsel %vm145, %v2848, 0.0
  %v3067 = vadd.f32 %v3065, %v3066
  %v3068 = vsel %vm145, %v2849, 0.0
  %v3069 = vadd.f32 %v3067, %v3068
  %v3070 = vsel %vm145, %v2850, 0.0
  %v3071 = vadd.f32 %v3069, %v3070
  %v3072 = vsel %vm145, %v2851, 0.0
  %v3073 = vadd.f32 %v3071, %v3072
  %v3074 = vsel %vm145, %v2852, 0.0
  %v3075 = vadd.f32 %v3073, %v3074
  %v3076 = vsel %vm145, %v2853, 0.0
  %v3077 = vadd.f32 %v3075, %v3076
  %v3078 = vsel %vm145, %v2854, 0.0
  %v3079 = vadd.f32 %v3077, %v3078
  %v3080 = vsel %vm145, %v2855, 0.0
  %v3081 = vadd.f32 %v3079, %v3080
  %v3082 = vsel %vm145, %v2856, 0.0
  %v3083 = vadd.f32 %v3081, %v3082
  %v3084 = vsel %vm145, %v2857, 0.0
  %v3085 = vadd.f32 %v3083, %v3084
  %v3086 = vsel %vm145, %v2858, 0.0
  %v3087 = vadd.f32 %v3085, %v3086
  %v3088 = vsel %vm145, %v2859, 0.0
  %v3089 = vadd.f32 %v3087, %v3088
  %v3090 = vsel %vm145, %v2860, 0.0
  %v3091 = vadd.f32 %v3089, %v3090
  %v3092 = vsel %vm145, %v2861, 0.0
  %v3093 = vadd.f32 %v3091, %v3092
  %v3094 = vsel %vm145, %v2862, 0.0
  %v3095 = vadd.f32 %v3093, %v3094
  %v3096 = vsel %vm145, %v2863, 0.0
  %v3097 = vadd.f32 %v3095, %v3096
  %v3098 = vsel %vm145, %v2864, 0.0
  %v3099 = vadd.f32 %v3097, %v3098
  %v3100 = vsel %vm145, %v2865, 0.0
  %v3101 = vadd.f32 %v3099, %v3100
  %v3102 = vsel %vm145, %v2866, 0.0
  %v3103 = vadd.f32 %v3101, %v3102
  %v3104 = vsel %vm145, %v2867, 0.0
  %v3105 = vadd.f32 %v3103, %v3104
  %v3106 = vsel %vm145, %v2868, 0.0
  %v3107 = vadd.f32 %v3105, %v3106
  %v3108 = vsel %vm145, %v2869, 0.0
  %v3109 = vadd.f32 %v3107, %v3108
  %v3110 = vsel %vm145, %v2870, 0.0
  %v3111 = vadd.f32 %v3109, %v3110
  %v3112 = vsel %vm145, %v2871, 0.0
  %v3113 = vadd.f32 %v3111, %v3112
  %v3114 = vsel %vm145, %v2872, 0.0
  %v3115 = vadd.f32 %v3113, %v3114
  %v3116 = vsel %vm145, %v2873, 0.0
  %v3117 = vadd.f32 %v3115, %v3116
  %v3118 = vsel %vm145, %v2874, 0.0
  %v3119 = vadd.f32 %v3117, %v3118
  %v3120 = vsel %vm145, %v2875, 0.0
  %v3121 = vadd.f32 %v3119, %v3120
  %v3122 = vsel %vm145, %v2876, 0.0
  %v3123 = vadd.f32 %v3121, %v3122
  %v3124 = vsel %vm145, %v2877, 0.0
  %v3125 = vadd.f32 %v3123, %v3124
  %v3126 = vsel %vm145, %v2878, 0.0
  %v3127 = vadd.f32 %v3125, %v3126
  %v3128 = vsel %vm145, %v2879, 0.0
  %v3129 = vadd.f32 %v3127, %v3128
  %v3130 = vsel %vm145, %v2880, 0.0
  %v3131 = vadd.f32 %v3129, %v3130
  %v3132 = vsel %vm145, %v2881, 0.0
  %v3133 = vadd.f32 %v3131, %v3132
  %v3134 = vsel %vm145, %v2882, 0.0
  %v3135 = vadd.f32 %v3133, %v3134
  %v3136 = vsel %vm145, %v2883, 0.0
  %v3137 = vadd.f32 %v3135, %v3136
  %v3138 = vsel %vm145, %v2884, 0.0
  %v3139 = vadd.f32 %v3137, %v3138
  %v3140 = vrot.slane %v3139, 4
  %v3141 = vadd.f32 %v3139, %v3140
  %v3142 = vrot.slane %v3141, 2
  %v3143 = vadd.f32 %v3141, %v3142
  %v3144 = vrot.slane %v3143, 1
  %v3145 = vadd.f32 %v3143, %v3144
  %v3146 = vmul.f32 %v3145, 0.0009765625
  %v3147 = vmul.f32 %v2756, %v2756
  %v3148 = vsub.f32 %v3146, %v3147
  %v3149 = vadd.f32 %v3148, 1e-05
  %v3150 = vrsqrt.pop %v3149
  %v3151 = vld [vmem:[%s3] sm:$0x1]
  %v3152 = vmul.f32 %v3150, %v3151
  %v3153 = vsub.f32 %v2367, %v2756
  %v3154 = vsub.f32 %v2368, %v2756
  %v3155 = vsub.f32 %v2369, %v2756
  %v3156 = vsub.f32 %v2370, %v2756
  %v3157 = vsub.f32 %v2371, %v2756
  %v3158 = vsub.f32 %v2372, %v2756
  %v3159 = vsub.f32 %v2373, %v2756
  %v3160 = vsub.f32 %v2374, %v2756
  %v3161 = vsub.f32 %v2375, %v2756
  %v3162 = vsub.f32 %v2376, %v2756
  %v3163 = vsub.f32 %v2377, %v2756
  %v3164 = vsub.f32 %v2378, %v2756
  %v3165 = vsub.f32 %v2379, %v2756
  %v3166 = vsub.f32 %v2380, %v2756
  %v3167 = vsub.f32 %v2381, %v2756
  %v3168 = vsub.f32 %v2382, %v2756
  %v3169 = vsub.f32 %v2383, %v2756
  %v3170 = vsub.f32 %v2384, %v2756
  %v3171 = vsub.f32 %v2385, %v2756
  %v3172 = vsub.f32 %v2386, %v2756
  %v3173 = vsub.f32 %v2387, %v2756
  %v3174 = vsub.f32 %v2388, %v2756
  %v3175 = vsub.f32 %v2389, %v2756
  %v3176 = vsub.f32 %v2390, %v2756
  %v3177 = vsub.f32 %v2391, %v2756
  %v3178 = vsub.f32 %v2392, %v2756
  %v3179 = vsub.f32 %v2393, %v2756
  %v3180 = vsub.f32 %v2394, %v2756
  %v3181 = vsub.f32 %v2395, %v2756
  %v3182 = vsub.f32 %v2396, %v2756
  %v3183 = vsub.f32 %v2397, %v2756
  %v3184 = vsub.f32 %v2398, %v2756
  %v3185 = vsub.f32 %v2399, %v2756
  %v3186 = vsub.f32 %v2400, %v2756
  %v3187 = vsub.f32 %v2401, %v2756
  %v3188 = vsub.f32 %v2402, %v2756
  %v3189 = vsub.f32 %v2403, %v2756
  %v3190 = vsub.f32 %v2404, %v2756
  %v3191 = vsub.f32 %v2405, %v2756
  %v3192 = vsub.f32 %v2406, %v2756
  %v3193 = vsub.f32 %v2407, %v2756
  %v3194 = vsub.f32 %v2408, %v2756
  %v3195 = vsub.f32 %v2409, %v2756
  %v3196 = vsub.f32 %v2410, %v2756
  %v3197 = vsub.f32 %v2411, %v2756
  %v3198 = vsub.f32 %v2412, %v2756
  %v3199 = vsub.f32 %v2413, %v2756
  %v3200 = vsub.f32 %v2414, %v2756
  %v3201 = vsub.f32 %v2415, %v2756
  %v3202 = vsub.f32 %v2416, %v2756
  %v3203 = vsub.f32 %v2417, %v2756
  %v3204 = vsub.f32 %v2418, %v2756
  %v3205 = vsub.f32 %v2419, %v2756
  %v3206 = vsub.f32 %v2420, %v2756
  %v3207 = vsub.f32 %v2421, %v2756
  %v3208 = vsub.f32 %v2422, %v2756
  %v3209 = vsub.f32 %v2423, %v2756
  %v3210 = vsub.f32 %v2424, %v2756
  %v3211 = vsub.f32 %v2425, %v2756
  %v3212 = vsub.f32 %v2426, %v2756
  %v3213 = vsub.f32 %v2427, %v2756
  %v3214 = vsub.f32 %v2428, %v2756
  %v3215 = vsub.f32 %v2429, %v2756
  %v3216 = vsub.f32 %v2430, %v2756
  %v3217 = vsub.f32 %v2431, %v2756
  %v3218 = vsub.f32 %v2432, %v2756
  %v3219 = vsub.f32 %v2433, %v2756
  %v3220 = vsub.f32 %v2434, %v2756
  %v3221 = vsub.f32 %v2435, %v2756
  %v3222 = vsub.f32 %v2436, %v2756
  %v3223 = vsub.f32 %v2437, %v2756
  %v3224 = vsub.f32 %v2438, %v2756
  %v3225 = vsub.f32 %v2439, %v2756
  %v3226 = vsub.f32 %v2440, %v2756
  %v3227 = vsub.f32 %v2441, %v2756
  %v3228 = vsub.f32 %v2442, %v2756
  %v3229 = vsub.f32 %v2443, %v2756
  %v3230 = vsub.f32 %v2444, %v2756
  %v3231 = vsub.f32 %v2445, %v2756
  %v3232 = vsub.f32 %v2446, %v2756
  %v3233 = vsub.f32 %v2447, %v2756
  %v3234 = vsub.f32 %v2448, %v2756
  %v3235 = vsub.f32 %v2449, %v2756
  %v3236 = vsub.f32 %v2450, %v2756
  %v3237 = vsub.f32 %v2451, %v2756
  %v3238 = vsub.f32 %v2452, %v2756
  %v3239 = vsub.f32 %v2453, %v2756
  %v3240 = vsub.f32 %v2454, %v2756
  %v3241 = vsub.f32 %v2455, %v2756
  %v3242 = vsub.f32 %v2456, %v2756
  %v3243 = vsub.f32 %v2457, %v2756
  %v3244 = vsub.f32 %v2458, %v2756
  %v3245 = vsub.f32 %v2459, %v2756
  %v3246 = vsub.f32 %v2460, %v2756
  %v3247 = vsub.f32 %v2461, %v2756
  %v3248 = vsub.f32 %v2462, %v2756
  %v3249 = vsub.f32 %v2463, %v2756
  %v3250 = vsub.f32 %v2464, %v2756
  %v3251 = vsub.f32 %v2465, %v2756
  %v3252 = vsub.f32 %v2466, %v2756
  %v3253 = vsub.f32 %v2467, %v2756
  %v3254 = vsub.f32 %v2468, %v2756
  %v3255 = vsub.f32 %v2469, %v2756
  %v3256 = vsub.f32 %v2470, %v2756
  %v3257 = vsub.f32 %v2471, %v2756
  %v3258 = vsub.f32 %v2472, %v2756
  %v3259 = vsub.f32 %v2473, %v2756
  %v3260 = vsub.f32 %v2474, %v2756
  %v3261 = vsub.f32 %v2475, %v2756
  %v3262 = vsub.f32 %v2476, %v2756
  %v3263 = vsub.f32 %v2477, %v2756
  %v3264 = vsub.f32 %v2478, %v2756
  %v3265 = vsub.f32 %v2479, %v2756
  %v3266 = vsub.f32 %v2480, %v2756
  %v3267 = vsub.f32 %v2481, %v2756
  %v3268 = vsub.f32 %v2482, %v2756
  %v3269 = vsub.f32 %v2483, %v2756
  %v3270 = vsub.f32 %v2484, %v2756
  %v3271 = vsub.f32 %v2485, %v2756
  %v3272 = vsub.f32 %v2486, %v2756
  %v3273 = vsub.f32 %v2487, %v2756
  %v3274 = vsub.f32 %v2488, %v2756
  %v3275 = vsub.f32 %v2489, %v2756
  %v3276 = vsub.f32 %v2490, %v2756
  %v3277 = vsub.f32 %v2491, %v2756
  %v3278 = vsub.f32 %v2492, %v2756
  %v3279 = vsub.f32 %v2493, %v2756
  %v3280 = vsub.f32 %v2494, %v2756
  %v3281 = vlaneseq
  %v3282 = vshrl.u32 %v3281, 7
  %v3283 = vsub.s32 0, %v3282
  %v3284 = vrot.slane %v3152, %v3283
  %v3285 = vmul.f32 %v3153, %v3284
  %v3286 = vmul.f32 %v3154, %v3284
  %v3287 = vmul.f32 %v3155, %v3284
  %v3288 = vmul.f32 %v3156, %v3284
  %v3289 = vmul.f32 %v3157, %v3284
  %v3290 = vmul.f32 %v3158, %v3284
  %v3291 = vmul.f32 %v3159, %v3284
  %v3292 = vmul.f32 %v3160, %v3284
  %v3293 = vmul.f32 %v3161, %v3284
  %v3294 = vmul.f32 %v3162, %v3284
  %v3295 = vmul.f32 %v3163, %v3284
  %v3296 = vmul.f32 %v3164, %v3284
  %v3297 = vmul.f32 %v3165, %v3284
  %v3298 = vmul.f32 %v3166, %v3284
  %v3299 = vmul.f32 %v3167, %v3284
  %v3300 = vmul.f32 %v3168, %v3284
  %v3301 = vmul.f32 %v3169, %v3284
  %v3302 = vmul.f32 %v3170, %v3284
  %v3303 = vmul.f32 %v3171, %v3284
  %v3304 = vmul.f32 %v3172, %v3284
  %v3305 = vmul.f32 %v3173, %v3284
  %v3306 = vmul.f32 %v3174, %v3284
  %v3307 = vmul.f32 %v3175, %v3284
  %v3308 = vmul.f32 %v3176, %v3284
  %v3309 = vmul.f32 %v3177, %v3284
  %v3310 = vmul.f32 %v3178, %v3284
  %v3311 = vmul.f32 %v3179, %v3284
  %v3312 = vmul.f32 %v3180, %v3284
  %v3313 = vmul.f32 %v3181, %v3284
  %v3314 = vmul.f32 %v3182, %v3284
  %v3315 = vmul.f32 %v3183, %v3284
  %v3316 = vmul.f32 %v3184, %v3284
  %v3317 = vmul.f32 %v3185, %v3284
  %v3318 = vmul.f32 %v3186, %v3284
  %v3319 = vmul.f32 %v3187, %v3284
  %v3320 = vmul.f32 %v3188, %v3284
  %v3321 = vmul.f32 %v3189, %v3284
  %v3322 = vmul.f32 %v3190, %v3284
  %v3323 = vmul.f32 %v3191, %v3284
  %v3324 = vmul.f32 %v3192, %v3284
  %v3325 = vmul.f32 %v3193, %v3284
  %v3326 = vmul.f32 %v3194, %v3284
  %v3327 = vmul.f32 %v3195, %v3284
  %v3328 = vmul.f32 %v3196, %v3284
  %v3329 = vmul.f32 %v3197, %v3284
  %v3330 = vmul.f32 %v3198, %v3284
  %v3331 = vmul.f32 %v3199, %v3284
  %v3332 = vmul.f32 %v3200, %v3284
  %v3333 = vmul.f32 %v3201, %v3284
  %v3334 = vmul.f32 %v3202, %v3284
  %v3335 = vmul.f32 %v3203, %v3284
  %v3336 = vmul.f32 %v3204, %v3284
  %v3337 = vmul.f32 %v3205, %v3284
  %v3338 = vmul.f32 %v3206, %v3284
  %v3339 = vmul.f32 %v3207, %v3284
  %v3340 = vmul.f32 %v3208, %v3284
  %v3341 = vmul.f32 %v3209, %v3284
  %v3342 = vmul.f32 %v3210, %v3284
  %v3343 = vmul.f32 %v3211, %v3284
  %v3344 = vmul.f32 %v3212, %v3284
  %v3345 = vmul.f32 %v3213, %v3284
  %v3346 = vmul.f32 %v3214, %v3284
  %v3347 = vmul.f32 %v3215, %v3284
  %v3348 = vmul.f32 %v3216, %v3284
  %v3349 = vmul.f32 %v3217, %v3284
  %v3350 = vmul.f32 %v3218, %v3284
  %v3351 = vmul.f32 %v3219, %v3284
  %v3352 = vmul.f32 %v3220, %v3284
  %v3353 = vmul.f32 %v3221, %v3284
  %v3354 = vmul.f32 %v3222, %v3284
  %v3355 = vmul.f32 %v3223, %v3284
  %v3356 = vmul.f32 %v3224, %v3284
  %v3357 = vmul.f32 %v3225, %v3284
  %v3358 = vmul.f32 %v3226, %v3284
  %v3359 = vmul.f32 %v3227, %v3284
  %v3360 = vmul.f32 %v3228, %v3284
  %v3361 = vmul.f32 %v3229, %v3284
  %v3362 = vmul.f32 %v3230, %v3284
  %v3363 = vmul.f32 %v3231, %v3284
  %v3364 = vmul.f32 %v3232, %v3284
  %v3365 = vmul.f32 %v3233, %v3284
  %v3366 = vmul.f32 %v3234, %v3284
  %v3367 = vmul.f32 %v3235, %v3284
  %v3368 = vmul.f32 %v3236, %v3284
  %v3369 = vmul.f32 %v3237, %v3284
  %v3370 = vmul.f32 %v3238, %v3284
  %v3371 = vmul.f32 %v3239, %v3284
  %v3372 = vmul.f32 %v3240, %v3284
  %v3373 = vmul.f32 %v3241, %v3284
  %v3374 = vmul.f32 %v3242, %v3284
  %v3375 = vmul.f32 %v3243, %v3284
  %v3376 = vmul.f32 %v3244, %v3284
  %v3377 = vmul.f32 %v3245, %v3284
  %v3378 = vmul.f32 %v3246, %v3284
  %v3379 = vmul.f32 %v3247, %v3284
  %v3380 = vmul.f32 %v3248, %v3284
  %v3381 = vmul.f32 %v3249, %v3284
  %v3382 = vmul.f32 %v3250, %v3284
  %v3383 = vmul.f32 %v3251, %v3284
  %v3384 = vmul.f32 %v3252, %v3284
  %v3385 = vmul.f32 %v3253, %v3284
  %v3386 = vmul.f32 %v3254, %v3284
  %v3387 = vmul.f32 %v3255, %v3284
  %v3388 = vmul.f32 %v3256, %v3284
  %v3389 = vmul.f32 %v3257, %v3284
  %v3390 = vmul.f32 %v3258, %v3284
  %v3391 = vmul.f32 %v3259, %v3284
  %v3392 = vmul.f32 %v3260, %v3284
  %v3393 = vmul.f32 %v3261, %v3284
  %v3394 = vmul.f32 %v3262, %v3284
  %v3395 = vmul.f32 %v3263, %v3284
  %v3396 = vmul.f32 %v3264, %v3284
  %v3397 = vmul.f32 %v3265, %v3284
  %v3398 = vmul.f32 %v3266, %v3284
  %v3399 = vmul.f32 %v3267, %v3284
  %v3400 = vmul.f32 %v3268, %v3284
  %v3401 = vmul.f32 %v3269, %v3284
  %v3402 = vmul.f32 %v3270, %v3284
  %v3403 = vmul.f32 %v3271, %v3284
  %v3404 = vmul.f32 %v3272, %v3284
  %v3405 = vmul.f32 %v3273, %v3284
  %v3406 = vmul.f32 %v3274, %v3284
  %v3407 = vmul.f32 %v3275, %v3284
  %v3408 = vmul.f32 %v3276, %v3284
  %v3409 = vmul.f32 %v3277, %v3284
  %v3410 = vmul.f32 %v3278, %v3284
  %v3411 = vmul.f32 %v3279, %v3284
  %v3412 = vmul.f32 %v3280, %v3284
  %v3413 = vld [vmem:[%s4] sm:$0x1]
  %v3415 = vlaneseq
  %v3416 = vshrl.u32 %v3415, 7
  %v3417 = vsub.s32 0, %v3416
  %v3418 = vrot.slane %v3413, %v3417
  %v3420 = vadd.f32 %v3285, %v3418
  %v3421 = vadd.f32 %v3286, %v3418
  %v3422 = vadd.f32 %v3287, %v3418
  %v3423 = vadd.f32 %v3288, %v3418
  %v3424 = vadd.f32 %v3289, %v3418
  %v3425 = vadd.f32 %v3290, %v3418
  %v3426 = vadd.f32 %v3291, %v3418
  %v3427 = vadd.f32 %v3292, %v3418
  %v3428 = vadd.f32 %v3293, %v3418
  %v3429 = vadd.f32 %v3294, %v3418
  %v3430 = vadd.f32 %v3295, %v3418
  %v3431 = vadd.f32 %v3296, %v3418
  %v3432 = vadd.f32 %v3297, %v3418
  %v3433 = vadd.f32 %v3298, %v3418
  %v3434 = vadd.f32 %v3299, %v3418
  %v3435 = vadd.f32 %v3300, %v3418
  %v3436 = vadd.f32 %v3301, %v3418
  %v3437 = vadd.f32 %v3302, %v3418
  %v3438 = vadd.f32 %v3303, %v3418
  %v3439 = vadd.f32 %v3304, %v3418
  %v3440 = vadd.f32 %v3305, %v3418
  %v3441 = vadd.f32 %v3306, %v3418
  %v3442 = vadd.f32 %v3307, %v3418
  %v3443 = vadd.f32 %v3308, %v3418
  %v3444 = vadd.f32 %v3309, %v3418
  %v3445 = vadd.f32 %v3310, %v3418
  %v3446 = vadd.f32 %v3311, %v3418
  %v3447 = vadd.f32 %v3312, %v3418
  %v3448 = vadd.f32 %v3313, %v3418
  %v3449 = vadd.f32 %v3314, %v3418
  %v3450 = vadd.f32 %v3315, %v3418
  %v3451 = vadd.f32 %v3316, %v3418
  %v3452 = vadd.f32 %v3317, %v3418
  %v3453 = vadd.f32 %v3318, %v3418
  %v3454 = vadd.f32 %v3319, %v3418
  %v3455 = vadd.f32 %v3320, %v3418
  %v3456 = vadd.f32 %v3321, %v3418
  %v3457 = vadd.f32 %v3322, %v3418
  %v3458 = vadd.f32 %v3323, %v3418
  %v3459 = vadd.f32 %v3324, %v3418
  %v3460 = vadd.f32 %v3325, %v3418
  %v3461 = vadd.f32 %v3326, %v3418
  %v3462 = vadd.f32 %v3327, %v3418
  %v3463 = vadd.f32 %v3328, %v3418
  %v3464 = vadd.f32 %v3329, %v3418
  %v3465 = vadd.f32 %v3330, %v3418
  %v3466 = vadd.f32 %v3331, %v3418
  %v3467 = vadd.f32 %v3332, %v3418
  %v3468 = vadd.f32 %v3333, %v3418
  %v3469 = vadd.f32 %v3334, %v3418
  %v3470 = vadd.f32 %v3335, %v3418
  %v3471 = vadd.f32 %v3336, %v3418
  %v3472 = vadd.f32 %v3337, %v3418
  %v3473 = vadd.f32 %v3338, %v3418
  %v3474 = vadd.f32 %v3339, %v3418
  %v3475 = vadd.f32 %v3340, %v3418
  %v3476 = vadd.f32 %v3341, %v3418
  %v3477 = vadd.f32 %v3342, %v3418
  %v3478 = vadd.f32 %v3343, %v3418
  %v3479 = vadd.f32 %v3344, %v3418
  %v3480 = vadd.f32 %v3345, %v3418
  %v3481 = vadd.f32 %v3346, %v3418
  %v3482 = vadd.f32 %v3347, %v3418
  %v3483 = vadd.f32 %v3348, %v3418
  %v3484 = vadd.f32 %v3349, %v3418
  %v3485 = vadd.f32 %v3350, %v3418
  %v3486 = vadd.f32 %v3351, %v3418
  %v3487 = vadd.f32 %v3352, %v3418
  %v3488 = vadd.f32 %v3353, %v3418
  %v3489 = vadd.f32 %v3354, %v3418
  %v3490 = vadd.f32 %v3355, %v3418
  %v3491 = vadd.f32 %v3356, %v3418
  %v3492 = vadd.f32 %v3357, %v3418
  %v3493 = vadd.f32 %v3358, %v3418
  %v3494 = vadd.f32 %v3359, %v3418
  %v3495 = vadd.f32 %v3360, %v3418
  %v3496 = vadd.f32 %v3361, %v3418
  %v3497 = vadd.f32 %v3362, %v3418
  %v3498 = vadd.f32 %v3363, %v3418
  %v3499 = vadd.f32 %v3364, %v3418
  %v3500 = vadd.f32 %v3365, %v3418
  %v3501 = vadd.f32 %v3366, %v3418
  %v3502 = vadd.f32 %v3367, %v3418
  %v3503 = vadd.f32 %v3368, %v3418
  %v3504 = vadd.f32 %v3369, %v3418
  %v3505 = vadd.f32 %v3370, %v3418
  %v3506 = vadd.f32 %v3371, %v3418
  %v3507 = vadd.f32 %v3372, %v3418
  %v3508 = vadd.f32 %v3373, %v3418
  %v3509 = vadd.f32 %v3374, %v3418
  %v3510 = vadd.f32 %v3375, %v3418
  %v3511 = vadd.f32 %v3376, %v3418
  %v3512 = vadd.f32 %v3377, %v3418
  %v3513 = vadd.f32 %v3378, %v3418
  %v3514 = vadd.f32 %v3379, %v3418
  %v3515 = vadd.f32 %v3380, %v3418
  %v3516 = vadd.f32 %v3381, %v3418
  %v3517 = vadd.f32 %v3382, %v3418
  %v3518 = vadd.f32 %v3383, %v3418
  %v3519 = vadd.f32 %v3384, %v3418
  %v3520 = vadd.f32 %v3385, %v3418
  %v3521 = vadd.f32 %v3386, %v3418
  %v3522 = vadd.f32 %v3387, %v3418
  %v3523 = vadd.f32 %v3388, %v3418
  %v3524 = vadd.f32 %v3389, %v3418
  %v3525 = vadd.f32 %v3390, %v3418
  %v3526 = vadd.f32 %v3391, %v3418
  %v3527 = vadd.f32 %v3392, %v3418
  %v3528 = vadd.f32 %v3393, %v3418
  %v3529 = vadd.f32 %v3394, %v3418
  %v3530 = vadd.f32 %v3395, %v3418
  %v3531 = vadd.f32 %v3396, %v3418
  %v3532 = vadd.f32 %v3397, %v3418
  %v3533 = vadd.f32 %v3398, %v3418
  %v3534 = vadd.f32 %v3399, %v3418
  %v3535 = vadd.f32 %v3400, %v3418
  %v3536 = vadd.f32 %v3401, %v3418
  %v3537 = vadd.f32 %v3402, %v3418
  %v3538 = vadd.f32 %v3403, %v3418
  %v3539 = vadd.f32 %v3404, %v3418
  %v3540 = vadd.f32 %v3405, %v3418
  %v3541 = vadd.f32 %v3406, %v3418
  %v3542 = vadd.f32 %v3407, %v3418
  %v3543 = vadd.f32 %v3408, %v3418
  %v3544 = vadd.f32 %v3409, %v3418
  %v3545 = vadd.f32 %v3410, %v3418
  %v3546 = vadd.f32 %v3411, %v3418
  %v3547 = vadd.f32 %v3412, %v3418
  %3548 = vst.msk [vmem:[%s5] sm:$0xff] %vm145, %v3420
  %3549 = vst.msk [vmem:[%s5 + $0x8] sm:$0xff] %vm145, %v3421
  %3550 = vst.msk [vmem:[%s5 + $0x10] sm:$0xff] %vm145, %v3422
  %3551 = vst.msk [vmem:[%s5 + $0x18] sm:$0xff] %vm145, %v3423
  %3552 = vst.msk [vmem:[%s5 + $0x20] sm:$0xff] %vm145, %v3424
  %3553 = vst.msk [vmem:[%s5 + $0x28] sm:$0xff] %vm145, %v3425
  %3554 = vst.msk [vmem:[%s5 + $0x30] sm:$0xff] %vm145, %v3426
  %3555 = vst.msk [vmem:[%s5 + $0x38] sm:$0xff] %vm145, %v3427
  %3556 = vst.msk [vmem:[%s5 + $0x40] sm:$0xff] %vm145, %v3428
  %3557 = vst.msk [vmem:[%s5 + $0x48] sm:$0xff] %vm145, %v3429
  %3558 = vst.msk [vmem:[%s5 + $0x50] sm:$0xff] %vm145, %v3430
  %3559 = vst.msk [vmem:[%s5 + $0x58] sm:$0xff] %vm145, %v3431
  %3560 = vst.msk [vmem:[%s5 + $0x60] sm:$0xff] %vm145, %v3432
  %3561 = vst.msk [vmem:[%s5 + $0x68] sm:$0xff] %vm145, %v3433
  %3562 = vst.msk [vmem:[%s5 + $0x70] sm:$0xff] %vm145, %v3434
  %3563 = vst.msk [vmem:[%s5 + $0x78] sm:$0xff] %vm145, %v3435
  %3564 = vst.msk [vmem:[%s5 + $0x80] sm:$0xff] %vm145, %v3436
  %3565 = vst.msk [vmem:[%s5 + $0x88] sm:$0xff] %vm145, %v3437
  %3566 = vst.msk [vmem:[%s5 + $0x90] sm:$0xff] %vm145, %v3438
  %3567 = vst.msk [vmem:[%s5 + $0x98] sm:$0xff] %vm145, %v3439
  %3568 = vst.msk [vmem:[%s5 + $0xa0] sm:$0xff] %vm145, %v3440
  %3569 = vst.msk [vmem:[%s5 + $0xa8] sm:$0xff] %vm145, %v3441
  %3570 = vst.msk [vmem:[%s5 + $0xb0] sm:$0xff] %vm145, %v3442
  %3571 = vst.msk [vmem:[%s5 + $0xb8] sm:$0xff] %vm145, %v3443
  %3572 = vst.msk [vmem:[%s5 + $0xc0] sm:$0xff] %vm145, %v3444
  %3573 = vst.msk [vmem:[%s5 + $0xc8] sm:$0xff] %vm145, %v3445
  %3574 = vst.msk [vmem:[%s5 + $0xd0] sm:$0xff] %vm145, %v3446
  %3575 = vst.msk [vmem:[%s5 + $0xd8] sm:$0xff] %vm145, %v3447
  %3576 = vst.msk [vmem:[%s5 + $0xe0] sm:$0xff] %vm145, %v3448
  %3577 = vst.msk [vmem:[%s5 + $0xe8] sm:$0xff] %vm145, %v3449
  %3578 = vst.msk [vmem:[%s5 + $0xf0] sm:$0xff] %vm145, %v3450
  %3579 = vst.msk [vmem:[%s5 + $0xf8] sm:$0xff] %vm145, %v3451
  %3580 = vst.msk [vmem:[%s5 + $0x100] sm:$0xff] %vm145, %v3452
  %3581 = vst.msk [vmem:[%s5 + $0x108] sm:$0xff] %vm145, %v3453
  %3582 = vst.msk [vmem:[%s5 + $0x110] sm:$0xff] %vm145, %v3454
  %3583 = vst.msk [vmem:[%s5 + $0x118] sm:$0xff] %vm145, %v3455
  %3584 = vst.msk [vmem:[%s5 + $0x120] sm:$0xff] %vm145, %v3456
  %3585 = vst.msk [vmem:[%s5 + $0x128] sm:$0xff] %vm145, %v3457
  %3586 = vst.msk [vmem:[%s5 + $0x130] sm:$0xff] %vm145, %v3458
  %3587 = vst.msk [vmem:[%s5 + $0x138] sm:$0xff] %vm145, %v3459
  %3588 = vst.msk [vmem:[%s5 + $0x140] sm:$0xff] %vm145, %v3460
  %3589 = vst.msk [vmem:[%s5 + $0x148] sm:$0xff] %vm145, %v3461
  %3590 = vst.msk [vmem:[%s5 + $0x150] sm:$0xff] %vm145, %v3462
  %3591 = vst.msk [vmem:[%s5 + $0x158] sm:$0xff] %vm145, %v3463
  %3592 = vst.msk [vmem:[%s5 + $0x160] sm:$0xff] %vm145, %v3464
  %3593 = vst.msk [vmem:[%s5 + $0x168] sm:$0xff] %vm145, %v3465
  %3594 = vst.msk [vmem:[%s5 + $0x170] sm:$0xff] %vm145, %v3466
  %3595 = vst.msk [vmem:[%s5 + $0x178] sm:$0xff] %vm145, %v3467
  %3596 = vst.msk [vmem:[%s5 + $0x180] sm:$0xff] %vm145, %v3468
  %3597 = vst.msk [vmem:[%s5 + $0x188] sm:$0xff] %vm145, %v3469
  %3598 = vst.msk [vmem:[%s5 + $0x190] sm:$0xff] %vm145, %v3470
  %3599 = vst.msk [vmem:[%s5 + $0x198] sm:$0xff] %vm145, %v3471
  %3600 = vst.msk [vmem:[%s5 + $0x1a0] sm:$0xff] %vm145, %v3472
  %3601 = vst.msk [vmem:[%s5 + $0x1a8] sm:$0xff] %vm145, %v3473
  %3602 = vst.msk [vmem:[%s5 + $0x1b0] sm:$0xff] %vm145, %v3474
  %3603 = vst.msk [vmem:[%s5 + $0x1b8] sm:$0xff] %vm145, %v3475
  %3604 = vst.msk [vmem:[%s5 + $0x1c0] sm:$0xff] %vm145, %v3476
  %3605 = vst.msk [vmem:[%s5 + $0x1c8] sm:$0xff] %vm145, %v3477
  %3606 = vst.msk [vmem:[%s5 + $0x1d0] sm:$0xff] %vm145, %v3478
  %3607 = vst.msk [vmem:[%s5 + $0x1d8] sm:$0xff] %vm145, %v3479
  %3608 = vst.msk [vmem:[%s5 + $0x1e0] sm:$0xff] %vm145, %v3480
  %3609 = vst.msk [vmem:[%s5 + $0x1e8] sm:$0xff] %vm145, %v3481
  %3610 = vst.msk [vmem:[%s5 + $0x1f0] sm:$0xff] %vm145, %v3482
  %3611 = vst.msk [vmem:[%s5 + $0x1f8] sm:$0xff] %vm145, %v3483
  %3612 = vst.msk [vmem:[%s5 + $0x200] sm:$0xff] %vm145, %v3484
  %3613 = vst.msk [vmem:[%s5 + $0x208] sm:$0xff] %vm145, %v3485
  %3614 = vst.msk [vmem:[%s5 + $0x210] sm:$0xff] %vm145, %v3486
  %3615 = vst.msk [vmem:[%s5 + $0x218] sm:$0xff] %vm145, %v3487
  %3616 = vst.msk [vmem:[%s5 + $0x220] sm:$0xff] %vm145, %v3488
  %3617 = vst.msk [vmem:[%s5 + $0x228] sm:$0xff] %vm145, %v3489
  %3618 = vst.msk [vmem:[%s5 + $0x230] sm:$0xff] %vm145, %v3490
  %3619 = vst.msk [vmem:[%s5 + $0x238] sm:$0xff] %vm145, %v3491
  %3620 = vst.msk [vmem:[%s5 + $0x240] sm:$0xff] %vm145, %v3492
  %3621 = vst.msk [vmem:[%s5 + $0x248] sm:$0xff] %vm145, %v3493
  %3622 = vst.msk [vmem:[%s5 + $0x250] sm:$0xff] %vm145, %v3494
  %3623 = vst.msk [vmem:[%s5 + $0x258] sm:$0xff] %vm145, %v3495
  %3624 = vst.msk [vmem:[%s5 + $0x260] sm:$0xff] %vm145, %v3496
  %3625 = vst.msk [vmem:[%s5 + $0x268] sm:$0xff] %vm145, %v3497
  %3626 = vst.msk [vmem:[%s5 + $0x270] sm:$0xff] %vm145, %v3498
  %3627 = vst.msk [vmem:[%s5 + $0x278] sm:$0xff] %vm145, %v3499
  %3628 = vst.msk [vmem:[%s5 + $0x280] sm:$0xff] %vm145, %v3500
  %3629 = vst.msk [vmem:[%s5 + $0x288] sm:$0xff] %vm145, %v3501
  %3630 = vst.msk [vmem:[%s5 + $0x290] sm:$0xff] %vm145, %v3502
  %3631 = vst.msk [vmem:[%s5 + $0x298] sm:$0xff] %vm145, %v3503
  %3632 = vst.msk [vmem:[%s5 + $0x2a0] sm:$0xff] %vm145, %v3504
  %3633 = vst.msk [vmem:[%s5 + $0x2a8] sm:$0xff] %vm145, %v3505
  %3634 = vst.msk [vmem:[%s5 + $0x2b0] sm:$0xff] %vm145, %v3506
  %3635 = vst.msk [vmem:[%s5 + $0x2b8] sm:$0xff] %vm145, %v3507
  %3636 = vst.msk [vmem:[%s5 + $0x2c0] sm:$0xff] %vm145, %v3508
  %3637 = vst.msk [vmem:[%s5 + $0x2c8] sm:$0xff] %vm145, %v3509
  %3638 = vst.msk [vmem:[%s5 + $0x2d0] sm:$0xff] %vm145, %v3510
  %3639 = vst.msk [vmem:[%s5 + $0x2d8] sm:$0xff] %vm145, %v3511
  %3640 = vst.msk [vmem:[%s5 + $0x2e0] sm:$0xff] %vm145, %v3512
  %3641 = vst.msk [vmem:[%s5 + $0x2e8] sm:$0xff] %vm145, %v3513
  %3642 = vst.msk [vmem:[%s5 + $0x2f0] sm:$0xff] %vm145, %v3514
  %3643 = vst.msk [vmem:[%s5 + $0x2f8] sm:$0xff] %vm145, %v3515
  %3644 = vst.msk [vmem:[%s5 + $0x300] sm:$0xff] %vm145, %v3516
  %3645 = vst.msk [vmem:[%s5 + $0x308] sm:$0xff] %vm145, %v3517
  %3646 = vst.msk [vmem:[%s5 + $0x310] sm:$0xff] %vm145, %v3518
  %3647 = vst.msk [vmem:[%s5 + $0x318] sm:$0xff] %vm145, %v3519
  %3648 = vst.msk [vmem:[%s5 + $0x320] sm:$0xff] %vm145, %v3520
  %3649 = vst.msk [vmem:[%s5 + $0x328] sm:$0xff] %vm145, %v3521
  %3650 = vst.msk [vmem:[%s5 + $0x330] sm:$0xff] %vm145, %v3522
  %3651 = vst.msk [vmem:[%s5 + $0x338] sm:$0xff] %vm145, %v3523
  %3652 = vst.msk [vmem:[%s5 + $0x340] sm:$0xff] %vm145, %v3524
  %3653 = vst.msk [vmem:[%s5 + $0x348] sm:$0xff] %vm145, %v3525
  %3654 = vst.msk [vmem:[%s5 + $0x350] sm:$0xff] %vm145, %v3526
  %3655 = vst.msk [vmem:[%s5 + $0x358] sm:$0xff] %vm145, %v3527
  %3656 = vst.msk [vmem:[%s5 + $0x360] sm:$0xff] %vm145, %v3528
  %3657 = vst.msk [vmem:[%s5 + $0x368] sm:$0xff] %vm145, %v3529
  %3658 = vst.msk [vmem:[%s5 + $0x370] sm:$0xff] %vm145, %v3530
  %3659 = vst.msk [vmem:[%s5 + $0x378] sm:$0xff] %vm145, %v3531
  %3660 = vst.msk [vmem:[%s5 + $0x380] sm:$0xff] %vm145, %v3532
  %3661 = vst.msk [vmem:[%s5 + $0x388] sm:$0xff] %vm145, %v3533
  %3662 = vst.msk [vmem:[%s5 + $0x390] sm:$0xff] %vm145, %v3534
  %3663 = vst.msk [vmem:[%s5 + $0x398] sm:$0xff] %vm145, %v3535
  %3664 = vst.msk [vmem:[%s5 + $0x3a0] sm:$0xff] %vm145, %v3536
  %3665 = vst.msk [vmem:[%s5 + $0x3a8] sm:$0xff] %vm145, %v3537
  %3666 = vst.msk [vmem:[%s5 + $0x3b0] sm:$0xff] %vm145, %v3538
  %3667 = vst.msk [vmem:[%s5 + $0x3b8] sm:$0xff] %vm145, %v3539
  %3668 = vst.msk [vmem:[%s5 + $0x3c0] sm:$0xff] %vm145, %v3540
  %3669 = vst.msk [vmem:[%s5 + $0x3c8] sm:$0xff] %vm145, %v3541
  %3670 = vst.msk [vmem:[%s5 + $0x3d0] sm:$0xff] %vm145, %v3542
  %3671 = vst.msk [vmem:[%s5 + $0x3d8] sm:$0xff] %vm145, %v3543
  %3672 = vst.msk [vmem:[%s5 + $0x3e0] sm:$0xff] %vm145, %v3544
  %3673 = vst.msk [vmem:[%s5 + $0x3e8] sm:$0xff] %vm145, %v3545
  %3674 = vst.msk [vmem:[%s5 + $0x3f0] sm:$0xff] %vm145, %v3546
  %3675 = vst.msk [vmem:[%s5 + $0x3f8] sm:$0xff] %vm145, %v3547
  // Predicated region
  $region22: #{conv_trans_layer_forward.1} parent=0 // pred_check
    _
  $region23: #{conv_trans_layer_forward.1} parent=0 // pred_check_branch
    %3677 = sbr.rel (0) target = $region25
  $region24: #{conv_trans_layer_forward.1} parent=0 // pred_region
    _
  $region25: #{conv_trans_layer_forward.1} parent=0 // pred_fallthru
    _
  // Predicated region
  $region26: #{conv_trans_layer_forward.1} parent=0 // pred_check
    _
  $region27: #{conv_trans_layer_forward.1} parent=0 // pred_check_branch
    %3679 = sbr.rel (0) target = $region29
  $region28: #{conv_trans_layer_forward.1} parent=0 // pred_region
    _
  $region29: #{conv_trans_layer_forward.1} parent=0 // pred_fallthru
    _

</llo_original>
